<compile_context>
chip_gen: v7x
topology: tpu7x:2x2x1
jax: 0.10.0
libtpu: 0.0.40
codegen_flags: <defaults>
</compile_context>

<pallas_src>
import jax
import jax.numpy as jnp
from jax.experimental import pallas as pl
from jax.experimental.pallas import tpu as pltpu


# ---------------------------------------------------------------------------
# Kernel: full multi-layer GRU, recurrence via in-kernel fori_loop.
# torch.nn.GRU equations (gate order r, z, n):
#   r = sigmoid(x W_ir + b_ir + h W_hr + b_hr)
#   z = sigmoid(x W_iz + b_iz + h W_hz + b_hz)
#   n = tanh   (x W_in + b_in + r * (h W_hn + b_hn))
#   h' = (1 - z) * n + z * h
# With fused gates: gx = x @ W_i + b_i (b_i already contains b_ir+b_hr,
# b_iz+b_hz, b_in), gh = h @ W_h, and b_hn kept separate for the n gate.
# ---------------------------------------------------------------------------
def make_encoder_kernel(num_layers, T, B, H):
    def kernel(*refs):
        xp0_ref = refs[0]                       # (T, B, 3H) precomputed layer-0 gates
        idx = 1
        layers = [(None, None, refs[idx], refs[idx + 1])]   # layer 0: (wh, bhn)
        idx += 2
        for _ in range(1, num_layers):                        # layer l>0: (wi, bi, wh, bhn)
            layers.append((refs[idx], refs[idx + 1], refs[idx + 2], refs[idx + 3]))
            idx += 4
        out_ref = refs[idx]                     # (T, B, H) -- also inter-layer buffer
        hn_ref = refs[idx + 1]                  # (L, B, H)

        for l, (wi_ref, bi_ref, wh_ref, bhn_ref) in enumerate(layers):
            # Hoist loop-invariant weight loads out of the time loop.
            wh = wh_ref[...]                    # (H, 3H)
            bhn = bhn_ref[...]                  # (1, H)
            if l > 0:
                wi = wi_ref[...]                # (H, 3H)
                bi = bi_ref[...]                # (1, 3H)
            else:
                wi = None
                bi = None

            def step(t, h, l=l, wi=wi, bi=bi, wh=wh, bhn=bhn):
                if l == 0:
                    gx = xp0_ref[t]                               # (B, 3H) precomputed
                else:
                    # previous layer's output at time t (still resident in VMEM)
                    gx = jnp.dot(out_ref[t], wi,
                                 preferred_element_type=jnp.float32) + bi
                gh = jnp.dot(h, wh, preferred_element_type=jnp.float32)   # (B, 3H)
                rz = jax.nn.sigmoid(gx[:, : 2 * H] + gh[:, : 2 * H])
                r = rz[:, :H]
                z = rz[:, H:]
                n = jnp.tanh(gx[:, 2 * H:] + r * (gh[:, 2 * H:] + bhn))
                h_new = (1.0 - z) * n + z * h
                out_ref[t] = h_new              # overwrite slot t with this layer's output
                return h_new

            h_last = jax.lax.fori_loop(0, T, step,
                                       jnp.zeros((B, H), jnp.float32),
                                       unroll=True)
            hn_ref[l] = h_last

    return kernel


# ---------------------------------------------------------------------------
# Parameter fusion (wrapper side): concat gate weights, fold r/z biases.
# ---------------------------------------------------------------------------
def fuse_layer_params(p):
    wi = jnp.concatenate([p["wir"], p["wiz"], p["win"]], axis=1)          # (d_in, 3H)
    wh = jnp.concatenate([p["whr"], p["whz"], p["whn"]], axis=1)          # (H, 3H)
    bi = jnp.concatenate([p["bir"] + p["bhr"],
                          p["biz"] + p["bhz"],
                          p["bin"]], axis=1)                              # (1, 3H)
    return {"wi": wi, "wh": wh, "bi": bi, "bhn": p["bhn"]}


def encoder_rnn_forward(x, layer_params):
    """Encoder_RNN.forward: multi-layer GRU. Returns (r_out, h_n)."""
    T, B, D = x.shape
    fused = [fuse_layer_params(p) for p in layer_params]
    H = fused[0]["wh"].shape[0]
    L = len(fused)

    # Hoist the layer-0 input projection out of the recurrence: one big
    # (T*B, D) x (D, 3H) matmul (no sequential dependency).
    p0 = fused[0]
    xproj0 = (x.reshape(T * B, D) @ p0["wi"] + p0["bi"]).reshape(T, B, 3 * H)

    args = [xproj0, p0["wh"], p0["bhn"]]
    for p in fused[1:]:
        args += [p["wi"], p["bi"], p["wh"], p["bhn"]]

    def full_spec(a):
        nd = a.ndim
        return pl.BlockSpec(a.shape, lambda i, nd=nd: (0,) * nd)

    in_specs = [full_spec(a) for a in args]
    out_specs = [
        pl.BlockSpec((T, B, H), lambda i: (0, 0, 0)),
        pl.BlockSpec((L, B, H), lambda i: (0, 0, 0)),
    ]

    r_out, h_n = pl.pallas_call(
        make_encoder_kernel(L, T, B, H),
        out_shape=(
            jax.ShapeDtypeStruct((T, B, H), jnp.float32),
            jax.ShapeDtypeStruct((L, B, H), jnp.float32),
        ),
        grid_spec=pltpu.PrefetchScalarGridSpec(
            num_scalar_prefetch=0,
            grid=(1,),                       # single invocation; recurrence in-kernel
            in_specs=in_specs,
            out_specs=out_specs,
            scratch_shapes=[],
        ),
        compiler_params=pltpu.CompilerParams(
            dimension_semantics=("arbitrary",),
        ),
    )(*args)
    return r_out, h_n


# ---------------------------------------------------------------------------
# Pure-JAX reference (unfused params, same equations) for correctness check.
# ---------------------------------------------------------------------------
def ref_gru_layer(x, p):
    T, B, D = x.shape
    H = p["whr"].shape[0]

    def step(h, x_t):
        r = jax.nn.sigmoid(x_t @ p["wir"] + p["bir"] + h @ p["whr"] + p["bhr"])
        z = jax.nn.sigmoid(x_t @ p["wiz"] + p["biz"] + h @ p["whz"] + p["bhz"])
        n = jnp.tanh(x_t @ p["win"] + p["bin"] + r * (h @ p["whn"] + p["bhn"]))
        h_new = (1.0 - z) * n + z * h
        return h_new, h_new

    h0 = jnp.zeros((B, H), jnp.float32)
    h_T, outs = jax.lax.scan(step, h0, x)
    return outs, h_T


def ref_encoder_rnn(x, layer_params):
    h_ns = []
    layer_in = x
    for p in layer_params:
        layer_in, h_n = ref_gru_layer(layer_in, p)
        h_ns.append(h_n)
    return layer_in, jnp.stack(h_ns, axis=0)


# ---------------------------------------------------------------------------
# Deterministic parameter init (PyTorch GRU init: U(-1/sqrt(H), 1/sqrt(H))).
# Weights stored transposed relative to torch (kernel / reference do x @ W).
# ---------------------------------------------------------------------------
def init_gru_params(key, input_size, hidden_size, num_layers):
    params = []
    bound = 1.0 / jnp.sqrt(jnp.float32(hidden_size))
    for layer in range(num_layers):
        d_in = input_size if layer == 0 else hidden_size
        key, *subkeys = jax.random.split(key, 13)
        u = lambda k, shape: jax.random.uniform(
            k, shape, jnp.float32, minval=-bound, maxval=bound)
        p = {
            "wir": u(subkeys[0], (d_in, hidden_size)),
            "wiz": u(subkeys[1], (d_in, hidden_size)),
            "win": u(subkeys[2], (d_in, hidden_size)),
            "whr": u(subkeys[3], (hidden_size, hidden_size)),
            "whz": u(subkeys[4], (hidden_size, hidden_size)),
            "whn": u(subkeys[5], (hidden_size, hidden_size)),
            "bir": u(subkeys[6], (1, hidden_size)),
            "biz": u(subkeys[7], (1, hidden_size)),
            "bin": u(subkeys[8], (1, hidden_size)),
            "bhr": u(subkeys[9], (1, hidden_size)),
            "bhz": u(subkeys[10], (1, hidden_size)),
            "bhn": u(subkeys[11], (1, hidden_size)),
        }
        params.append(p)
    return params


if __name__ == "__main__":
    # x : (seq_len, batch, input_size) -- nn.GRU default time-major layout.
    seq_len, batch, input_size, hidden_size, num_layers = 8, 8, 16, 32, 2

    key = jax.random.PRNGKey(0)
    key_x, key_p = jax.random.split(key)
    x = jax.random.normal(key_x, (seq_len, batch, input_size), dtype=jnp.float32)
    layer_params = init_gru_params(key_p, input_size, hidden_size, num_layers)

    fwd = jax.jit(encoder_rnn_forward)
    r_out, h_n = fwd(x, layer_params)
    r_out = jax.block_until_ready(r_out)
    h_n = jax.block_until_ready(h_n)

    assert r_out.shape == (seq_len, batch, hidden_size)
    assert h_n.shape == (num_layers, batch, hidden_size)

    # Numerical check against a pure-JAX GRU reference (unfused parameters).
    r_ref, h_ref = ref_encoder_rnn(x, layer_params)
    assert jnp.allclose(r_out, r_ref, rtol=1e-4, atol=1e-4)
    assert jnp.allclose(h_n, h_ref, rtol=1e-4, atol=1e-4)

    print("KERNEL_OK")
</pallas_src>

<mosaic_0001>
module attributes {stable_mosaic.version = 11 : i64} {
  func.func @kernel(%arg0: i32, %arg1: memref<8x8x96xf32, #tpu.memory_space<vmem>>, %arg2: memref<32x96xf32, #tpu.memory_space<vmem>>, %arg3: memref<1x32xf32, #tpu.memory_space<vmem>>, %arg4: memref<32x96xf32, #tpu.memory_space<vmem>>, %arg5: memref<1x96xf32, #tpu.memory_space<vmem>>, %arg6: memref<32x96xf32, #tpu.memory_space<vmem>>, %arg7: memref<1x32xf32, #tpu.memory_space<vmem>>, %arg8: memref<8x8x32xf32, #tpu.memory_space<vmem>>, %arg9: memref<2x8x32xf32, #tpu.memory_space<vmem>>) attributes {dimension_semantics = [#tpu.dimension_semantics<arbitrary>], iteration_bounds = array<i64: 1>, scalar_prefetch = 0 : i64, scratch_operands = 0 : i64, tpu.core_type = #tpu.core_type<tc>, window_params = [{pipeline_mode = #tpu.pipeline_mode<synchronous>, transform_indices = @transform_0, window_bounds = array<i64: 8, 8, 96>}, {pipeline_mode = #tpu.pipeline_mode<synchronous>, transform_indices = @transform_1, window_bounds = array<i64: 32, 96>}, {pipeline_mode = #tpu.pipeline_mode<synchronous>, transform_indices = @transform_2, window_bounds = array<i64: 1, 32>}, {pipeline_mode = #tpu.pipeline_mode<synchronous>, transform_indices = @transform_3, window_bounds = array<i64: 32, 96>}, {pipeline_mode = #tpu.pipeline_mode<synchronous>, transform_indices = @transform_4, window_bounds = array<i64: 1, 96>}, {pipeline_mode = #tpu.pipeline_mode<synchronous>, transform_indices = @transform_5, window_bounds = array<i64: 32, 96>}, {pipeline_mode = #tpu.pipeline_mode<synchronous>, transform_indices = @transform_6, window_bounds = array<i64: 1, 32>}, {pipeline_mode = #tpu.pipeline_mode<synchronous>, transform_indices = @transform_7, window_bounds = array<i64: 8, 8, 32>}, {pipeline_mode = #tpu.pipeline_mode<synchronous>, transform_indices = @transform_8, window_bounds = array<i64: 2, 8, 32>}]} {
    %c0 = arith.constant 0 : index
    %c0_0 = arith.constant 0 : index
    %0 = vector.load %arg2[%c0, %c0_0] : memref<32x96xf32, #tpu.memory_space<vmem>>, vector<32x96xf32>
    %c0_1 = arith.constant 0 : index
    %c0_2 = arith.constant 0 : index
    %1 = vector.load %arg3[%c0_1, %c0_2] : memref<1x32xf32, #tpu.memory_space<vmem>>, vector<1x32xf32>
    %cst = arith.constant 0.000000e+00 : f32
    %2 = vector.broadcast %cst : f32 to vector<8x32xf32>
    %c0_i32 = arith.constant 0 : i32
    %3 = arith.index_cast %c0_i32 : i32 to index
    %c0_3 = arith.constant 0 : index
    %c0_4 = arith.constant 0 : index
    %4 = vector.load %arg1[%3, %c0_3, %c0_4] : memref<8x8x96xf32, #tpu.memory_space<vmem>>, vector<1x8x96xf32>
    %5 = vector.shape_cast %4 : vector<1x8x96xf32> to vector<8x96xf32>
    %cst_5 = arith.constant dense<0.000000e+00> : vector<8x96xf32>
    %6 = tpu.matmul %2, %0, %cst_5 {dimension_numbers = #tpu.dot_dimension_numbers<[1], [0], [0], [1], [0, 0, 1, 1], [], []>} : vector<8x32xf32>, vector<32x96xf32>, vector<8x96xf32> -> vector<8x96xf32>
    %7 = vector.extract_strided_slice %5 {offsets = [0, 0], sizes = [8, 64], strides = [1, 1]} : vector<8x96xf32> to vector<8x64xf32>
    %8 = vector.extract_strided_slice %6 {offsets = [0, 0], sizes = [8, 64], strides = [1, 1]} : vector<8x96xf32> to vector<8x64xf32>
    %9 = arith.addf %7, %8 : vector<8x64xf32>
    %10 = arith.negf %9 : vector<8x64xf32>
    %11 = math.exp %10 : vector<8x64xf32>
    %cst_6 = arith.constant 1.000000e+00 : f32
    %12 = vector.broadcast %cst_6 : f32 to vector<8x64xf32>
    %13 = arith.addf %12, %11 : vector<8x64xf32>
    %14 = arith.divf %12, %13 : vector<8x64xf32>
    %15 = vector.extract_strided_slice %14 {offsets = [0, 0], sizes = [8, 32], strides = [1, 1]} : vector<8x64xf32> to vector<8x32xf32>
    %16 = vector.extract_strided_slice %14 {offsets = [0, 32], sizes = [8, 32], strides = [1, 1]} : vector<8x64xf32> to vector<8x32xf32>
    %17 = vector.extract_strided_slice %5 {offsets = [0, 64], sizes = [8, 32], strides = [1, 1]} : vector<8x96xf32> to vector<8x32xf32>
    %18 = vector.extract_strided_slice %6 {offsets = [0, 64], sizes = [8, 32], strides = [1, 1]} : vector<8x96xf32> to vector<8x32xf32>
    %19 = vector.broadcast %1 : vector<1x32xf32> to vector<8x32xf32>
    %20 = arith.addf %18, %19 : vector<8x32xf32>
    %21 = arith.mulf %15, %20 : vector<8x32xf32>
    %22 = arith.addf %17, %21 : vector<8x32xf32>
    %23 = math.tanh %22 : vector<8x32xf32>
    %cst_7 = arith.constant 1.000000e+00 : f32
    %24 = vector.broadcast %cst_7 : f32 to vector<8x32xf32>
    %25 = arith.subf %24, %16 : vector<8x32xf32>
    %26 = arith.mulf %25, %23 : vector<8x32xf32>
    %27 = arith.mulf %16, %2 : vector<8x32xf32>
    %28 = arith.addf %26, %27 : vector<8x32xf32>
    %29 = arith.index_cast %c0_i32 : i32 to index
    %c0_8 = arith.constant 0 : index
    %c0_9 = arith.constant 0 : index
    %30 = vector.load %arg8[%29, %c0_8, %c0_9] : memref<8x8x32xf32, #tpu.memory_space<vmem>>, vector<1x8x32xf32>
    %31 = vector.shape_cast %30 : vector<1x8x32xf32> to vector<8x32xf32>
    %32 = vector.shape_cast %28 : vector<8x32xf32> to vector<1x8x32xf32>
    tpu.vector_store %arg8[%29, %c0_8, %c0_9], %32 {strides = array<i32>} : memref<8x8x32xf32, #tpu.memory_space<vmem>>, vector<1x8x32xf32>,
    %c1_i32 = arith.constant 1 : i32
    %33 = arith.index_cast %c1_i32 : i32 to index
    %c0_10 = arith.constant 0 : index
    %c0_11 = arith.constant 0 : index
    %34 = vector.load %arg1[%33, %c0_10, %c0_11] : memref<8x8x96xf32, #tpu.memory_space<vmem>>, vector<1x8x96xf32>
    %35 = vector.shape_cast %34 : vector<1x8x96xf32> to vector<8x96xf32>
    %cst_12 = arith.constant dense<0.000000e+00> : vector<8x96xf32>
    %36 = tpu.matmul %28, %0, %cst_12 {dimension_numbers = #tpu.dot_dimension_numbers<[1], [0], [0], [1], [0, 0, 1, 1], [], []>} : vector<8x32xf32>, vector<32x96xf32>, vector<8x96xf32> -> vector<8x96xf32>
    %37 = vector.extract_strided_slice %35 {offsets = [0, 0], sizes = [8, 64], strides = [1, 1]} : vector<8x96xf32> to vector<8x64xf32>
    %38 = vector.extract_strided_slice %36 {offsets = [0, 0], sizes = [8, 64], strides = [1, 1]} : vector<8x96xf32> to vector<8x64xf32>
    %39 = arith.addf %37, %38 : vector<8x64xf32>
    %40 = arith.negf %39 : vector<8x64xf32>
    %41 = math.exp %40 : vector<8x64xf32>
    %cst_13 = arith.constant 1.000000e+00 : f32
    %42 = vector.broadcast %cst_13 : f32 to vector<8x64xf32>
    %43 = arith.addf %42, %41 : vector<8x64xf32>
    %44 = arith.divf %42, %43 : vector<8x64xf32>
    %45 = vector.extract_strided_slice %44 {offsets = [0, 0], sizes = [8, 32], strides = [1, 1]} : vector<8x64xf32> to vector<8x32xf32>
    %46 = vector.extract_strided_slice %44 {offsets = [0, 32], sizes = [8, 32], strides = [1, 1]} : vector<8x64xf32> to vector<8x32xf32>
    %47 = vector.extract_strided_slice %35 {offsets = [0, 64], sizes = [8, 32], strides = [1, 1]} : vector<8x96xf32> to vector<8x32xf32>
    %48 = vector.extract_strided_slice %36 {offsets = [0, 64], sizes = [8, 32], strides = [1, 1]} : vector<8x96xf32> to vector<8x32xf32>
    %49 = vector.broadcast %1 : vector<1x32xf32> to vector<8x32xf32>
    %50 = arith.addf %48, %49 : vector<8x32xf32>
    %51 = arith.mulf %45, %50 : vector<8x32xf32>
    %52 = arith.addf %47, %51 : vector<8x32xf32>
    %53 = math.tanh %52 : vector<8x32xf32>
    %cst_14 = arith.constant 1.000000e+00 : f32
    %54 = vector.broadcast %cst_14 : f32 to vector<8x32xf32>
    %55 = arith.subf %54, %46 : vector<8x32xf32>
    %56 = arith.mulf %55, %53 : vector<8x32xf32>
    %57 = arith.mulf %46, %28 : vector<8x32xf32>
    %58 = arith.addf %56, %57 : vector<8x32xf32>
    %59 = arith.index_cast %c1_i32 : i32 to index
    %c0_15 = arith.constant 0 : index
    %c0_16 = arith.constant 0 : index
    %60 = vector.load %arg8[%59, %c0_15, %c0_16] : memref<8x8x32xf32, #tpu.memory_space<vmem>>, vector<1x8x32xf32>
    %61 = vector.shape_cast %60 : vector<1x8x32xf32> to vector<8x32xf32>
    %62 = vector.shape_cast %58 : vector<8x32xf32> to vector<1x8x32xf32>
    tpu.vector_store %arg8[%59, %c0_15, %c0_16], %62 {strides = array<i32>} : memref<8x8x32xf32, #tpu.memory_space<vmem>>, vector<1x8x32xf32>,
    %c2_i32 = arith.constant 2 : i32
    %63 = arith.index_cast %c2_i32 : i32 to index
    %c0_17 = arith.constant 0 : index
    %c0_18 = arith.constant 0 : index
    %64 = vector.load %arg1[%63, %c0_17, %c0_18] : memref<8x8x96xf32, #tpu.memory_space<vmem>>, vector<1x8x96xf32>
    %65 = vector.shape_cast %64 : vector<1x8x96xf32> to vector<8x96xf32>
    %cst_19 = arith.constant dense<0.000000e+00> : vector<8x96xf32>
    %66 = tpu.matmul %58, %0, %cst_19 {dimension_numbers = #tpu.dot_dimension_numbers<[1], [0], [0], [1], [0, 0, 1, 1], [], []>} : vector<8x32xf32>, vector<32x96xf32>, vector<8x96xf32> -> vector<8x96xf32>
    %67 = vector.extract_strided_slice %65 {offsets = [0, 0], sizes = [8, 64], strides = [1, 1]} : vector<8x96xf32> to vector<8x64xf32>
    %68 = vector.extract_strided_slice %66 {offsets = [0, 0], sizes = [8, 64], strides = [1, 1]} : vector<8x96xf32> to vector<8x64xf32>
    %69 = arith.addf %67, %68 : vector<8x64xf32>
    %70 = arith.negf %69 : vector<8x64xf32>
    %71 = math.exp %70 : vector<8x64xf32>
    %cst_20 = arith.constant 1.000000e+00 : f32
    %72 = vector.broadcast %cst_20 : f32 to vector<8x64xf32>
    %73 = arith.addf %72, %71 : vector<8x64xf32>
    %74 = arith.divf %72, %73 : vector<8x64xf32>
    %75 = vector.extract_strided_slice %74 {offsets = [0, 0], sizes = [8, 32], strides = [1, 1]} : vector<8x64xf32> to vector<8x32xf32>
    %76 = vector.extract_strided_slice %74 {offsets = [0, 32], sizes = [8, 32], strides = [1, 1]} : vector<8x64xf32> to vector<8x32xf32>
    %77 = vector.extract_strided_slice %65 {offsets = [0, 64], sizes = [8, 32], strides = [1, 1]} : vector<8x96xf32> to vector<8x32xf32>
    %78 = vector.extract_strided_slice %66 {offsets = [0, 64], sizes = [8, 32], strides = [1, 1]} : vector<8x96xf32> to vector<8x32xf32>
    %79 = vector.broadcast %1 : vector<1x32xf32> to vector<8x32xf32>
    %80 = arith.addf %78, %79 : vector<8x32xf32>
    %81 = arith.mulf %75, %80 : vector<8x32xf32>
    %82 = arith.addf %77, %81 : vector<8x32xf32>
    %83 = math.tanh %82 : vector<8x32xf32>
    %cst_21 = arith.constant 1.000000e+00 : f32
    %84 = vector.broadcast %cst_21 : f32 to vector<8x32xf32>
    %85 = arith.subf %84, %76 : vector<8x32xf32>
    %86 = arith.mulf %85, %83 : vector<8x32xf32>
    %87 = arith.mulf %76, %58 : vector<8x32xf32>
    %88 = arith.addf %86, %87 : vector<8x32xf32>
    %89 = arith.index_cast %c2_i32 : i32 to index
    %c0_22 = arith.constant 0 : index
    %c0_23 = arith.constant 0 : index
    %90 = vector.load %arg8[%89, %c0_22, %c0_23] : memref<8x8x32xf32, #tpu.memory_space<vmem>>, vector<1x8x32xf32>
    %91 = vector.shape_cast %90 : vector<1x8x32xf32> to vector<8x32xf32>
    %92 = vector.shape_cast %88 : vector<8x32xf32> to vector<1x8x32xf32>
    tpu.vector_store %arg8[%89, %c0_22, %c0_23], %92 {strides = array<i32>} : memref<8x8x32xf32, #tpu.memory_space<vmem>>, vector<1x8x32xf32>,
    %c3_i32 = arith.constant 3 : i32
    %93 = arith.index_cast %c3_i32 : i32 to index
    %c0_24 = arith.constant 0 : index
    %c0_25 = arith.constant 0 : index
    %94 = vector.load %arg1[%93, %c0_24, %c0_25] : memref<8x8x96xf32, #tpu.memory_space<vmem>>, vector<1x8x96xf32>
    %95 = vector.shape_cast %94 : vector<1x8x96xf32> to vector<8x96xf32>
    %cst_26 = arith.constant dense<0.000000e+00> : vector<8x96xf32>
    %96 = tpu.matmul %88, %0, %cst_26 {dimension_numbers = #tpu.dot_dimension_numbers<[1], [0], [0], [1], [0, 0, 1, 1], [], []>} : vector<8x32xf32>, vector<32x96xf32>, vector<8x96xf32> -> vector<8x96xf32>
    %97 = vector.extract_strided_slice %95 {offsets = [0, 0], sizes = [8, 64], strides = [1, 1]} : vector<8x96xf32> to vector<8x64xf32>
    %98 = vector.extract_strided_slice %96 {offsets = [0, 0], sizes = [8, 64], strides = [1, 1]} : vector<8x96xf32> to vector<8x64xf32>
    %99 = arith.addf %97, %98 : vector<8x64xf32>
    %100 = arith.negf %99 : vector<8x64xf32>
    %101 = math.exp %100 : vector<8x64xf32>
    %cst_27 = arith.constant 1.000000e+00 : f32
    %102 = vector.broadcast %cst_27 : f32 to vector<8x64xf32>
    %103 = arith.addf %102, %101 : vector<8x64xf32>
    %104 = arith.divf %102, %103 : vector<8x64xf32>
    %105 = vector.extract_strided_slice %104 {offsets = [0, 0], sizes = [8, 32], strides = [1, 1]} : vector<8x64xf32> to vector<8x32xf32>
    %106 = vector.extract_strided_slice %104 {offsets = [0, 32], sizes = [8, 32], strides = [1, 1]} : vector<8x64xf32> to vector<8x32xf32>
    %107 = vector.extract_strided_slice %95 {offsets = [0, 64], sizes = [8, 32], strides = [1, 1]} : vector<8x96xf32> to vector<8x32xf32>
    %108 = vector.extract_strided_slice %96 {offsets = [0, 64], sizes = [8, 32], strides = [1, 1]} : vector<8x96xf32> to vector<8x32xf32>
    %109 = vector.broadcast %1 : vector<1x32xf32> to vector<8x32xf32>
    %110 = arith.addf %108, %109 : vector<8x32xf32>
    %111 = arith.mulf %105, %110 : vector<8x32xf32>
    %112 = arith.addf %107, %111 : vector<8x32xf32>
    %113 = math.tanh %112 : vector<8x32xf32>
    %cst_28 = arith.constant 1.000000e+00 : f32
    %114 = vector.broadcast %cst_28 : f32 to vector<8x32xf32>
    %115 = arith.subf %114, %106 : vector<8x32xf32>
    %116 = arith.mulf %115, %113 : vector<8x32xf32>
    %117 = arith.mulf %106, %88 : vector<8x32xf32>
    %118 = arith.addf %116, %117 : vector<8x32xf32>
    %119 = arith.index_cast %c3_i32 : i32 to index
    %c0_29 = arith.constant 0 : index
    %c0_30 = arith.constant 0 : index
    %120 = vector.load %arg8[%119, %c0_29, %c0_30] : memref<8x8x32xf32, #tpu.memory_space<vmem>>, vector<1x8x32xf32>
    %121 = vector.shape_cast %120 : vector<1x8x32xf32> to vector<8x32xf32>
    %122 = vector.shape_cast %118 : vector<8x32xf32> to vector<1x8x32xf32>
    tpu.vector_store %arg8[%119, %c0_29, %c0_30], %122 {strides = array<i32>} : memref<8x8x32xf32, #tpu.memory_space<vmem>>, vector<1x8x32xf32>,
    %c4_i32 = arith.constant 4 : i32
    %123 = arith.index_cast %c4_i32 : i32 to index
    %c0_31 = arith.constant 0 : index
    %c0_32 = arith.constant 0 : index
    %124 = vector.load %arg1[%123, %c0_31, %c0_32] : memref<8x8x96xf32, #tpu.memory_space<vmem>>, vector<1x8x96xf32>
    %125 = vector.shape_cast %124 : vector<1x8x96xf32> to vector<8x96xf32>
    %cst_33 = arith.constant dense<0.000000e+00> : vector<8x96xf32>
    %126 = tpu.matmul %118, %0, %cst_33 {dimension_numbers = #tpu.dot_dimension_numbers<[1], [0], [0], [1], [0, 0, 1, 1], [], []>} : vector<8x32xf32>, vector<32x96xf32>, vector<8x96xf32> -> vector<8x96xf32>
    %127 = vector.extract_strided_slice %125 {offsets = [0, 0], sizes = [8, 64], strides = [1, 1]} : vector<8x96xf32> to vector<8x64xf32>
    %128 = vector.extract_strided_slice %126 {offsets = [0, 0], sizes = [8, 64], strides = [1, 1]} : vector<8x96xf32> to vector<8x64xf32>
    %129 = arith.addf %127, %128 : vector<8x64xf32>
    %130 = arith.negf %129 : vector<8x64xf32>
    %131 = math.exp %130 : vector<8x64xf32>
    %cst_34 = arith.constant 1.000000e+00 : f32
    %132 = vector.broadcast %cst_34 : f32 to vector<8x64xf32>
    %133 = arith.addf %132, %131 : vector<8x64xf32>
    %134 = arith.divf %132, %133 : vector<8x64xf32>
    %135 = vector.extract_strided_slice %134 {offsets = [0, 0], sizes = [8, 32], strides = [1, 1]} : vector<8x64xf32> to vector<8x32xf32>
    %136 = vector.extract_strided_slice %134 {offsets = [0, 32], sizes = [8, 32], strides = [1, 1]} : vector<8x64xf32> to vector<8x32xf32>
    %137 = vector.extract_strided_slice %125 {offsets = [0, 64], sizes = [8, 32], strides = [1, 1]} : vector<8x96xf32> to vector<8x32xf32>
    %138 = vector.extract_strided_slice %126 {offsets = [0, 64], sizes = [8, 32], strides = [1, 1]} : vector<8x96xf32> to vector<8x32xf32>
    %139 = vector.broadcast %1 : vector<1x32xf32> to vector<8x32xf32>
    %140 = arith.addf %138, %139 : vector<8x32xf32>
    %141 = arith.mulf %135, %140 : vector<8x32xf32>
    %142 = arith.addf %137, %141 : vector<8x32xf32>
    %143 = math.tanh %142 : vector<8x32xf32>
    %cst_35 = arith.constant 1.000000e+00 : f32
    %144 = vector.broadcast %cst_35 : f32 to vector<8x32xf32>
    %145 = arith.subf %144, %136 : vector<8x32xf32>
    %146 = arith.mulf %145, %143 : vector<8x32xf32>
    %147 = arith.mulf %136, %118 : vector<8x32xf32>
    %148 = arith.addf %146, %147 : vector<8x32xf32>
    %149 = arith.index_cast %c4_i32 : i32 to index
    %c0_36 = arith.constant 0 : index
    %c0_37 = arith.constant 0 : index
    %150 = vector.load %arg8[%149, %c0_36, %c0_37] : memref<8x8x32xf32, #tpu.memory_space<vmem>>, vector<1x8x32xf32>
    %151 = vector.shape_cast %150 : vector<1x8x32xf32> to vector<8x32xf32>
    %152 = vector.shape_cast %148 : vector<8x32xf32> to vector<1x8x32xf32>
    tpu.vector_store %arg8[%149, %c0_36, %c0_37], %152 {strides = array<i32>} : memref<8x8x32xf32, #tpu.memory_space<vmem>>, vector<1x8x32xf32>,
    %c5_i32 = arith.constant 5 : i32
    %153 = arith.index_cast %c5_i32 : i32 to index
    %c0_38 = arith.constant 0 : index
    %c0_39 = arith.constant 0 : index
    %154 = vector.load %arg1[%153, %c0_38, %c0_39] : memref<8x8x96xf32, #tpu.memory_space<vmem>>, vector<1x8x96xf32>
    %155 = vector.shape_cast %154 : vector<1x8x96xf32> to vector<8x96xf32>
    %cst_40 = arith.constant dense<0.000000e+00> : vector<8x96xf32>
    %156 = tpu.matmul %148, %0, %cst_40 {dimension_numbers = #tpu.dot_dimension_numbers<[1], [0], [0], [1], [0, 0, 1, 1], [], []>} : vector<8x32xf32>, vector<32x96xf32>, vector<8x96xf32> -> vector<8x96xf32>
    %157 = vector.extract_strided_slice %155 {offsets = [0, 0], sizes = [8, 64], strides = [1, 1]} : vector<8x96xf32> to vector<8x64xf32>
    %158 = vector.extract_strided_slice %156 {offsets = [0, 0], sizes = [8, 64], strides = [1, 1]} : vector<8x96xf32> to vector<8x64xf32>
    %159 = arith.addf %157, %158 : vector<8x64xf32>
    %160 = arith.negf %159 : vector<8x64xf32>
    %161 = math.exp %160 : vector<8x64xf32>
    %cst_41 = arith.constant 1.000000e+00 : f32
    %162 = vector.broadcast %cst_41 : f32 to vector<8x64xf32>
    %163 = arith.addf %162, %161 : vector<8x64xf32>
    %164 = arith.divf %162, %163 : vector<8x64xf32>
    %165 = vector.extract_strided_slice %164 {offsets = [0, 0], sizes = [8, 32], strides = [1, 1]} : vector<8x64xf32> to vector<8x32xf32>
    %166 = vector.extract_strided_slice %164 {offsets = [0, 32], sizes = [8, 32], strides = [1, 1]} : vector<8x64xf32> to vector<8x32xf32>
    %167 = vector.extract_strided_slice %155 {offsets = [0, 64], sizes = [8, 32], strides = [1, 1]} : vector<8x96xf32> to vector<8x32xf32>
    %168 = vector.extract_strided_slice %156 {offsets = [0, 64], sizes = [8, 32], strides = [1, 1]} : vector<8x96xf32> to vector<8x32xf32>
    %169 = vector.broadcast %1 : vector<1x32xf32> to vector<8x32xf32>
    %170 = arith.addf %168, %169 : vector<8x32xf32>
    %171 = arith.mulf %165, %170 : vector<8x32xf32>
    %172 = arith.addf %167, %171 : vector<8x32xf32>
    %173 = math.tanh %172 : vector<8x32xf32>
    %cst_42 = arith.constant 1.000000e+00 : f32
    %174 = vector.broadcast %cst_42 : f32 to vector<8x32xf32>
    %175 = arith.subf %174, %166 : vector<8x32xf32>
    %176 = arith.mulf %175, %173 : vector<8x32xf32>
    %177 = arith.mulf %166, %148 : vector<8x32xf32>
    %178 = arith.addf %176, %177 : vector<8x32xf32>
    %179 = arith.index_cast %c5_i32 : i32 to index
    %c0_43 = arith.constant 0 : index
    %c0_44 = arith.constant 0 : index
    %180 = vector.load %arg8[%179, %c0_43, %c0_44] : memref<8x8x32xf32, #tpu.memory_space<vmem>>, vector<1x8x32xf32>
    %181 = vector.shape_cast %180 : vector<1x8x32xf32> to vector<8x32xf32>
    %182 = vector.shape_cast %178 : vector<8x32xf32> to vector<1x8x32xf32>
    tpu.vector_store %arg8[%179, %c0_43, %c0_44], %182 {strides = array<i32>} : memref<8x8x32xf32, #tpu.memory_space<vmem>>, vector<1x8x32xf32>,
    %c6_i32 = arith.constant 6 : i32
    %183 = arith.index_cast %c6_i32 : i32 to index
    %c0_45 = arith.constant 0 : index
    %c0_46 = arith.constant 0 : index
    %184 = vector.load %arg1[%183, %c0_45, %c0_46] : memref<8x8x96xf32, #tpu.memory_space<vmem>>, vector<1x8x96xf32>
    %185 = vector.shape_cast %184 : vector<1x8x96xf32> to vector<8x96xf32>
    %cst_47 = arith.constant dense<0.000000e+00> : vector<8x96xf32>
    %186 = tpu.matmul %178, %0, %cst_47 {dimension_numbers = #tpu.dot_dimension_numbers<[1], [0], [0], [1], [0, 0, 1, 1], [], []>} : vector<8x32xf32>, vector<32x96xf32>, vector<8x96xf32> -> vector<8x96xf32>
    %187 = vector.extract_strided_slice %185 {offsets = [0, 0], sizes = [8, 64], strides = [1, 1]} : vector<8x96xf32> to vector<8x64xf32>
    %188 = vector.extract_strided_slice %186 {offsets = [0, 0], sizes = [8, 64], strides = [1, 1]} : vector<8x96xf32> to vector<8x64xf32>
    %189 = arith.addf %187, %188 : vector<8x64xf32>
    %190 = arith.negf %189 : vector<8x64xf32>
    %191 = math.exp %190 : vector<8x64xf32>
    %cst_48 = arith.constant 1.000000e+00 : f32
    %192 = vector.broadcast %cst_48 : f32 to vector<8x64xf32>
    %193 = arith.addf %192, %191 : vector<8x64xf32>
    %194 = arith.divf %192, %193 : vector<8x64xf32>
    %195 = vector.extract_strided_slice %194 {offsets = [0, 0], sizes = [8, 32], strides = [1, 1]} : vector<8x64xf32> to vector<8x32xf32>
    %196 = vector.extract_strided_slice %194 {offsets = [0, 32], sizes = [8, 32], strides = [1, 1]} : vector<8x64xf32> to vector<8x32xf32>
    %197 = vector.extract_strided_slice %185 {offsets = [0, 64], sizes = [8, 32], strides = [1, 1]} : vector<8x96xf32> to vector<8x32xf32>
    %198 = vector.extract_strided_slice %186 {offsets = [0, 64], sizes = [8, 32], strides = [1, 1]} : vector<8x96xf32> to vector<8x32xf32>
    %199 = vector.broadcast %1 : vector<1x32xf32> to vector<8x32xf32>
    %200 = arith.addf %198, %199 : vector<8x32xf32>
    %201 = arith.mulf %195, %200 : vector<8x32xf32>
    %202 = arith.addf %197, %201 : vector<8x32xf32>
    %203 = math.tanh %202 : vector<8x32xf32>
    %cst_49 = arith.constant 1.000000e+00 : f32
    %204 = vector.broadcast %cst_49 : f32 to vector<8x32xf32>
    %205 = arith.subf %204, %196 : vector<8x32xf32>
    %206 = arith.mulf %205, %203 : vector<8x32xf32>
    %207 = arith.mulf %196, %178 : vector<8x32xf32>
    %208 = arith.addf %206, %207 : vector<8x32xf32>
    %209 = arith.index_cast %c6_i32 : i32 to index
    %c0_50 = arith.constant 0 : index
    %c0_51 = arith.constant 0 : index
    %210 = vector.load %arg8[%209, %c0_50, %c0_51] : memref<8x8x32xf32, #tpu.memory_space<vmem>>, vector<1x8x32xf32>
    %211 = vector.shape_cast %210 : vector<1x8x32xf32> to vector<8x32xf32>
    %212 = vector.shape_cast %208 : vector<8x32xf32> to vector<1x8x32xf32>
    tpu.vector_store %arg8[%209, %c0_50, %c0_51], %212 {strides = array<i32>} : memref<8x8x32xf32, #tpu.memory_space<vmem>>, vector<1x8x32xf32>,
    %c7_i32 = arith.constant 7 : i32
    %213 = arith.index_cast %c7_i32 : i32 to index
    %c0_52 = arith.constant 0 : index
    %c0_53 = arith.constant 0 : index
    %214 = vector.load %arg1[%213, %c0_52, %c0_53] : memref<8x8x96xf32, #tpu.memory_space<vmem>>, vector<1x8x96xf32>
    %215 = vector.shape_cast %214 : vector<1x8x96xf32> to vector<8x96xf32>
    %cst_54 = arith.constant dense<0.000000e+00> : vector<8x96xf32>
    %216 = tpu.matmul %208, %0, %cst_54 {dimension_numbers = #tpu.dot_dimension_numbers<[1], [0], [0], [1], [0, 0, 1, 1], [], []>} : vector<8x32xf32>, vector<32x96xf32>, vector<8x96xf32> -> vector<8x96xf32>
    %217 = vector.extract_strided_slice %215 {offsets = [0, 0], sizes = [8, 64], strides = [1, 1]} : vector<8x96xf32> to vector<8x64xf32>
    %218 = vector.extract_strided_slice %216 {offsets = [0, 0], sizes = [8, 64], strides = [1, 1]} : vector<8x96xf32> to vector<8x64xf32>
    %219 = arith.addf %217, %218 : vector<8x64xf32>
    %220 = arith.negf %219 : vector<8x64xf32>
    %221 = math.exp %220 : vector<8x64xf32>
    %cst_55 = arith.constant 1.000000e+00 : f32
    %222 = vector.broadcast %cst_55 : f32 to vector<8x64xf32>
    %223 = arith.addf %222, %221 : vector<8x64xf32>
    %224 = arith.divf %222, %223 : vector<8x64xf32>
    %225 = vector.extract_strided_slice %224 {offsets = [0, 0], sizes = [8, 32], strides = [1, 1]} : vector<8x64xf32> to vector<8x32xf32>
    %226 = vector.extract_strided_slice %224 {offsets = [0, 32], sizes = [8, 32], strides = [1, 1]} : vector<8x64xf32> to vector<8x32xf32>
    %227 = vector.extract_strided_slice %215 {offsets = [0, 64], sizes = [8, 32], strides = [1, 1]} : vector<8x96xf32> to vector<8x32xf32>
    %228 = vector.extract_strided_slice %216 {offsets = [0, 64], sizes = [8, 32], strides = [1, 1]} : vector<8x96xf32> to vector<8x32xf32>
    %229 = vector.broadcast %1 : vector<1x32xf32> to vector<8x32xf32>
    %230 = arith.addf %228, %229 : vector<8x32xf32>
    %231 = arith.mulf %225, %230 : vector<8x32xf32>
    %232 = arith.addf %227, %231 : vector<8x32xf32>
    %233 = math.tanh %232 : vector<8x32xf32>
    %cst_56 = arith.constant 1.000000e+00 : f32
    %234 = vector.broadcast %cst_56 : f32 to vector<8x32xf32>
    %235 = arith.subf %234, %226 : vector<8x32xf32>
    %236 = arith.mulf %235, %233 : vector<8x32xf32>
    %237 = arith.mulf %226, %208 : vector<8x32xf32>
    %238 = arith.addf %236, %237 : vector<8x32xf32>
    %239 = arith.index_cast %c7_i32 : i32 to index
    %c0_57 = arith.constant 0 : index
    %c0_58 = arith.constant 0 : index
    %240 = vector.load %arg8[%239, %c0_57, %c0_58] : memref<8x8x32xf32, #tpu.memory_space<vmem>>, vector<1x8x32xf32>
    %241 = vector.shape_cast %240 : vector<1x8x32xf32> to vector<8x32xf32>
    %242 = vector.shape_cast %238 : vector<8x32xf32> to vector<1x8x32xf32>
    tpu.vector_store %arg8[%239, %c0_57, %c0_58], %242 {strides = array<i32>} : memref<8x8x32xf32, #tpu.memory_space<vmem>>, vector<1x8x32xf32>,
    %c8_i32 = arith.constant 8 : i32
    %c0_59 = arith.constant 0 : index
    %c0_60 = arith.constant 0 : index
    %c0_61 = arith.constant 0 : index
    %243 = vector.load %arg9[%c0_59, %c0_60, %c0_61] : memref<2x8x32xf32, #tpu.memory_space<vmem>>, vector<1x8x32xf32>
    %244 = vector.shape_cast %243 : vector<1x8x32xf32> to vector<8x32xf32>
    %245 = vector.shape_cast %238 : vector<8x32xf32> to vector<1x8x32xf32>
    tpu.vector_store %arg9[%c0_59, %c0_60, %c0_61], %245 {strides = array<i32>} : memref<2x8x32xf32, #tpu.memory_space<vmem>>, vector<1x8x32xf32>,
    %c0_62 = arith.constant 0 : index
    %c0_63 = arith.constant 0 : index
    %246 = vector.load %arg6[%c0_62, %c0_63] : memref<32x96xf32, #tpu.memory_space<vmem>>, vector<32x96xf32>
    %c0_64 = arith.constant 0 : index
    %c0_65 = arith.constant 0 : index
    %247 = vector.load %arg7[%c0_64, %c0_65] : memref<1x32xf32, #tpu.memory_space<vmem>>, vector<1x32xf32>
    %c0_66 = arith.constant 0 : index
    %c0_67 = arith.constant 0 : index
    %248 = vector.load %arg4[%c0_66, %c0_67] : memref<32x96xf32, #tpu.memory_space<vmem>>, vector<32x96xf32>
    %c0_68 = arith.constant 0 : index
    %c0_69 = arith.constant 0 : index
    %249 = vector.load %arg5[%c0_68, %c0_69] : memref<1x96xf32, #tpu.memory_space<vmem>>, vector<1x96xf32>
    %cst_70 = arith.constant 0.000000e+00 : f32
    %250 = vector.broadcast %cst_70 : f32 to vector<8x32xf32>
    %c0_i32_71 = arith.constant 0 : i32
    %251 = arith.index_cast %c0_i32_71 : i32 to index
    %c0_72 = arith.constant 0 : index
    %c0_73 = arith.constant 0 : index
    %252 = vector.load %arg8[%251, %c0_72, %c0_73] : memref<8x8x32xf32, #tpu.memory_space<vmem>>, vector<1x8x32xf32>
    %253 = vector.shape_cast %252 : vector<1x8x32xf32> to vector<8x32xf32>
    %cst_74 = arith.constant dense<0.000000e+00> : vector<8x96xf32>
    %254 = tpu.matmul %253, %248, %cst_74 {dimension_numbers = #tpu.dot_dimension_numbers<[1], [0], [0], [1], [0, 0, 1, 1], [], []>} : vector<8x32xf32>, vector<32x96xf32>, vector<8x96xf32> -> vector<8x96xf32>
    %255 = vector.broadcast %249 : vector<1x96xf32> to vector<8x96xf32>
    %256 = arith.addf %254, %255 : vector<8x96xf32>
    %cst_75 = arith.constant dense<0.000000e+00> : vector<8x96xf32>
    %257 = tpu.matmul %250, %246, %cst_75 {dimension_numbers = #tpu.dot_dimension_numbers<[1], [0], [0], [1], [0, 0, 1, 1], [], []>} : vector<8x32xf32>, vector<32x96xf32>, vector<8x96xf32> -> vector<8x96xf32>
    %258 = vector.extract_strided_slice %256 {offsets = [0, 0], sizes = [8, 64], strides = [1, 1]} : vector<8x96xf32> to vector<8x64xf32>
    %259 = vector.extract_strided_slice %257 {offsets = [0, 0], sizes = [8, 64], strides = [1, 1]} : vector<8x96xf32> to vector<8x64xf32>
    %260 = arith.addf %258, %259 : vector<8x64xf32>
    %261 = arith.negf %260 : vector<8x64xf32>
    %262 = math.exp %261 : vector<8x64xf32>
    %cst_76 = arith.constant 1.000000e+00 : f32
    %263 = vector.broadcast %cst_76 : f32 to vector<8x64xf32>
    %264 = arith.addf %263, %262 : vector<8x64xf32>
    %265 = arith.divf %263, %264 : vector<8x64xf32>
    %266 = vector.extract_strided_slice %265 {offsets = [0, 0], sizes = [8, 32], strides = [1, 1]} : vector<8x64xf32> to vector<8x32xf32>
    %267 = vector.extract_strided_slice %265 {offsets = [0, 32], sizes = [8, 32], strides = [1, 1]} : vector<8x64xf32> to vector<8x32xf32>
    %268 = vector.extract_strided_slice %256 {offsets = [0, 64], sizes = [8, 32], strides = [1, 1]} : vector<8x96xf32> to vector<8x32xf32>
    %269 = vector.extract_strided_slice %257 {offsets = [0, 64], sizes = [8, 32], strides = [1, 1]} : vector<8x96xf32> to vector<8x32xf32>
    %270 = vector.broadcast %247 : vector<1x32xf32> to vector<8x32xf32>
    %271 = arith.addf %269, %270 : vector<8x32xf32>
    %272 = arith.mulf %266, %271 : vector<8x32xf32>
    %273 = arith.addf %268, %272 : vector<8x32xf32>
    %274 = math.tanh %273 : vector<8x32xf32>
    %cst_77 = arith.constant 1.000000e+00 : f32
    %275 = vector.broadcast %cst_77 : f32 to vector<8x32xf32>
    %276 = arith.subf %275, %267 : vector<8x32xf32>
    %277 = arith.mulf %276, %274 : vector<8x32xf32>
    %278 = arith.mulf %267, %250 : vector<8x32xf32>
    %279 = arith.addf %277, %278 : vector<8x32xf32>
    %280 = arith.index_cast %c0_i32_71 : i32 to index
    %c0_78 = arith.constant 0 : index
    %c0_79 = arith.constant 0 : index
    %281 = vector.load %arg8[%280, %c0_78, %c0_79] : memref<8x8x32xf32, #tpu.memory_space<vmem>>, vector<1x8x32xf32>
    %282 = vector.shape_cast %281 : vector<1x8x32xf32> to vector<8x32xf32>
    %283 = vector.shape_cast %279 : vector<8x32xf32> to vector<1x8x32xf32>
    tpu.vector_store %arg8[%280, %c0_78, %c0_79], %283 {strides = array<i32>} : memref<8x8x32xf32, #tpu.memory_space<vmem>>, vector<1x8x32xf32>,
    %c1_i32_80 = arith.constant 1 : i32
    %284 = arith.index_cast %c1_i32_80 : i32 to index
    %c0_81 = arith.constant 0 : index
    %c0_82 = arith.constant 0 : index
    %285 = vector.load %arg8[%284, %c0_81, %c0_82] : memref<8x8x32xf32, #tpu.memory_space<vmem>>, vector<1x8x32xf32>
    %286 = vector.shape_cast %285 : vector<1x8x32xf32> to vector<8x32xf32>
    %cst_83 = arith.constant dense<0.000000e+00> : vector<8x96xf32>
    %287 = tpu.matmul %286, %248, %cst_83 {dimension_numbers = #tpu.dot_dimension_numbers<[1], [0], [0], [1], [0, 0, 1, 1], [], []>} : vector<8x32xf32>, vector<32x96xf32>, vector<8x96xf32> -> vector<8x96xf32>
    %288 = vector.broadcast %249 : vector<1x96xf32> to vector<8x96xf32>
    %289 = arith.addf %287, %288 : vector<8x96xf32>
    %cst_84 = arith.constant dense<0.000000e+00> : vector<8x96xf32>
    %290 = tpu.matmul %279, %246, %cst_84 {dimension_numbers = #tpu.dot_dimension_numbers<[1], [0], [0], [1], [0, 0, 1, 1], [], []>} : vector<8x32xf32>, vector<32x96xf32>, vector<8x96xf32> -> vector<8x96xf32>
    %291 = vector.extract_strided_slice %289 {offsets = [0, 0], sizes = [8, 64], strides = [1, 1]} : vector<8x96xf32> to vector<8x64xf32>
    %292 = vector.extract_strided_slice %290 {offsets = [0, 0], sizes = [8, 64], strides = [1, 1]} : vector<8x96xf32> to vector<8x64xf32>
    %293 = arith.addf %291, %292 : vector<8x64xf32>
    %294 = arith.negf %293 : vector<8x64xf32>
    %295 = math.exp %294 : vector<8x64xf32>
    %cst_85 = arith.constant 1.000000e+00 : f32
    %296 = vector.broadcast %cst_85 : f32 to vector<8x64xf32>
    %297 = arith.addf %296, %295 : vector<8x64xf32>
    %298 = arith.divf %296, %297 : vector<8x64xf32>
    %299 = vector.extract_strided_slice %298 {offsets = [0, 0], sizes = [8, 32], strides = [1, 1]} : vector<8x64xf32> to vector<8x32xf32>
    %300 = vector.extract_strided_slice %298 {offsets = [0, 32], sizes = [8, 32], strides = [1, 1]} : vector<8x64xf32> to vector<8x32xf32>
    %301 = vector.extract_strided_slice %289 {offsets = [0, 64], sizes = [8, 32], strides = [1, 1]} : vector<8x96xf32> to vector<8x32xf32>
    %302 = vector.extract_strided_slice %290 {offsets = [0, 64], sizes = [8, 32], strides = [1, 1]} : vector<8x96xf32> to vector<8x32xf32>
    %303 = vector.broadcast %247 : vector<1x32xf32> to vector<8x32xf32>
    %304 = arith.addf %302, %303 : vector<8x32xf32>
    %305 = arith.mulf %299, %304 : vector<8x32xf32>
    %306 = arith.addf %301, %305 : vector<8x32xf32>
    %307 = math.tanh %306 : vector<8x32xf32>
    %cst_86 = arith.constant 1.000000e+00 : f32
    %308 = vector.broadcast %cst_86 : f32 to vector<8x32xf32>
    %309 = arith.subf %308, %300 : vector<8x32xf32>
    %310 = arith.mulf %309, %307 : vector<8x32xf32>
    %311 = arith.mulf %300, %279 : vector<8x32xf32>
    %312 = arith.addf %310, %311 : vector<8x32xf32>
    %313 = arith.index_cast %c1_i32_80 : i32 to index
    %c0_87 = arith.constant 0 : index
    %c0_88 = arith.constant 0 : index
    %314 = vector.load %arg8[%313, %c0_87, %c0_88] : memref<8x8x32xf32, #tpu.memory_space<vmem>>, vector<1x8x32xf32>
    %315 = vector.shape_cast %314 : vector<1x8x32xf32> to vector<8x32xf32>
    %316 = vector.shape_cast %312 : vector<8x32xf32> to vector<1x8x32xf32>
    tpu.vector_store %arg8[%313, %c0_87, %c0_88], %316 {strides = array<i32>} : memref<8x8x32xf32, #tpu.memory_space<vmem>>, vector<1x8x32xf32>,
    %c2_i32_89 = arith.constant 2 : i32
    %317 = arith.index_cast %c2_i32_89 : i32 to index
    %c0_90 = arith.constant 0 : index
    %c0_91 = arith.constant 0 : index
    %318 = vector.load %arg8[%317, %c0_90, %c0_91] : memref<8x8x32xf32, #tpu.memory_space<vmem>>, vector<1x8x32xf32>
    %319 = vector.shape_cast %318 : vector<1x8x32xf32> to vector<8x32xf32>
    %cst_92 = arith.constant dense<0.000000e+00> : vector<8x96xf32>
    %320 = tpu.matmul %319, %248, %cst_92 {dimension_numbers = #tpu.dot_dimension_numbers<[1], [0], [0], [1], [0, 0, 1, 1], [], []>} : vector<8x32xf32>, vector<32x96xf32>, vector<8x96xf32> -> vector<8x96xf32>
    %321 = vector.broadcast %249 : vector<1x96xf32> to vector<8x96xf32>
    %322 = arith.addf %320, %321 : vector<8x96xf32>
    %cst_93 = arith.constant dense<0.000000e+00> : vector<8x96xf32>
    %323 = tpu.matmul %312, %246, %cst_93 {dimension_numbers = #tpu.dot_dimension_numbers<[1], [0], [0], [1], [0, 0, 1, 1], [], []>} : vector<8x32xf32>, vector<32x96xf32>, vector<8x96xf32> -> vector<8x96xf32>
    %324 = vector.extract_strided_slice %322 {offsets = [0, 0], sizes = [8, 64], strides = [1, 1]} : vector<8x96xf32> to vector<8x64xf32>
    %325 = vector.extract_strided_slice %323 {offsets = [0, 0], sizes = [8, 64], strides = [1, 1]} : vector<8x96xf32> to vector<8x64xf32>
    %326 = arith.addf %324, %325 : vector<8x64xf32>
    %327 = arith.negf %326 : vector<8x64xf32>
    %328 = math.exp %327 : vector<8x64xf32>
    %cst_94 = arith.constant 1.000000e+00 : f32
    %329 = vector.broadcast %cst_94 : f32 to vector<8x64xf32>
    %330 = arith.addf %329, %328 : vector<8x64xf32>
    %331 = arith.divf %329, %330 : vector<8x64xf32>
    %332 = vector.extract_strided_slice %331 {offsets = [0, 0], sizes = [8, 32], strides = [1, 1]} : vector<8x64xf32> to vector<8x32xf32>
    %333 = vector.extract_strided_slice %331 {offsets = [0, 32], sizes = [8, 32], strides = [1, 1]} : vector<8x64xf32> to vector<8x32xf32>
    %334 = vector.extract_strided_slice %322 {offsets = [0, 64], sizes = [8, 32], strides = [1, 1]} : vector<8x96xf32> to vector<8x32xf32>
    %335 = vector.extract_strided_slice %323 {offsets = [0, 64], sizes = [8, 32], strides = [1, 1]} : vector<8x96xf32> to vector<8x32xf32>
    %336 = vector.broadcast %247 : vector<1x32xf32> to vector<8x32xf32>
    %337 = arith.addf %335, %336 : vector<8x32xf32>
    %338 = arith.mulf %332, %337 : vector<8x32xf32>
    %339 = arith.addf %334, %338 : vector<8x32xf32>
    %340 = math.tanh %339 : vector<8x32xf32>
    %cst_95 = arith.constant 1.000000e+00 : f32
    %341 = vector.broadcast %cst_95 : f32 to vector<8x32xf32>
    %342 = arith.subf %341, %333 : vector<8x32xf32>
    %343 = arith.mulf %342, %340 : vector<8x32xf32>
    %344 = arith.mulf %333, %312 : vector<8x32xf32>
    %345 = arith.addf %343, %344 : vector<8x32xf32>
    %346 = arith.index_cast %c2_i32_89 : i32 to index
    %c0_96 = arith.constant 0 : index
    %c0_97 = arith.constant 0 : index
    %347 = vector.load %arg8[%346, %c0_96, %c0_97] : memref<8x8x32xf32, #tpu.memory_space<vmem>>, vector<1x8x32xf32>
    %348 = vector.shape_cast %347 : vector<1x8x32xf32> to vector<8x32xf32>
    %349 = vector.shape_cast %345 : vector<8x32xf32> to vector<1x8x32xf32>
    tpu.vector_store %arg8[%346, %c0_96, %c0_97], %349 {strides = array<i32>} : memref<8x8x32xf32, #tpu.memory_space<vmem>>, vector<1x8x32xf32>,
    %c3_i32_98 = arith.constant 3 : i32
    %350 = arith.index_cast %c3_i32_98 : i32 to index
    %c0_99 = arith.constant 0 : index
    %c0_100 = arith.constant 0 : index
    %351 = vector.load %arg8[%350, %c0_99, %c0_100] : memref<8x8x32xf32, #tpu.memory_space<vmem>>, vector<1x8x32xf32>
    %352 = vector.shape_cast %351 : vector<1x8x32xf32> to vector<8x32xf32>
    %cst_101 = arith.constant dense<0.000000e+00> : vector<8x96xf32>
    %353 = tpu.matmul %352, %248, %cst_101 {dimension_numbers = #tpu.dot_dimension_numbers<[1], [0], [0], [1], [0, 0, 1, 1], [], []>} : vector<8x32xf32>, vector<32x96xf32>, vector<8x96xf32> -> vector<8x96xf32>
    %354 = vector.broadcast %249 : vector<1x96xf32> to vector<8x96xf32>
    %355 = arith.addf %353, %354 : vector<8x96xf32>
    %cst_102 = arith.constant dense<0.000000e+00> : vector<8x96xf32>
    %356 = tpu.matmul %345, %246, %cst_102 {dimension_numbers = #tpu.dot_dimension_numbers<[1], [0], [0], [1], [0, 0, 1, 1], [], []>} : vector<8x32xf32>, vector<32x96xf32>, vector<8x96xf32> -> vector<8x96xf32>
    %357 = vector.extract_strided_slice %355 {offsets = [0, 0], sizes = [8, 64], strides = [1, 1]} : vector<8x96xf32> to vector<8x64xf32>
    %358 = vector.extract_strided_slice %356 {offsets = [0, 0], sizes = [8, 64], strides = [1, 1]} : vector<8x96xf32> to vector<8x64xf32>
    %359 = arith.addf %357, %358 : vector<8x64xf32>
    %360 = arith.negf %359 : vector<8x64xf32>
    %361 = math.exp %360 : vector<8x64xf32>
    %cst_103 = arith.constant 1.000000e+00 : f32
    %362 = vector.broadcast %cst_103 : f32 to vector<8x64xf32>
    %363 = arith.addf %362, %361 : vector<8x64xf32>
    %364 = arith.divf %362, %363 : vector<8x64xf32>
    %365 = vector.extract_strided_slice %364 {offsets = [0, 0], sizes = [8, 32], strides = [1, 1]} : vector<8x64xf32> to vector<8x32xf32>
    %366 = vector.extract_strided_slice %364 {offsets = [0, 32], sizes = [8, 32], strides = [1, 1]} : vector<8x64xf32> to vector<8x32xf32>
    %367 = vector.extract_strided_slice %355 {offsets = [0, 64], sizes = [8, 32], strides = [1, 1]} : vector<8x96xf32> to vector<8x32xf32>
    %368 = vector.extract_strided_slice %356 {offsets = [0, 64], sizes = [8, 32], strides = [1, 1]} : vector<8x96xf32> to vector<8x32xf32>
    %369 = vector.broadcast %247 : vector<1x32xf32> to vector<8x32xf32>
    %370 = arith.addf %368, %369 : vector<8x32xf32>
    %371 = arith.mulf %365, %370 : vector<8x32xf32>
    %372 = arith.addf %367, %371 : vector<8x32xf32>
    %373 = math.tanh %372 : vector<8x32xf32>
    %cst_104 = arith.constant 1.000000e+00 : f32
    %374 = vector.broadcast %cst_104 : f32 to vector<8x32xf32>
    %375 = arith.subf %374, %366 : vector<8x32xf32>
    %376 = arith.mulf %375, %373 : vector<8x32xf32>
    %377 = arith.mulf %366, %345 : vector<8x32xf32>
    %378 = arith.addf %376, %377 : vector<8x32xf32>
    %379 = arith.index_cast %c3_i32_98 : i32 to index
    %c0_105 = arith.constant 0 : index
    %c0_106 = arith.constant 0 : index
    %380 = vector.load %arg8[%379, %c0_105, %c0_106] : memref<8x8x32xf32, #tpu.memory_space<vmem>>, vector<1x8x32xf32>
    %381 = vector.shape_cast %380 : vector<1x8x32xf32> to vector<8x32xf32>
    %382 = vector.shape_cast %378 : vector<8x32xf32> to vector<1x8x32xf32>
    tpu.vector_store %arg8[%379, %c0_105, %c0_106], %382 {strides = array<i32>} : memref<8x8x32xf32, #tpu.memory_space<vmem>>, vector<1x8x32xf32>,
    %c4_i32_107 = arith.constant 4 : i32
    %383 = arith.index_cast %c4_i32_107 : i32 to index
    %c0_108 = arith.constant 0 : index
    %c0_109 = arith.constant 0 : index
    %384 = vector.load %arg8[%383, %c0_108, %c0_109] : memref<8x8x32xf32, #tpu.memory_space<vmem>>, vector<1x8x32xf32>
    %385 = vector.shape_cast %384 : vector<1x8x32xf32> to vector<8x32xf32>
    %cst_110 = arith.constant dense<0.000000e+00> : vector<8x96xf32>
    %386 = tpu.matmul %385, %248, %cst_110 {dimension_numbers = #tpu.dot_dimension_numbers<[1], [0], [0], [1], [0, 0, 1, 1], [], []>} : vector<8x32xf32>, vector<32x96xf32>, vector<8x96xf32> -> vector<8x96xf32>
    %387 = vector.broadcast %249 : vector<1x96xf32> to vector<8x96xf32>
    %388 = arith.addf %386, %387 : vector<8x96xf32>
    %cst_111 = arith.constant dense<0.000000e+00> : vector<8x96xf32>
    %389 = tpu.matmul %378, %246, %cst_111 {dimension_numbers = #tpu.dot_dimension_numbers<[1], [0], [0], [1], [0, 0, 1, 1], [], []>} : vector<8x32xf32>, vector<32x96xf32>, vector<8x96xf32> -> vector<8x96xf32>
    %390 = vector.extract_strided_slice %388 {offsets = [0, 0], sizes = [8, 64], strides = [1, 1]} : vector<8x96xf32> to vector<8x64xf32>
    %391 = vector.extract_strided_slice %389 {offsets = [0, 0], sizes = [8, 64], strides = [1, 1]} : vector<8x96xf32> to vector<8x64xf32>
    %392 = arith.addf %390, %391 : vector<8x64xf32>
    %393 = arith.negf %392 : vector<8x64xf32>
    %394 = math.exp %393 : vector<8x64xf32>
    %cst_112 = arith.constant 1.000000e+00 : f32
    %395 = vector.broadcast %cst_112 : f32 to vector<8x64xf32>
    %396 = arith.addf %395, %394 : vector<8x64xf32>
    %397 = arith.divf %395, %396 : vector<8x64xf32>
    %398 = vector.extract_strided_slice %397 {offsets = [0, 0], sizes = [8, 32], strides = [1, 1]} : vector<8x64xf32> to vector<8x32xf32>
    %399 = vector.extract_strided_slice %397 {offsets = [0, 32], sizes = [8, 32], strides = [1, 1]} : vector<8x64xf32> to vector<8x32xf32>
    %400 = vector.extract_strided_slice %388 {offsets = [0, 64], sizes = [8, 32], strides = [1, 1]} : vector<8x96xf32> to vector<8x32xf32>
    %401 = vector.extract_strided_slice %389 {offsets = [0, 64], sizes = [8, 32], strides = [1, 1]} : vector<8x96xf32> to vector<8x32xf32>
    %402 = vector.broadcast %247 : vector<1x32xf32> to vector<8x32xf32>
    %403 = arith.addf %401, %402 : vector<8x32xf32>
    %404 = arith.mulf %398, %403 : vector<8x32xf32>
    %405 = arith.addf %400, %404 : vector<8x32xf32>
    %406 = math.tanh %405 : vector<8x32xf32>
    %cst_113 = arith.constant 1.000000e+00 : f32
    %407 = vector.broadcast %cst_113 : f32 to vector<8x32xf32>
    %408 = arith.subf %407, %399 : vector<8x32xf32>
    %409 = arith.mulf %408, %406 : vector<8x32xf32>
    %410 = arith.mulf %399, %378 : vector<8x32xf32>
    %411 = arith.addf %409, %410 : vector<8x32xf32>
    %412 = arith.index_cast %c4_i32_107 : i32 to index
    %c0_114 = arith.constant 0 : index
    %c0_115 = arith.constant 0 : index
    %413 = vector.load %arg8[%412, %c0_114, %c0_115] : memref<8x8x32xf32, #tpu.memory_space<vmem>>, vector<1x8x32xf32>
    %414 = vector.shape_cast %413 : vector<1x8x32xf32> to vector<8x32xf32>
    %415 = vector.shape_cast %411 : vector<8x32xf32> to vector<1x8x32xf32>
    tpu.vector_store %arg8[%412, %c0_114, %c0_115], %415 {strides = array<i32>} : memref<8x8x32xf32, #tpu.memory_space<vmem>>, vector<1x8x32xf32>,
    %c5_i32_116 = arith.constant 5 : i32
    %416 = arith.index_cast %c5_i32_116 : i32 to index
    %c0_117 = arith.constant 0 : index
    %c0_118 = arith.constant 0 : index
    %417 = vector.load %arg8[%416, %c0_117, %c0_118] : memref<8x8x32xf32, #tpu.memory_space<vmem>>, vector<1x8x32xf32>
    %418 = vector.shape_cast %417 : vector<1x8x32xf32> to vector<8x32xf32>
    %cst_119 = arith.constant dense<0.000000e+00> : vector<8x96xf32>
    %419 = tpu.matmul %418, %248, %cst_119 {dimension_numbers = #tpu.dot_dimension_numbers<[1], [0], [0], [1], [0, 0, 1, 1], [], []>} : vector<8x32xf32>, vector<32x96xf32>, vector<8x96xf32> -> vector<8x96xf32>
    %420 = vector.broadcast %249 : vector<1x96xf32> to vector<8x96xf32>
    %421 = arith.addf %419, %420 : vector<8x96xf32>
    %cst_120 = arith.constant dense<0.000000e+00> : vector<8x96xf32>
    %422 = tpu.matmul %411, %246, %cst_120 {dimension_numbers = #tpu.dot_dimension_numbers<[1], [0], [0], [1], [0, 0, 1, 1], [], []>} : vector<8x32xf32>, vector<32x96xf32>, vector<8x96xf32> -> vector<8x96xf32>
    %423 = vector.extract_strided_slice %421 {offsets = [0, 0], sizes = [8, 64], strides = [1, 1]} : vector<8x96xf32> to vector<8x64xf32>
    %424 = vector.extract_strided_slice %422 {offsets = [0, 0], sizes = [8, 64], strides = [1, 1]} : vector<8x96xf32> to vector<8x64xf32>
    %425 = arith.addf %423, %424 : vector<8x64xf32>
    %426 = arith.negf %425 : vector<8x64xf32>
    %427 = math.exp %426 : vector<8x64xf32>
    %cst_121 = arith.constant 1.000000e+00 : f32
    %428 = vector.broadcast %cst_121 : f32 to vector<8x64xf32>
    %429 = arith.addf %428, %427 : vector<8x64xf32>
    %430 = arith.divf %428, %429 : vector<8x64xf32>
    %431 = vector.extract_strided_slice %430 {offsets = [0, 0], sizes = [8, 32], strides = [1, 1]} : vector<8x64xf32> to vector<8x32xf32>
    %432 = vector.extract_strided_slice %430 {offsets = [0, 32], sizes = [8, 32], strides = [1, 1]} : vector<8x64xf32> to vector<8x32xf32>
    %433 = vector.extract_strided_slice %421 {offsets = [0, 64], sizes = [8, 32], strides = [1, 1]} : vector<8x96xf32> to vector<8x32xf32>
    %434 = vector.extract_strided_slice %422 {offsets = [0, 64], sizes = [8, 32], strides = [1, 1]} : vector<8x96xf32> to vector<8x32xf32>
    %435 = vector.broadcast %247 : vector<1x32xf32> to vector<8x32xf32>
    %436 = arith.addf %434, %435 : vector<8x32xf32>
    %437 = arith.mulf %431, %436 : vector<8x32xf32>
    %438 = arith.addf %433, %437 : vector<8x32xf32>
    %439 = math.tanh %438 : vector<8x32xf32>
    %cst_122 = arith.constant 1.000000e+00 : f32
    %440 = vector.broadcast %cst_122 : f32 to vector<8x32xf32>
    %441 = arith.subf %440, %432 : vector<8x32xf32>
    %442 = arith.mulf %441, %439 : vector<8x32xf32>
    %443 = arith.mulf %432, %411 : vector<8x32xf32>
    %444 = arith.addf %442, %443 : vector<8x32xf32>
    %445 = arith.index_cast %c5_i32_116 : i32 to index
    %c0_123 = arith.constant 0 : index
    %c0_124 = arith.constant 0 : index
    %446 = vector.load %arg8[%445, %c0_123, %c0_124] : memref<8x8x32xf32, #tpu.memory_space<vmem>>, vector<1x8x32xf32>
    %447 = vector.shape_cast %446 : vector<1x8x32xf32> to vector<8x32xf32>
    %448 = vector.shape_cast %444 : vector<8x32xf32> to vector<1x8x32xf32>
    tpu.vector_store %arg8[%445, %c0_123, %c0_124], %448 {strides = array<i32>} : memref<8x8x32xf32, #tpu.memory_space<vmem>>, vector<1x8x32xf32>,
    %c6_i32_125 = arith.constant 6 : i32
    %449 = arith.index_cast %c6_i32_125 : i32 to index
    %c0_126 = arith.constant 0 : index
    %c0_127 = arith.constant 0 : index
    %450 = vector.load %arg8[%449, %c0_126, %c0_127] : memref<8x8x32xf32, #tpu.memory_space<vmem>>, vector<1x8x32xf32>
    %451 = vector.shape_cast %450 : vector<1x8x32xf32> to vector<8x32xf32>
    %cst_128 = arith.constant dense<0.000000e+00> : vector<8x96xf32>
    %452 = tpu.matmul %451, %248, %cst_128 {dimension_numbers = #tpu.dot_dimension_numbers<[1], [0], [0], [1], [0, 0, 1, 1], [], []>} : vector<8x32xf32>, vector<32x96xf32>, vector<8x96xf32> -> vector<8x96xf32>
    %453 = vector.broadcast %249 : vector<1x96xf32> to vector<8x96xf32>
    %454 = arith.addf %452, %453 : vector<8x96xf32>
    %cst_129 = arith.constant dense<0.000000e+00> : vector<8x96xf32>
    %455 = tpu.matmul %444, %246, %cst_129 {dimension_numbers = #tpu.dot_dimension_numbers<[1], [0], [0], [1], [0, 0, 1, 1], [], []>} : vector<8x32xf32>, vector<32x96xf32>, vector<8x96xf32> -> vector<8x96xf32>
    %456 = vector.extract_strided_slice %454 {offsets = [0, 0], sizes = [8, 64], strides = [1, 1]} : vector<8x96xf32> to vector<8x64xf32>
    %457 = vector.extract_strided_slice %455 {offsets = [0, 0], sizes = [8, 64], strides = [1, 1]} : vector<8x96xf32> to vector<8x64xf32>
    %458 = arith.addf %456, %457 : vector<8x64xf32>
    %459 = arith.negf %458 : vector<8x64xf32>
    %460 = math.exp %459 : vector<8x64xf32>
    %cst_130 = arith.constant 1.000000e+00 : f32
    %461 = vector.broadcast %cst_130 : f32 to vector<8x64xf32>
    %462 = arith.addf %461, %460 : vector<8x64xf32>
    %463 = arith.divf %461, %462 : vector<8x64xf32>
    %464 = vector.extract_strided_slice %463 {offsets = [0, 0], sizes = [8, 32], strides = [1, 1]} : vector<8x64xf32> to vector<8x32xf32>
    %465 = vector.extract_strided_slice %463 {offsets = [0, 32], sizes = [8, 32], strides = [1, 1]} : vector<8x64xf32> to vector<8x32xf32>
    %466 = vector.extract_strided_slice %454 {offsets = [0, 64], sizes = [8, 32], strides = [1, 1]} : vector<8x96xf32> to vector<8x32xf32>
    %467 = vector.extract_strided_slice %455 {offsets = [0, 64], sizes = [8, 32], strides = [1, 1]} : vector<8x96xf32> to vector<8x32xf32>
    %468 = vector.broadcast %247 : vector<1x32xf32> to vector<8x32xf32>
    %469 = arith.addf %467, %468 : vector<8x32xf32>
    %470 = arith.mulf %464, %469 : vector<8x32xf32>
    %471 = arith.addf %466, %470 : vector<8x32xf32>
    %472 = math.tanh %471 : vector<8x32xf32>
    %cst_131 = arith.constant 1.000000e+00 : f32
    %473 = vector.broadcast %cst_131 : f32 to vector<8x32xf32>
    %474 = arith.subf %473, %465 : vector<8x32xf32>
    %475 = arith.mulf %474, %472 : vector<8x32xf32>
    %476 = arith.mulf %465, %444 : vector<8x32xf32>
    %477 = arith.addf %475, %476 : vector<8x32xf32>
    %478 = arith.index_cast %c6_i32_125 : i32 to index
    %c0_132 = arith.constant 0 : index
    %c0_133 = arith.constant 0 : index
    %479 = vector.load %arg8[%478, %c0_132, %c0_133] : memref<8x8x32xf32, #tpu.memory_space<vmem>>, vector<1x8x32xf32>
    %480 = vector.shape_cast %479 : vector<1x8x32xf32> to vector<8x32xf32>
    %481 = vector.shape_cast %477 : vector<8x32xf32> to vector<1x8x32xf32>
    tpu.vector_store %arg8[%478, %c0_132, %c0_133], %481 {strides = array<i32>} : memref<8x8x32xf32, #tpu.memory_space<vmem>>, vector<1x8x32xf32>,
    %c7_i32_134 = arith.constant 7 : i32
    %482 = arith.index_cast %c7_i32_134 : i32 to index
    %c0_135 = arith.constant 0 : index
    %c0_136 = arith.constant 0 : index
    %483 = vector.load %arg8[%482, %c0_135, %c0_136] : memref<8x8x32xf32, #tpu.memory_space<vmem>>, vector<1x8x32xf32>
    %484 = vector.shape_cast %483 : vector<1x8x32xf32> to vector<8x32xf32>
    %cst_137 = arith.constant dense<0.000000e+00> : vector<8x96xf32>
    %485 = tpu.matmul %484, %248, %cst_137 {dimension_numbers = #tpu.dot_dimension_numbers<[1], [0], [0], [1], [0, 0, 1, 1], [], []>} : vector<8x32xf32>, vector<32x96xf32>, vector<8x96xf32> -> vector<8x96xf32>
    %486 = vector.broadcast %249 : vector<1x96xf32> to vector<8x96xf32>
    %487 = arith.addf %485, %486 : vector<8x96xf32>
    %cst_138 = arith.constant dense<0.000000e+00> : vector<8x96xf32>
    %488 = tpu.matmul %477, %246, %cst_138 {dimension_numbers = #tpu.dot_dimension_numbers<[1], [0], [0], [1], [0, 0, 1, 1], [], []>} : vector<8x32xf32>, vector<32x96xf32>, vector<8x96xf32> -> vector<8x96xf32>
    %489 = vector.extract_strided_slice %487 {offsets = [0, 0], sizes = [8, 64], strides = [1, 1]} : vector<8x96xf32> to vector<8x64xf32>
    %490 = vector.extract_strided_slice %488 {offsets = [0, 0], sizes = [8, 64], strides = [1, 1]} : vector<8x96xf32> to vector<8x64xf32>
    %491 = arith.addf %489, %490 : vector<8x64xf32>
    %492 = arith.negf %491 : vector<8x64xf32>
    %493 = math.exp %492 : vector<8x64xf32>
    %cst_139 = arith.constant 1.000000e+00 : f32
    %494 = vector.broadcast %cst_139 : f32 to vector<8x64xf32>
    %495 = arith.addf %494, %493 : vector<8x64xf32>
    %496 = arith.divf %494, %495 : vector<8x64xf32>
    %497 = vector.extract_strided_slice %496 {offsets = [0, 0], sizes = [8, 32], strides = [1, 1]} : vector<8x64xf32> to vector<8x32xf32>
    %498 = vector.extract_strided_slice %496 {offsets = [0, 32], sizes = [8, 32], strides = [1, 1]} : vector<8x64xf32> to vector<8x32xf32>
    %499 = vector.extract_strided_slice %487 {offsets = [0, 64], sizes = [8, 32], strides = [1, 1]} : vector<8x96xf32> to vector<8x32xf32>
    %500 = vector.extract_strided_slice %488 {offsets = [0, 64], sizes = [8, 32], strides = [1, 1]} : vector<8x96xf32> to vector<8x32xf32>
    %501 = vector.broadcast %247 : vector<1x32xf32> to vector<8x32xf32>
    %502 = arith.addf %500, %501 : vector<8x32xf32>
    %503 = arith.mulf %497, %502 : vector<8x32xf32>
    %504 = arith.addf %499, %503 : vector<8x32xf32>
    %505 = math.tanh %504 : vector<8x32xf32>
    %cst_140 = arith.constant 1.000000e+00 : f32
    %506 = vector.broadcast %cst_140 : f32 to vector<8x32xf32>
    %507 = arith.subf %506, %498 : vector<8x32xf32>
    %508 = arith.mulf %507, %505 : vector<8x32xf32>
    %509 = arith.mulf %498, %477 : vector<8x32xf32>
    %510 = arith.addf %508, %509 : vector<8x32xf32>
    %511 = arith.index_cast %c7_i32_134 : i32 to index
    %c0_141 = arith.constant 0 : index
    %c0_142 = arith.constant 0 : index
    %512 = vector.load %arg8[%511, %c0_141, %c0_142] : memref<8x8x32xf32, #tpu.memory_space<vmem>>, vector<1x8x32xf32>
    %513 = vector.shape_cast %512 : vector<1x8x32xf32> to vector<8x32xf32>
    %514 = vector.shape_cast %510 : vector<8x32xf32> to vector<1x8x32xf32>
    tpu.vector_store %arg8[%511, %c0_141, %c0_142], %514 {strides = array<i32>} : memref<8x8x32xf32, #tpu.memory_space<vmem>>, vector<1x8x32xf32>,
    %c8_i32_143 = arith.constant 8 : i32
    %c1 = arith.constant 1 : index
    %c0_144 = arith.constant 0 : index
    %c0_145 = arith.constant 0 : index
    %515 = vector.load %arg9[%c1, %c0_144, %c0_145] : memref<2x8x32xf32, #tpu.memory_space<vmem>>, vector<1x8x32xf32>
    %516 = vector.shape_cast %515 : vector<1x8x32xf32> to vector<8x32xf32>
    %517 = vector.shape_cast %510 : vector<8x32xf32> to vector<1x8x32xf32>
    tpu.vector_store %arg9[%c1, %c0_144, %c0_145], %517 {strides = array<i32>} : memref<2x8x32xf32, #tpu.memory_space<vmem>>, vector<1x8x32xf32>,
    return
  }
  func.func @transform_0(%arg0: i32) -> (i32, i32, i32) {
    %c0_i32 = arith.constant 0 : i32
    %c0_i32_0 = arith.constant 0 : i32
    %c0_i32_1 = arith.constant 0 : i32
    %c0_i32_2 = arith.constant 0 : i32
    return %c0_i32, %c0_i32_0, %c0_i32_1 : i32, i32, i32
  }
  func.func @transform_1(%arg0: i32) -> (i32, i32) {
    %c0_i32 = arith.constant 0 : i32
    %c0_i32_0 = arith.constant 0 : i32
    %c0_i32_1 = arith.constant 0 : i32
    return %c0_i32, %c0_i32_0 : i32, i32
  }
  func.func @transform_2(%arg0: i32) -> (i32, i32) {
    %c0_i32 = arith.constant 0 : i32
    %c0_i32_0 = arith.constant 0 : i32
    %c0_i32_1 = arith.constant 0 : i32
    return %c0_i32, %c0_i32_0 : i32, i32
  }
  func.func @transform_3(%arg0: i32) -> (i32, i32) {
    %c0_i32 = arith.constant 0 : i32
    %c0_i32_0 = arith.constant 0 : i32
    %c0_i32_1 = arith.constant 0 : i32
    return %c0_i32, %c0_i32_0 : i32, i32
  }
  func.func @transform_4(%arg0: i32) -> (i32, i32) {
    %c0_i32 = arith.constant 0 : i32
    %c0_i32_0 = arith.constant 0 : i32
    %c0_i32_1 = arith.constant 0 : i32
    return %c0_i32, %c0_i32_0 : i32, i32
  }
  func.func @transform_5(%arg0: i32) -> (i32, i32) {
    %c0_i32 = arith.constant 0 : i32
    %c0_i32_0 = arith.constant 0 : i32
    %c0_i32_1 = arith.constant 0 : i32
    return %c0_i32, %c0_i32_0 : i32, i32
  }
  func.func @transform_6(%arg0: i32) -> (i32, i32) {
    %c0_i32 = arith.constant 0 : i32
    %c0_i32_0 = arith.constant 0 : i32
    %c0_i32_1 = arith.constant 0 : i32
    return %c0_i32, %c0_i32_0 : i32, i32
  }
  func.func @transform_7(%arg0: i32) -> (i32, i32, i32) {
    %c0_i32 = arith.constant 0 : i32
    %c0_i32_0 = arith.constant 0 : i32
    %c0_i32_1 = arith.constant 0 : i32
    %c0_i32_2 = arith.constant 0 : i32
    return %c0_i32, %c0_i32_0, %c0_i32_1 : i32, i32, i32
  }
  func.func @transform_8(%arg0: i32) -> (i32, i32, i32) {
    %c0_i32 = arith.constant 0 : i32
    %c0_i32_0 = arith.constant 0 : i32
    %c0_i32_1 = arith.constant 0 : i32
    %c0_i32_2 = arith.constant 0 : i32
    return %c0_i32, %c0_i32_0, %c0_i32_1 : i32, i32, i32
  }
}

</mosaic_0001>

<llo_original>
// kernel: encoder_rnn_forward.1
$region0: #{encoder_rnn_forward.1}
  #allocation0 [shape = 'u32[]', space=smem, size = 0x4, offset = 0x4, fixed_abs, tag = 'smem constant byte address 0x4 - core index']
  #allocation1 [shape = 'u32[144,128]{1,0:T(1,128)}', space=vmem, size = 0x12000, scoped, tag = 'internal scratch']
  %s0 = inlined_call_operand.vmem [shape: f32[8,8,96], index: 0, kind: input, shape index: {}]
  %s1 = inlined_call_operand.vmem [shape: f32[32,96], index: 1, kind: input, shape index: {}]
  %s2 = inlined_call_operand.vmem [shape: f32[1,32], index: 2, kind: input, shape index: {}]
  %s3 = inlined_call_operand.vmem [shape: f32[32,96], index: 3, kind: input, shape index: {}]
  %s4 = inlined_call_operand.vmem [shape: f32[1,96], index: 4, kind: input, shape index: {}]
  %s5 = inlined_call_operand.vmem [shape: f32[32,96], index: 5, kind: input, shape index: {}]
  %s6 = inlined_call_operand.vmem [shape: f32[1,32], index: 6, kind: input, shape index: {}]
  %s7 = inlined_call_operand.hbm [shape: f32[8,8,32], index: 7, kind: output, shape index: {0}]
  %s8 = inlined_call_operand.hbm [shape: f32[2,8,32], index: 8, kind: output, shape index: {1}]
  %9 = xla_tuple %s7, %s8
  %s10 = sld [smem:[#allocation0]]
  $region46: #{encoder_rnn_forward.1} parent=0
    _
  %s12 = ssub.s32 1, %s10
  %s13 = scalar_select 0, %s12, %s10
  $region1: #{encoder_rnn_forward.1} parent=0
    #allocation2 [shape = 'u8[32768]{0}', space=vmem, size = 0x8000, scoped, tag = 'output window, operand 0, single buffered']
    #allocation3 [shape = 's32[1]{0}', space=sflag, size = 0x4, scoped, tag = 'scoped memory for encoder_rnn_forward.1']
    #allocation4 [shape = 'u8[8192]{0}', space=vmem, size = 0x2000, scoped, tag = 'output window, operand 1, single buffered']
    #allocation5 [shape = 's32[1]{0}', space=sflag, size = 0x4, scoped, tag = 'scoped memory for encoder_rnn_forward.1']
    %14 = vsyncpa [#allocation3], 0
    %15 = vsyncpa [#allocation5], 0
    // Predicated region
    $region2: #{encoder_rnn_forward.1} parent=1 // pred_check
      _
    $region3: #{encoder_rnn_forward.1} parent=1 // pred_check_branch
      %17 = sbr.rel (0) target = $region5
    $region4: #{encoder_rnn_forward.1} parent=1 // pred_region
      _
    $region5: #{encoder_rnn_forward.1} parent=1 // pred_fallthru
      _
    // Predicated region
    $region6: #{encoder_rnn_forward.1} parent=1 // pred_check
      _
    $region7: #{encoder_rnn_forward.1} parent=1 // pred_check_branch
      %19 = sbr.rel (0) target = $region9
    $region8: #{encoder_rnn_forward.1} parent=1 // pred_region
      _
    $region9: #{encoder_rnn_forward.1} parent=1 // pred_fallthru
      _
    // Predicated region
    $region10: #{encoder_rnn_forward.1} parent=1 // pred_check
      _
    $region11: #{encoder_rnn_forward.1} parent=1 // pred_check_branch
      %21 = sbr.rel (0) target = $region13
    $region12: #{encoder_rnn_forward.1} parent=1 // pred_region
      _
    $region13: #{encoder_rnn_forward.1} parent=1 // pred_fallthru
      _
    // Predicated region
    $region14: #{encoder_rnn_forward.1} parent=1 // pred_check
      _
    $region15: #{encoder_rnn_forward.1} parent=1 // pred_check_branch
      %23 = sbr.rel (0) target = $region17
    $region16: #{encoder_rnn_forward.1} parent=1 // pred_region
      _
    $region17: #{encoder_rnn_forward.1} parent=1 // pred_fallthru
      _
    // Predicated region
    $region18: #{encoder_rnn_forward.1} parent=1 // pred_check
      _
    $region19: #{encoder_rnn_forward.1} parent=1 // pred_check_branch
      %25 = sbr.rel (0) target = $region21
    $region20: #{encoder_rnn_forward.1} parent=1 // pred_region
      _
    $region21: #{encoder_rnn_forward.1} parent=1 // pred_fallthru
      _
    // Predicated region
    $region22: #{encoder_rnn_forward.1} parent=1 // pred_check
      _
    $region23: #{encoder_rnn_forward.1} parent=1 // pred_check_branch
      %27 = sbr.rel (0) target = $region25
    $region24: #{encoder_rnn_forward.1} parent=1 // pred_region
      _
    $region25: #{encoder_rnn_forward.1} parent=1 // pred_fallthru
      _
    // Predicated region
    $region26: #{encoder_rnn_forward.1} parent=1 // pred_check
      _
    $region27: #{encoder_rnn_forward.1} parent=1 // pred_check_branch
      %29 = sbr.rel (0) target = $region29
    $region28: #{encoder_rnn_forward.1} parent=1 // pred_region
      _
    $region29: #{encoder_rnn_forward.1} parent=1 // pred_fallthru
      _
    %v30 = vld [vmem:[%s1] sm:$0xff]
    %v31 = vld [vmem:[%s1 + $0x8] sm:$0xff]
    %v32 = vld [vmem:[%s1 + $0x10] sm:$0xff]
    %v33 = vld [vmem:[%s1 + $0x18] sm:$0xff]
    %v34 = vld [vmem:[%s2] sm:$0x1]
    %v35 = vld [vmem:[%s0] sm:$0xff]
    %vm36 = vcmask 261120
    %v38 = vsel %vm36, 0.0, 0
    %40 = vmatprep.subr.mxu0 0.0
    %41 = vmatpush1.msra.mxu0 %v30
    %42 = vmatprep.subr.mxu0 0.0
    %43 = vmatpush1.msra.mxu0 %v31
    %44 = vmatprep.subr.mxu0 0.0
    %45 = vmatpush1.msra.mxu0 %v32
    %46 = vmatprep.subr.mxu0 0.0
    %47 = vmatpush1.msra.mxu0 %v33
    %48 = vmatprep.subr.mxu0 0.0
    %49 = vmatpush1.msra.mxu0 0.0
    %50 = vmatprep.subr.mxu0 0.0
    %51 = vmatpush1.msra.mxu0 0.0
    %52 = vmatprep.subr.mxu0 0.0
    %53 = vmatpush1.msra.mxu0 0.0
    %54 = vmatprep.subr.mxu0 0.0
    %55 = vmatpush1.msra.mxu0 0.0
    %56 = vmatprep.subr.mxu0 0.0
    %57 = vmatpush1.msra.mxu0 0.0
    %58 = vmatprep.subr.mxu0 0.0
    %59 = vmatpush1.msra.mxu0 0.0
    %60 = vmatprep.subr.mxu0 0.0
    %61 = vmatpush1.msra.mxu0 0.0
    %62 = vmatprep.subr.mxu0 0.0
    %63 = vmatpush1.msra.mxu0 0.0
    %64 = vmatprep.subr.mxu0 0.0
    %65 = vmatpush1.msra.mxu0 0.0
    %66 = vmatprep.subr.mxu0 0.0
    %67 = vmatpush1.msra.mxu0 0.0
    %68 = vmatprep.subr.mxu0 0.0
    %69 = vmatpush1.msra.mxu0 0.0
    %70 = vmatprep.subr.mxu0 0.0
    %71 = vmatpush1.msra.mxu0 0.0
    %72 = vmatprep.subr.mxu0 0.0
    %73 = vmatpush1.msra.mxu0 0.0
    %74 = vmatprep.subr.mxu0 0.0
    %75 = vmatpush1.msra.mxu0 0.0
    %76 = vmatprep.subr.mxu0 0.0
    %77 = vmatpush1.msra.mxu0 0.0
    %78 = vmatprep.subr.mxu0 0.0
    %79 = vmatpush1.msra.mxu0 0.0
    %80 = vmatprep.subr.mxu0 0.0
    %81 = vmatpush1.msra.mxu0 0.0
    %82 = vmatprep.subr.mxu0 0.0
    %83 = vmatpush1.msra.mxu0 0.0
    %84 = vmatprep.subr.mxu0 0.0
    %85 = vmatpush1.msra.mxu0 0.0
    %86 = vmatprep.subr.mxu0 0.0
    %87 = vmatpush1.msra.mxu0 0.0
    %88 = vmatprep.subr.mxu0 0.0
    %89 = vmatpush1.msra.mxu0 0.0
    %90 = vmatprep.subr.mxu0 0.0
    %91 = vmatpush1.msra.mxu0 0.0
    %92 = vmatprep.subr.mxu0 0.0
    %93 = vmatpush1.msra.mxu0 0.0
    %94 = vmatprep.subr.mxu0 0.0
    %95 = vmatpush1.msra.mxu0 0.0
    %96 = vmatprep.subr.mxu0 0.0
    %97 = vmatpush1.msra.mxu0 0.0
    %98 = vmatprep.subr.mxu0 0.0
    %99 = vmatpush1.msra.mxu0 0.0
    %100 = vmatprep.subr.mxu0 0.0
    %101 = vmatpush1.msra.mxu0 0.0
    %102 = vmatprep.subr.mxu0 0.0
    %103 = vmatpush1.msra.mxu0 0.0
    %104 = vmatprep.mubr.f32.mxu0 0.0
    %105 = vmatmul.mubr.f32.gmra.mrb[0].mxu0 %v38
    %v106 = vpop.f32.mrb[0].mxu0
    %v107 = vadd.f32 0.0, %v106
    %v108 = vpop.f32.mrb[0].mxu0
    %109 = vdwg.mxu0
    %v110 = vadd.f32 %v35, %v107
    %v111 = vxor.u32 %v110, 2147483648
    %v112 = vmul.f32 %v111, 1.442695
    %v113 = vpow.pop %v112
    %v114 = vadd.f32 %v113, 1.0
    %v115 = vrcp.pop %v114
    %v116 = vmul.f32 1.0, %v115
    %v118 = vlaneseq
    %v119 = vshrl.u32 %v118, 7
    %v120 = vsub.s32 0, %v119
    %v121 = vrot.slane %v34, %v120
    %122 = vrot.lane.b32.xlu0 %v121, 64
    %v123 = vpop.permute.xlu0 %122
    %v125 = vadd.f32 %v107, %v123
    %127 = vrot.lane.b32.xlu0 %v125, 64
    %v128 = vpop.permute.xlu0 %127
    %v130 = vmul.f32 %v116, %v128
    %132 = vrot.lane.b32.xlu0 %v130, 64
    %v133 = vpop.permute.xlu0 %132
    %v135 = vadd.f32 %v35, %v133
    %v136 = vtanh.pop %v135
    %v137 = vsub.f32 1.0, %v116
    %139 = vrot.lane.b32.xlu0 %v136, 96
    %v140 = vpop.permute.xlu0 %139
    %v142 = vmul.f32 %v137, %v140
    %v143 = vmul.f32 %v116, 0.0
    %v144 = vadd.f32 %v142, %v143
    %146 = vrot.lane.b32.xlu0 %v144, 96
    %v147 = vpop.permute.xlu0 %146
    %149 = vst.msk [vmem:[#allocation2] sm:$0xff] %vm36, %v147
    %s150 = scalar_lea.vmem %s0, 8
    %v151 = vld [vmem:[%s150] sm:$0xff]
    %v152 = vsel %vm36, %v147, 0
    %154 = vmatprep.subr.mxu0 0.0
    %155 = vmatpush1.msra.mxu0 %v30
    %156 = vmatprep.subr.mxu0 0.0
    %157 = vmatpush1.msra.mxu0 %v31
    %158 = vmatprep.subr.mxu0 0.0
    %159 = vmatpush1.msra.mxu0 %v32
    %160 = vmatprep.subr.mxu0 0.0
    %161 = vmatpush1.msra.mxu0 %v33
    %162 = vmatprep.subr.mxu0 0.0
    %163 = vmatpush1.msra.mxu0 0.0
    %164 = vmatprep.subr.mxu0 0.0
    %165 = vmatpush1.msra.mxu0 0.0
    %166 = vmatprep.subr.mxu0 0.0
    %167 = vmatpush1.msra.mxu0 0.0
    %168 = vmatprep.subr.mxu0 0.0
    %169 = vmatpush1.msra.mxu0 0.0
    %170 = vmatprep.subr.mxu0 0.0
    %171 = vmatpush1.msra.mxu0 0.0
    %172 = vmatprep.subr.mxu0 0.0
    %173 = vmatpush1.msra.mxu0 0.0
    %174 = vmatprep.subr.mxu0 0.0
    %175 = vmatpush1.msra.mxu0 0.0
    %176 = vmatprep.subr.mxu0 0.0
    %177 = vmatpush1.msra.mxu0 0.0
    %178 = vmatprep.subr.mxu0 0.0
    %179 = vmatpush1.msra.mxu0 0.0
    %180 = vmatprep.subr.mxu0 0.0
    %181 = vmatpush1.msra.mxu0 0.0
    %182 = vmatprep.subr.mxu0 0.0
    %183 = vmatpush1.msra.mxu0 0.0
    %184 = vmatprep.subr.mxu0 0.0
    %185 = vmatpush1.msra.mxu0 0.0
    %186 = vmatprep.subr.mxu0 0.0
    %187 = vmatpush1.msra.mxu0 0.0
    %188 = vmatprep.subr.mxu0 0.0
    %189 = vmatpush1.msra.mxu0 0.0
    %190 = vmatprep.subr.mxu0 0.0
    %191 = vmatpush1.msra.mxu0 0.0
    %192 = vmatprep.subr.mxu0 0.0
    %193 = vmatpush1.msra.mxu0 0.0
    %194 = vmatprep.subr.mxu0 0.0
    %195 = vmatpush1.msra.mxu0 0.0
    %196 = vmatprep.subr.mxu0 0.0
    %197 = vmatpush1.msra.mxu0 0.0
    %198 = vmatprep.subr.mxu0 0.0
    %199 = vmatpush1.msra.mxu0 0.0
    %200 = vmatprep.subr.mxu0 0.0
    %201 = vmatpush1.msra.mxu0 0.0
    %202 = vmatprep.subr.mxu0 0.0
    %203 = vmatpush1.msra.mxu0 0.0
    %204 = vmatprep.subr.mxu0 0.0
    %205 = vmatpush1.msra.mxu0 0.0
    %206 = vmatprep.subr.mxu0 0.0
    %207 = vmatpush1.msra.mxu0 0.0
    %208 = vmatprep.subr.mxu0 0.0
    %209 = vmatpush1.msra.mxu0 0.0
    %210 = vmatprep.subr.mxu0 0.0
    %211 = vmatpush1.msra.mxu0 0.0
    %212 = vmatprep.subr.mxu0 0.0
    %213 = vmatpush1.msra.mxu0 0.0
    %214 = vmatprep.subr.mxu0 0.0
    %215 = vmatpush1.msra.mxu0 0.0
    %216 = vmatprep.subr.mxu0 0.0
    %217 = vmatpush1.msra.mxu0 0.0
    %218 = vmatprep.mubr.f32.mxu0 0.0
    %219 = vmatmul.mubr.f32.gmra.mrb[0].mxu0 %v152
    %v220 = vpop.f32.mrb[0].mxu0
    %v221 = vadd.f32 0.0, %v220
    %v222 = vpop.f32.mrb[0].mxu0
    %223 = vdwg.mxu0
    %v224 = vadd.f32 %v151, %v221
    %v225 = vxor.u32 %v224, 2147483648
    %v226 = vmul.f32 %v225, 1.442695
    %v227 = vpow.pop %v226
    %v228 = vadd.f32 %v227, 1.0
    %v229 = vrcp.pop %v228
    %v230 = vmul.f32 1.0, %v229
    %v231 = vadd.f32 %v221, %v123
    %233 = vrot.lane.b32.xlu0 %v231, 64
    %v234 = vpop.permute.xlu0 %233
    %v236 = vmul.f32 %v230, %v234
    %238 = vrot.lane.b32.xlu0 %v236, 64
    %v239 = vpop.permute.xlu0 %238
    %v241 = vadd.f32 %v151, %v239
    %v242 = vtanh.pop %v241
    %v243 = vsub.f32 1.0, %v230
    %245 = vrot.lane.b32.xlu0 %v242, 96
    %v246 = vpop.permute.xlu0 %245
    %v248 = vmul.f32 %v243, %v246
    %v249 = vmul.f32 %v230, %v144
    %v250 = vadd.f32 %v248, %v249
    %252 = vrot.lane.b32.xlu0 %v250, 96
    %v253 = vpop.permute.xlu0 %252
    %s255 = scalar_lea.vmem [#allocation2], 8
    %256 = vst.msk [vmem:[%s255] sm:$0xff] %vm36, %v253
    %s257 = scalar_lea.vmem %s0, 16
    %v258 = vld [vmem:[%s257] sm:$0xff]
    %v259 = vsel %vm36, %v253, 0
    %261 = vmatprep.subr.mxu0 0.0
    %262 = vmatpush1.msra.mxu0 %v30
    %263 = vmatprep.subr.mxu0 0.0
    %264 = vmatpush1.msra.mxu0 %v31
    %265 = vmatprep.subr.mxu0 0.0
    %266 = vmatpush1.msra.mxu0 %v32
    %267 = vmatprep.subr.mxu0 0.0
    %268 = vmatpush1.msra.mxu0 %v33
    %269 = vmatprep.subr.mxu0 0.0
    %270 = vmatpush1.msra.mxu0 0.0
    %271 = vmatprep.subr.mxu0 0.0
    %272 = vmatpush1.msra.mxu0 0.0
    %273 = vmatprep.subr.mxu0 0.0
    %274 = vmatpush1.msra.mxu0 0.0
    %275 = vmatprep.subr.mxu0 0.0
    %276 = vmatpush1.msra.mxu0 0.0
    %277 = vmatprep.subr.mxu0 0.0
    %278 = vmatpush1.msra.mxu0 0.0
    %279 = vmatprep.subr.mxu0 0.0
    %280 = vmatpush1.msra.mxu0 0.0
    %281 = vmatprep.subr.mxu0 0.0
    %282 = vmatpush1.msra.mxu0 0.0
    %283 = vmatprep.subr.mxu0 0.0
    %284 = vmatpush1.msra.mxu0 0.0
    %285 = vmatprep.subr.mxu0 0.0
    %286 = vmatpush1.msra.mxu0 0.0
    %287 = vmatprep.subr.mxu0 0.0
    %288 = vmatpush1.msra.mxu0 0.0
    %289 = vmatprep.subr.mxu0 0.0
    %290 = vmatpush1.msra.mxu0 0.0
    %291 = vmatprep.subr.mxu0 0.0
    %292 = vmatpush1.msra.mxu0 0.0
    %293 = vmatprep.subr.mxu0 0.0
    %294 = vmatpush1.msra.mxu0 0.0
    %295 = vmatprep.subr.mxu0 0.0
    %296 = vmatpush1.msra.mxu0 0.0
    %297 = vmatprep.subr.mxu0 0.0
    %298 = vmatpush1.msra.mxu0 0.0
    %299 = vmatprep.subr.mxu0 0.0
    %300 = vmatpush1.msra.mxu0 0.0
    %301 = vmatprep.subr.mxu0 0.0
    %302 = vmatpush1.msra.mxu0 0.0
    %303 = vmatprep.subr.mxu0 0.0
    %304 = vmatpush1.msra.mxu0 0.0
    %305 = vmatprep.subr.mxu0 0.0
    %306 = vmatpush1.msra.mxu0 0.0
    %307 = vmatprep.subr.mxu0 0.0
    %308 = vmatpush1.msra.mxu0 0.0
    %309 = vmatprep.subr.mxu0 0.0
    %310 = vmatpush1.msra.mxu0 0.0
    %311 = vmatprep.subr.mxu0 0.0
    %312 = vmatpush1.msra.mxu0 0.0
    %313 = vmatprep.subr.mxu0 0.0
    %314 = vmatpush1.msra.mxu0 0.0
    %315 = vmatprep.subr.mxu0 0.0
    %316 = vmatpush1.msra.mxu0 0.0
    %317 = vmatprep.subr.mxu0 0.0
    %318 = vmatpush1.msra.mxu0 0.0
    %319 = vmatprep.subr.mxu0 0.0
    %320 = vmatpush1.msra.mxu0 0.0
    %321 = vmatprep.subr.mxu0 0.0
    %322 = vmatpush1.msra.mxu0 0.0
    %323 = vmatprep.subr.mxu0 0.0
    %324 = vmatpush1.msra.mxu0 0.0
    %325 = vmatprep.mubr.f32.mxu0 0.0
    %326 = vmatmul.mubr.f32.gmra.mrb[0].mxu0 %v259
    %v327 = vpop.f32.mrb[0].mxu0
    %v328 = vadd.f32 0.0, %v327
    %v329 = vpop.f32.mrb[0].mxu0
    %330 = vdwg.mxu0
    %v331 = vadd.f32 %v258, %v328
    %v332 = vxor.u32 %v331, 2147483648
    %v333 = vmul.f32 %v332, 1.442695
    %v334 = vpow.pop %v333
    %v335 = vadd.f32 %v334, 1.0
    %v336 = vrcp.pop %v335
    %v337 = vmul.f32 1.0, %v336
    %v338 = vadd.f32 %v328, %v123
    %340 = vrot.lane.b32.xlu0 %v338, 64
    %v341 = vpop.permute.xlu0 %340
    %v343 = vmul.f32 %v337, %v341
    %345 = vrot.lane.b32.xlu0 %v343, 64
    %v346 = vpop.permute.xlu0 %345
    %v348 = vadd.f32 %v258, %v346
    %v349 = vtanh.pop %v348
    %v350 = vsub.f32 1.0, %v337
    %352 = vrot.lane.b32.xlu0 %v349, 96
    %v353 = vpop.permute.xlu0 %352
    %v355 = vmul.f32 %v350, %v353
    %v356 = vmul.f32 %v337, %v250
    %v357 = vadd.f32 %v355, %v356
    %359 = vrot.lane.b32.xlu0 %v357, 96
    %v360 = vpop.permute.xlu0 %359
    %s362 = scalar_lea.vmem [#allocation2], 16
    %363 = vst.msk [vmem:[%s362] sm:$0xff] %vm36, %v360
    %s364 = scalar_lea.vmem %s0, 24
    %v365 = vld [vmem:[%s364] sm:$0xff]
    %v366 = vsel %vm36, %v360, 0
    %368 = vmatprep.subr.mxu0 0.0
    %369 = vmatpush1.msra.mxu0 %v30
    %370 = vmatprep.subr.mxu0 0.0
    %371 = vmatpush1.msra.mxu0 %v31
    %372 = vmatprep.subr.mxu0 0.0
    %373 = vmatpush1.msra.mxu0 %v32
    %374 = vmatprep.subr.mxu0 0.0
    %375 = vmatpush1.msra.mxu0 %v33
    %376 = vmatprep.subr.mxu0 0.0
    %377 = vmatpush1.msra.mxu0 0.0
    %378 = vmatprep.subr.mxu0 0.0
    %379 = vmatpush1.msra.mxu0 0.0
    %380 = vmatprep.subr.mxu0 0.0
    %381 = vmatpush1.msra.mxu0 0.0
    %382 = vmatprep.subr.mxu0 0.0
    %383 = vmatpush1.msra.mxu0 0.0
    %384 = vmatprep.subr.mxu0 0.0
    %385 = vmatpush1.msra.mxu0 0.0
    %386 = vmatprep.subr.mxu0 0.0
    %387 = vmatpush1.msra.mxu0 0.0
    %388 = vmatprep.subr.mxu0 0.0
    %389 = vmatpush1.msra.mxu0 0.0
    %390 = vmatprep.subr.mxu0 0.0
    %391 = vmatpush1.msra.mxu0 0.0
    %392 = vmatprep.subr.mxu0 0.0
    %393 = vmatpush1.msra.mxu0 0.0
    %394 = vmatprep.subr.mxu0 0.0
    %395 = vmatpush1.msra.mxu0 0.0
    %396 = vmatprep.subr.mxu0 0.0
    %397 = vmatpush1.msra.mxu0 0.0
    %398 = vmatprep.subr.mxu0 0.0
    %399 = vmatpush1.msra.mxu0 0.0
    %400 = vmatprep.subr.mxu0 0.0
    %401 = vmatpush1.msra.mxu0 0.0
    %402 = vmatprep.subr.mxu0 0.0
    %403 = vmatpush1.msra.mxu0 0.0
    %404 = vmatprep.subr.mxu0 0.0
    %405 = vmatpush1.msra.mxu0 0.0
    %406 = vmatprep.subr.mxu0 0.0
    %407 = vmatpush1.msra.mxu0 0.0
    %408 = vmatprep.subr.mxu0 0.0
    %409 = vmatpush1.msra.mxu0 0.0
    %410 = vmatprep.subr.mxu0 0.0
    %411 = vmatpush1.msra.mxu0 0.0
    %412 = vmatprep.subr.mxu0 0.0
    %413 = vmatpush1.msra.mxu0 0.0
    %414 = vmatprep.subr.mxu0 0.0
    %415 = vmatpush1.msra.mxu0 0.0
    %416 = vmatprep.subr.mxu0 0.0
    %417 = vmatpush1.msra.mxu0 0.0
    %418 = vmatprep.subr.mxu0 0.0
    %419 = vmatpush1.msra.mxu0 0.0
    %420 = vmatprep.subr.mxu0 0.0
    %421 = vmatpush1.msra.mxu0 0.0
    %422 = vmatprep.subr.mxu0 0.0
    %423 = vmatpush1.msra.mxu0 0.0
    %424 = vmatprep.subr.mxu0 0.0
    %425 = vmatpush1.msra.mxu0 0.0
    %426 = vmatprep.subr.mxu0 0.0
    %427 = vmatpush1.msra.mxu0 0.0
    %428 = vmatprep.subr.mxu0 0.0
    %429 = vmatpush1.msra.mxu0 0.0
    %430 = vmatprep.subr.mxu0 0.0
    %431 = vmatpush1.msra.mxu0 0.0
    %432 = vmatprep.mubr.f32.mxu0 0.0
    %433 = vmatmul.mubr.f32.gmra.mrb[0].mxu0 %v366
    %v434 = vpop.f32.mrb[0].mxu0
    %v435 = vadd.f32 0.0, %v434
    %v436 = vpop.f32.mrb[0].mxu0
    %437 = vdwg.mxu0
    %v438 = vadd.f32 %v365, %v435
    %v439 = vxor.u32 %v438, 2147483648
    %v440 = vmul.f32 %v439, 1.442695
    %v441 = vpow.pop %v440
    %v442 = vadd.f32 %v441, 1.0
    %v443 = vrcp.pop %v442
    %v444 = vmul.f32 1.0, %v443
    %v445 = vadd.f32 %v435, %v123
    %447 = vrot.lane.b32.xlu0 %v445, 64
    %v448 = vpop.permute.xlu0 %447
    %v450 = vmul.f32 %v444, %v448
    %452 = vrot.lane.b32.xlu0 %v450, 64
    %v453 = vpop.permute.xlu0 %452
    %v455 = vadd.f32 %v365, %v453
    %v456 = vtanh.pop %v455
    %v457 = vsub.f32 1.0, %v444
    %459 = vrot.lane.b32.xlu0 %v456, 96
    %v460 = vpop.permute.xlu0 %459
    %v462 = vmul.f32 %v457, %v460
    %v463 = vmul.f32 %v444, %v357
    %v464 = vadd.f32 %v462, %v463
    %466 = vrot.lane.b32.xlu0 %v464, 96
    %v467 = vpop.permute.xlu0 %466
    %s469 = scalar_lea.vmem [#allocation2], 24
    %470 = vst.msk [vmem:[%s469] sm:$0xff] %vm36, %v467
    %s471 = scalar_lea.vmem %s0, 32
    %v472 = vld [vmem:[%s471] sm:$0xff]
    %v473 = vsel %vm36, %v467, 0
    %475 = vmatprep.subr.mxu0 0.0
    %476 = vmatpush1.msra.mxu0 %v30
    %477 = vmatprep.subr.mxu0 0.0
    %478 = vmatpush1.msra.mxu0 %v31
    %479 = vmatprep.subr.mxu0 0.0
    %480 = vmatpush1.msra.mxu0 %v32
    %481 = vmatprep.subr.mxu0 0.0
    %482 = vmatpush1.msra.mxu0 %v33
    %483 = vmatprep.subr.mxu0 0.0
    %484 = vmatpush1.msra.mxu0 0.0
    %485 = vmatprep.subr.mxu0 0.0
    %486 = vmatpush1.msra.mxu0 0.0
    %487 = vmatprep.subr.mxu0 0.0
    %488 = vmatpush1.msra.mxu0 0.0
    %489 = vmatprep.subr.mxu0 0.0
    %490 = vmatpush1.msra.mxu0 0.0
    %491 = vmatprep.subr.mxu0 0.0
    %492 = vmatpush1.msra.mxu0 0.0
    %493 = vmatprep.subr.mxu0 0.0
    %494 = vmatpush1.msra.mxu0 0.0
    %495 = vmatprep.subr.mxu0 0.0
    %496 = vmatpush1.msra.mxu0 0.0
    %497 = vmatprep.subr.mxu0 0.0
    %498 = vmatpush1.msra.mxu0 0.0
    %499 = vmatprep.subr.mxu0 0.0
    %500 = vmatpush1.msra.mxu0 0.0
    %501 = vmatprep.subr.mxu0 0.0
    %502 = vmatpush1.msra.mxu0 0.0
    %503 = vmatprep.subr.mxu0 0.0
    %504 = vmatpush1.msra.mxu0 0.0
    %505 = vmatprep.subr.mxu0 0.0
    %506 = vmatpush1.msra.mxu0 0.0
    %507 = vmatprep.subr.mxu0 0.0
    %508 = vmatpush1.msra.mxu0 0.0
    %509 = vmatprep.subr.mxu0 0.0
    %510 = vmatpush1.msra.mxu0 0.0
    %511 = vmatprep.subr.mxu0 0.0
    %512 = vmatpush1.msra.mxu0 0.0
    %513 = vmatprep.subr.mxu0 0.0
    %514 = vmatpush1.msra.mxu0 0.0
    %515 = vmatprep.subr.mxu0 0.0
    %516 = vmatpush1.msra.mxu0 0.0
    %517 = vmatprep.subr.mxu0 0.0
    %518 = vmatpush1.msra.mxu0 0.0
    %519 = vmatprep.subr.mxu0 0.0
    %520 = vmatpush1.msra.mxu0 0.0
    %521 = vmatprep.subr.mxu0 0.0
    %522 = vmatpush1.msra.mxu0 0.0
    %523 = vmatprep.subr.mxu0 0.0
    %524 = vmatpush1.msra.mxu0 0.0
    %525 = vmatprep.subr.mxu0 0.0
    %526 = vmatpush1.msra.mxu0 0.0
    %527 = vmatprep.subr.mxu0 0.0
    %528 = vmatpush1.msra.mxu0 0.0
    %529 = vmatprep.subr.mxu0 0.0
    %530 = vmatpush1.msra.mxu0 0.0
    %531 = vmatprep.subr.mxu0 0.0
    %532 = vmatpush1.msra.mxu0 0.0
    %533 = vmatprep.subr.mxu0 0.0
    %534 = vmatpush1.msra.mxu0 0.0
    %535 = vmatprep.subr.mxu0 0.0
    %536 = vmatpush1.msra.mxu0 0.0
    %537 = vmatprep.subr.mxu0 0.0
    %538 = vmatpush1.msra.mxu0 0.0
    %539 = vmatprep.mubr.f32.mxu0 0.0
    %540 = vmatmul.mubr.f32.gmra.mrb[0].mxu0 %v473
    %v541 = vpop.f32.mrb[0].mxu0
    %v542 = vadd.f32 0.0, %v541
    %v543 = vpop.f32.mrb[0].mxu0
    %544 = vdwg.mxu0
    %v545 = vadd.f32 %v472, %v542
    %v546 = vxor.u32 %v545, 2147483648
    %v547 = vmul.f32 %v546, 1.442695
    %v548 = vpow.pop %v547
    %v549 = vadd.f32 %v548, 1.0
    %v550 = vrcp.pop %v549
    %v551 = vmul.f32 1.0, %v550
    %v552 = vadd.f32 %v542, %v123
    %554 = vrot.lane.b32.xlu0 %v552, 64
    %v555 = vpop.permute.xlu0 %554
    %v557 = vmul.f32 %v551, %v555
    %559 = vrot.lane.b32.xlu0 %v557, 64
    %v560 = vpop.permute.xlu0 %559
    %v562 = vadd.f32 %v472, %v560
    %v563 = vtanh.pop %v562
    %v564 = vsub.f32 1.0, %v551
    %566 = vrot.lane.b32.xlu0 %v563, 96
    %v567 = vpop.permute.xlu0 %566
    %v569 = vmul.f32 %v564, %v567
    %v570 = vmul.f32 %v551, %v464
    %v571 = vadd.f32 %v569, %v570
    %573 = vrot.lane.b32.xlu0 %v571, 96
    %v574 = vpop.permute.xlu0 %573
    %s576 = scalar_lea.vmem [#allocation2], 32
    %577 = vst.msk [vmem:[%s576] sm:$0xff] %vm36, %v574
    %s578 = scalar_lea.vmem %s0, 40
    %v579 = vld [vmem:[%s578] sm:$0xff]
    %v580 = vsel %vm36, %v574, 0
    %582 = vmatprep.subr.mxu0 0.0
    %583 = vmatpush1.msra.mxu0 %v30
    %584 = vmatprep.subr.mxu0 0.0
    %585 = vmatpush1.msra.mxu0 %v31
    %586 = vmatprep.subr.mxu0 0.0
    %587 = vmatpush1.msra.mxu0 %v32
    %588 = vmatprep.subr.mxu0 0.0
    %589 = vmatpush1.msra.mxu0 %v33
    %590 = vmatprep.subr.mxu0 0.0
    %591 = vmatpush1.msra.mxu0 0.0
    %592 = vmatprep.subr.mxu0 0.0
    %593 = vmatpush1.msra.mxu0 0.0
    %594 = vmatprep.subr.mxu0 0.0
    %595 = vmatpush1.msra.mxu0 0.0
    %596 = vmatprep.subr.mxu0 0.0
    %597 = vmatpush1.msra.mxu0 0.0
    %598 = vmatprep.subr.mxu0 0.0
    %599 = vmatpush1.msra.mxu0 0.0
    %600 = vmatprep.subr.mxu0 0.0
    %601 = vmatpush1.msra.mxu0 0.0
    %602 = vmatprep.subr.mxu0 0.0
    %603 = vmatpush1.msra.mxu0 0.0
    %604 = vmatprep.subr.mxu0 0.0
    %605 = vmatpush1.msra.mxu0 0.0
    %606 = vmatprep.subr.mxu0 0.0
    %607 = vmatpush1.msra.mxu0 0.0
    %608 = vmatprep.subr.mxu0 0.0
    %609 = vmatpush1.msra.mxu0 0.0
    %610 = vmatprep.subr.mxu0 0.0
    %611 = vmatpush1.msra.mxu0 0.0
    %612 = vmatprep.subr.mxu0 0.0
    %613 = vmatpush1.msra.mxu0 0.0
    %614 = vmatprep.subr.mxu0 0.0
    %615 = vmatpush1.msra.mxu0 0.0
    %616 = vmatprep.subr.mxu0 0.0
    %617 = vmatpush1.msra.mxu0 0.0
    %618 = vmatprep.subr.mxu0 0.0
    %619 = vmatpush1.msra.mxu0 0.0
    %620 = vmatprep.subr.mxu0 0.0
    %621 = vmatpush1.msra.mxu0 0.0
    %622 = vmatprep.subr.mxu0 0.0
    %623 = vmatpush1.msra.mxu0 0.0
    %624 = vmatprep.subr.mxu0 0.0
    %625 = vmatpush1.msra.mxu0 0.0
    %626 = vmatprep.subr.mxu0 0.0
    %627 = vmatpush1.msra.mxu0 0.0
    %628 = vmatprep.subr.mxu0 0.0
    %629 = vmatpush1.msra.mxu0 0.0
    %630 = vmatprep.subr.mxu0 0.0
    %631 = vmatpush1.msra.mxu0 0.0
    %632 = vmatprep.subr.mxu0 0.0
    %633 = vmatpush1.msra.mxu0 0.0
    %634 = vmatprep.subr.mxu0 0.0
    %635 = vmatpush1.msra.mxu0 0.0
    %636 = vmatprep.subr.mxu0 0.0
    %637 = vmatpush1.msra.mxu0 0.0
    %638 = vmatprep.subr.mxu0 0.0
    %639 = vmatpush1.msra.mxu0 0.0
    %640 = vmatprep.subr.mxu0 0.0
    %641 = vmatpush1.msra.mxu0 0.0
    %642 = vmatprep.subr.mxu0 0.0
    %643 = vmatpush1.msra.mxu0 0.0
    %644 = vmatprep.subr.mxu0 0.0
    %645 = vmatpush1.msra.mxu0 0.0
    %646 = vmatprep.mubr.f32.mxu0 0.0
    %647 = vmatmul.mubr.f32.gmra.mrb[0].mxu0 %v580
    %v648 = vpop.f32.mrb[0].mxu0
    %v649 = vadd.f32 0.0, %v648
    %v650 = vpop.f32.mrb[0].mxu0
    %651 = vdwg.mxu0
    %v652 = vadd.f32 %v579, %v649
    %v653 = vxor.u32 %v652, 2147483648
    %v654 = vmul.f32 %v653, 1.442695
    %v655 = vpow.pop %v654
    %v656 = vadd.f32 %v655, 1.0
    %v657 = vrcp.pop %v656
    %v658 = vmul.f32 1.0, %v657
    %v659 = vadd.f32 %v649, %v123
    %661 = vrot.lane.b32.xlu0 %v659, 64
    %v662 = vpop.permute.xlu0 %661
    %v664 = vmul.f32 %v658, %v662
    %666 = vrot.lane.b32.xlu0 %v664, 64
    %v667 = vpop.permute.xlu0 %666
    %v669 = vadd.f32 %v579, %v667
    %v670 = vtanh.pop %v669
    %v671 = vsub.f32 1.0, %v658
    %673 = vrot.lane.b32.xlu0 %v670, 96
    %v674 = vpop.permute.xlu0 %673
    %v676 = vmul.f32 %v671, %v674
    %v677 = vmul.f32 %v658, %v571
    %v678 = vadd.f32 %v676, %v677
    %680 = vrot.lane.b32.xlu0 %v678, 96
    %v681 = vpop.permute.xlu0 %680
    %s683 = scalar_lea.vmem [#allocation2], 40
    %684 = vst.msk [vmem:[%s683] sm:$0xff] %vm36, %v681
    %s685 = scalar_lea.vmem %s0, 48
    %v686 = vld [vmem:[%s685] sm:$0xff]
    %v687 = vsel %vm36, %v681, 0
    %689 = vmatprep.subr.mxu0 0.0
    %690 = vmatpush1.msra.mxu0 %v30
    %691 = vmatprep.subr.mxu0 0.0
    %692 = vmatpush1.msra.mxu0 %v31
    %693 = vmatprep.subr.mxu0 0.0
    %694 = vmatpush1.msra.mxu0 %v32
    %695 = vmatprep.subr.mxu0 0.0
    %696 = vmatpush1.msra.mxu0 %v33
    %697 = vmatprep.subr.mxu0 0.0
    %698 = vmatpush1.msra.mxu0 0.0
    %699 = vmatprep.subr.mxu0 0.0
    %700 = vmatpush1.msra.mxu0 0.0
    %701 = vmatprep.subr.mxu0 0.0
    %702 = vmatpush1.msra.mxu0 0.0
    %703 = vmatprep.subr.mxu0 0.0
    %704 = vmatpush1.msra.mxu0 0.0
    %705 = vmatprep.subr.mxu0 0.0
    %706 = vmatpush1.msra.mxu0 0.0
    %707 = vmatprep.subr.mxu0 0.0
    %708 = vmatpush1.msra.mxu0 0.0
    %709 = vmatprep.subr.mxu0 0.0
    %710 = vmatpush1.msra.mxu0 0.0
    %711 = vmatprep.subr.mxu0 0.0
    %712 = vmatpush1.msra.mxu0 0.0
    %713 = vmatprep.subr.mxu0 0.0
    %714 = vmatpush1.msra.mxu0 0.0
    %715 = vmatprep.subr.mxu0 0.0
    %716 = vmatpush1.msra.mxu0 0.0
    %717 = vmatprep.subr.mxu0 0.0
    %718 = vmatpush1.msra.mxu0 0.0
    %719 = vmatprep.subr.mxu0 0.0
    %720 = vmatpush1.msra.mxu0 0.0
    %721 = vmatprep.subr.mxu0 0.0
    %722 = vmatpush1.msra.mxu0 0.0
    %723 = vmatprep.subr.mxu0 0.0
    %724 = vmatpush1.msra.mxu0 0.0
    %725 = vmatprep.subr.mxu0 0.0
    %726 = vmatpush1.msra.mxu0 0.0
    %727 = vmatprep.subr.mxu0 0.0
    %728 = vmatpush1.msra.mxu0 0.0
    %729 = vmatprep.subr.mxu0 0.0
    %730 = vmatpush1.msra.mxu0 0.0
    %731 = vmatprep.subr.mxu0 0.0
    %732 = vmatpush1.msra.mxu0 0.0
    %733 = vmatprep.subr.mxu0 0.0
    %734 = vmatpush1.msra.mxu0 0.0
    %735 = vmatprep.subr.mxu0 0.0
    %736 = vmatpush1.msra.mxu0 0.0
    %737 = vmatprep.subr.mxu0 0.0
    %738 = vmatpush1.msra.mxu0 0.0
    %739 = vmatprep.subr.mxu0 0.0
    %740 = vmatpush1.msra.mxu0 0.0
    %741 = vmatprep.subr.mxu0 0.0
    %742 = vmatpush1.msra.mxu0 0.0
    %743 = vmatprep.subr.mxu0 0.0
    %744 = vmatpush1.msra.mxu0 0.0
    %745 = vmatprep.subr.mxu0 0.0
    %746 = vmatpush1.msra.mxu0 0.0
    %747 = vmatprep.subr.mxu0 0.0
    %748 = vmatpush1.msra.mxu0 0.0
    %749 = vmatprep.subr.mxu0 0.0
    %750 = vmatpush1.msra.mxu0 0.0
    %751 = vmatprep.subr.mxu0 0.0
    %752 = vmatpush1.msra.mxu0 0.0
    %753 = vmatprep.mubr.f32.mxu0 0.0
    %754 = vmatmul.mubr.f32.gmra.mrb[0].mxu0 %v687
    %v755 = vpop.f32.mrb[0].mxu0
    %v756 = vadd.f32 0.0, %v755
    %v757 = vpop.f32.mrb[0].mxu0
    %758 = vdwg.mxu0
    %v759 = vadd.f32 %v686, %v756
    %v760 = vxor.u32 %v759, 2147483648
    %v761 = vmul.f32 %v760, 1.442695
    %v762 = vpow.pop %v761
    %v763 = vadd.f32 %v762, 1.0
    %v764 = vrcp.pop %v763
    %v765 = vmul.f32 1.0, %v764
    %v766 = vadd.f32 %v756, %v123
    %768 = vrot.lane.b32.xlu0 %v766, 64
    %v769 = vpop.permute.xlu0 %768
    %v771 = vmul.f32 %v765, %v769
    %773 = vrot.lane.b32.xlu0 %v771, 64
    %v774 = vpop.permute.xlu0 %773
    %v776 = vadd.f32 %v686, %v774
    %v777 = vtanh.pop %v776
    %v778 = vsub.f32 1.0, %v765
    %780 = vrot.lane.b32.xlu0 %v777, 96
    %v781 = vpop.permute.xlu0 %780
    %v783 = vmul.f32 %v778, %v781
    %v784 = vmul.f32 %v765, %v678
    %v785 = vadd.f32 %v783, %v784
    %787 = vrot.lane.b32.xlu0 %v785, 96
    %v788 = vpop.permute.xlu0 %787
    %s790 = scalar_lea.vmem [#allocation2], 48
    %791 = vst.msk [vmem:[%s790] sm:$0xff] %vm36, %v788
    %s792 = scalar_lea.vmem %s0, 56
    %v793 = vld [vmem:[%s792] sm:$0xff]
    %v794 = vsel %vm36, %v788, 0
    %796 = vmatprep.subr.mxu0 0.0
    %797 = vmatpush1.msra.mxu0 %v30
    %798 = vmatprep.subr.mxu0 0.0
    %799 = vmatpush1.msra.mxu0 %v31
    %800 = vmatprep.subr.mxu0 0.0
    %801 = vmatpush1.msra.mxu0 %v32
    %802 = vmatprep.subr.mxu0 0.0
    %803 = vmatpush1.msra.mxu0 %v33
    %804 = vmatprep.subr.mxu0 0.0
    %805 = vmatpush1.msra.mxu0 0.0
    %806 = vmatprep.subr.mxu0 0.0
    %807 = vmatpush1.msra.mxu0 0.0
    %808 = vmatprep.subr.mxu0 0.0
    %809 = vmatpush1.msra.mxu0 0.0
    %810 = vmatprep.subr.mxu0 0.0
    %811 = vmatpush1.msra.mxu0 0.0
    %812 = vmatprep.subr.mxu0 0.0
    %813 = vmatpush1.msra.mxu0 0.0
    %814 = vmatprep.subr.mxu0 0.0
    %815 = vmatpush1.msra.mxu0 0.0
    %816 = vmatprep.subr.mxu0 0.0
    %817 = vmatpush1.msra.mxu0 0.0
    %818 = vmatprep.subr.mxu0 0.0
    %819 = vmatpush1.msra.mxu0 0.0
    %820 = vmatprep.subr.mxu0 0.0
    %821 = vmatpush1.msra.mxu0 0.0
    %822 = vmatprep.subr.mxu0 0.0
    %823 = vmatpush1.msra.mxu0 0.0
    %824 = vmatprep.subr.mxu0 0.0
    %825 = vmatpush1.msra.mxu0 0.0
    %826 = vmatprep.subr.mxu0 0.0
    %827 = vmatpush1.msra.mxu0 0.0
    %828 = vmatprep.subr.mxu0 0.0
    %829 = vmatpush1.msra.mxu0 0.0
    %830 = vmatprep.subr.mxu0 0.0
    %831 = vmatpush1.msra.mxu0 0.0
    %832 = vmatprep.subr.mxu0 0.0
    %833 = vmatpush1.msra.mxu0 0.0
    %834 = vmatprep.subr.mxu0 0.0
    %835 = vmatpush1.msra.mxu0 0.0
    %836 = vmatprep.subr.mxu0 0.0
    %837 = vmatpush1.msra.mxu0 0.0
    %838 = vmatprep.subr.mxu0 0.0
    %839 = vmatpush1.msra.mxu0 0.0
    %840 = vmatprep.subr.mxu0 0.0
    %841 = vmatpush1.msra.mxu0 0.0
    %842 = vmatprep.subr.mxu0 0.0
    %843 = vmatpush1.msra.mxu0 0.0
    %844 = vmatprep.subr.mxu0 0.0
    %845 = vmatpush1.msra.mxu0 0.0
    %846 = vmatprep.subr.mxu0 0.0
    %847 = vmatpush1.msra.mxu0 0.0
    %848 = vmatprep.subr.mxu0 0.0
    %849 = vmatpush1.msra.mxu0 0.0
    %850 = vmatprep.subr.mxu0 0.0
    %851 = vmatpush1.msra.mxu0 0.0
    %852 = vmatprep.subr.mxu0 0.0
    %853 = vmatpush1.msra.mxu0 0.0
    %854 = vmatprep.subr.mxu0 0.0
    %855 = vmatpush1.msra.mxu0 0.0
    %856 = vmatprep.subr.mxu0 0.0
    %857 = vmatpush1.msra.mxu0 0.0
    %858 = vmatprep.subr.mxu0 0.0
    %859 = vmatpush1.msra.mxu0 0.0
    %860 = vmatprep.mubr.f32.mxu0 0.0
    %861 = vmatmul.mubr.f32.gmra.mrb[0].mxu0 %v794
    %v862 = vpop.f32.mrb[0].mxu0
    %v863 = vadd.f32 0.0, %v862
    %v864 = vpop.f32.mrb[0].mxu0
    %865 = vdwg.mxu0
    %v866 = vadd.f32 %v793, %v863
    %v867 = vxor.u32 %v866, 2147483648
    %v868 = vmul.f32 %v867, 1.442695
    %v869 = vpow.pop %v868
    %v870 = vadd.f32 %v869, 1.0
    %v871 = vrcp.pop %v870
    %v872 = vmul.f32 1.0, %v871
    %v873 = vadd.f32 %v863, %v123
    %875 = vrot.lane.b32.xlu0 %v873, 64
    %v876 = vpop.permute.xlu0 %875
    %v878 = vmul.f32 %v872, %v876
    %880 = vrot.lane.b32.xlu0 %v878, 64
    %v881 = vpop.permute.xlu0 %880
    %v883 = vadd.f32 %v793, %v881
    %v884 = vtanh.pop %v883
    %v885 = vsub.f32 1.0, %v872
    %887 = vrot.lane.b32.xlu0 %v884, 96
    %v888 = vpop.permute.xlu0 %887
    %v890 = vmul.f32 %v885, %v888
    %v891 = vmul.f32 %v872, %v785
    %v892 = vadd.f32 %v890, %v891
    %894 = vrot.lane.b32.xlu0 %v892, 96
    %v895 = vpop.permute.xlu0 %894
    %s897 = scalar_lea.vmem [#allocation2], 56
    %898 = vst.msk [vmem:[%s897] sm:$0xff] %vm36, %v895
    %899 = vst.msk [vmem:[#allocation4] sm:$0xff] %vm36, %v895
    %v900 = vld [vmem:[%s5] sm:$0xff]
    %v901 = vld [vmem:[%s5 + $0x8] sm:$0xff]
    %v902 = vld [vmem:[%s5 + $0x10] sm:$0xff]
    %v903 = vld [vmem:[%s5 + $0x18] sm:$0xff]
    %v904 = vld [vmem:[%s6] sm:$0x1]
    %v905 = vld [vmem:[%s3] sm:$0xff]
    %v906 = vld [vmem:[%s3 + $0x8] sm:$0xff]
    %v907 = vld [vmem:[%s3 + $0x10] sm:$0xff]
    %v908 = vld [vmem:[%s3 + $0x18] sm:$0xff]
    %v909 = vld [vmem:[%s4] sm:$0x1]
    %v910 = vld [vmem:[#allocation2] sm:$0xff]
    %v912 = vlaneseq
    %v913 = vshrl.u32 %v912, 7
    %v914 = vsub.s32 0, %v913
    %v915 = vrot.slane %v909, %v914
    %v918 = vsel %vm36, %v910, 0
    %920 = vmatprep.subr.mxu0 0.0
    %921 = vmatpush1.msra.mxu0 %v905
    %922 = vmatprep.subr.mxu0 0.0
    %923 = vmatpush1.msra.mxu0 %v906
    %924 = vmatprep.subr.mxu0 0.0
    %925 = vmatpush1.msra.mxu0 %v907
    %926 = vmatprep.subr.mxu0 0.0
    %927 = vmatpush1.msra.mxu0 %v908
    %928 = vmatprep.subr.mxu0 0.0
    %929 = vmatpush1.msra.mxu0 0.0
    %930 = vmatprep.subr.mxu0 0.0
    %931 = vmatpush1.msra.mxu0 0.0
    %932 = vmatprep.subr.mxu0 0.0
    %933 = vmatpush1.msra.mxu0 0.0
    %934 = vmatprep.subr.mxu0 0.0
    %935 = vmatpush1.msra.mxu0 0.0
    %936 = vmatprep.subr.mxu0 0.0
    %937 = vmatpush1.msra.mxu0 0.0
    %938 = vmatprep.subr.mxu0 0.0
    %939 = vmatpush1.msra.mxu0 0.0
    %940 = vmatprep.subr.mxu0 0.0
    %941 = vmatpush1.msra.mxu0 0.0
    %942 = vmatprep.subr.mxu0 0.0
    %943 = vmatpush1.msra.mxu0 0.0
    %944 = vmatprep.subr.mxu0 0.0
    %945 = vmatpush1.msra.mxu0 0.0
    %946 = vmatprep.subr.mxu0 0.0
    %947 = vmatpush1.msra.mxu0 0.0
    %948 = vmatprep.subr.mxu0 0.0
    %949 = vmatpush1.msra.mxu0 0.0
    %950 = vmatprep.subr.mxu0 0.0
    %951 = vmatpush1.msra.mxu0 0.0
    %952 = vmatprep.subr.mxu0 0.0
    %953 = vmatpush1.msra.mxu0 0.0
    %954 = vmatprep.subr.mxu0 0.0
    %955 = vmatpush1.msra.mxu0 0.0
    %956 = vmatprep.subr.mxu0 0.0
    %957 = vmatpush1.msra.mxu0 0.0
    %958 = vmatprep.subr.mxu0 0.0
    %959 = vmatpush1.msra.mxu0 0.0
    %960 = vmatprep.subr.mxu0 0.0
    %961 = vmatpush1.msra.mxu0 0.0
    %962 = vmatprep.subr.mxu0 0.0
    %963 = vmatpush1.msra.mxu0 0.0
    %964 = vmatprep.subr.mxu0 0.0
    %965 = vmatpush1.msra.mxu0 0.0
    %966 = vmatprep.subr.mxu0 0.0
    %967 = vmatpush1.msra.mxu0 0.0
    %968 = vmatprep.subr.mxu0 0.0
    %969 = vmatpush1.msra.mxu0 0.0
    %970 = vmatprep.subr.mxu0 0.0
    %971 = vmatpush1.msra.mxu0 0.0
    %972 = vmatprep.subr.mxu0 0.0
    %973 = vmatpush1.msra.mxu0 0.0
    %974 = vmatprep.subr.mxu0 0.0
    %975 = vmatpush1.msra.mxu0 0.0
    %976 = vmatprep.subr.mxu0 0.0
    %977 = vmatpush1.msra.mxu0 0.0
    %978 = vmatprep.subr.mxu0 0.0
    %979 = vmatpush1.msra.mxu0 0.0
    %980 = vmatprep.subr.mxu0 0.0
    %981 = vmatpush1.msra.mxu0 0.0
    %982 = vmatprep.subr.mxu0 0.0
    %983 = vmatpush1.msra.mxu0 0.0
    %984 = vmatprep.mubr.f32.mxu0 0.0
    %985 = vmatmul.mubr.f32.gmra.mrb[0].mxu0 %v918
    %v986 = vpop.f32.mrb[0].mxu0
    %v987 = vadd.f32 %v915, %v986
    %v988 = vpop.f32.mrb[0].mxu0
    %989 = vdwg.mxu0
    %990 = vmatprep.subr.mxu0 0.0
    %991 = vmatpush1.msra.mxu0 %v900
    %992 = vmatprep.subr.mxu0 0.0
    %993 = vmatpush1.msra.mxu0 %v901
    %994 = vmatprep.subr.mxu0 0.0
    %995 = vmatpush1.msra.mxu0 %v902
    %996 = vmatprep.subr.mxu0 0.0
    %997 = vmatpush1.msra.mxu0 %v903
    %998 = vmatprep.subr.mxu0 0.0
    %999 = vmatpush1.msra.mxu0 0.0
    %1000 = vmatprep.subr.mxu0 0.0
    %1001 = vmatpush1.msra.mxu0 0.0
    %1002 = vmatprep.subr.mxu0 0.0
    %1003 = vmatpush1.msra.mxu0 0.0
    %1004 = vmatprep.subr.mxu0 0.0
    %1005 = vmatpush1.msra.mxu0 0.0
    %1006 = vmatprep.subr.mxu0 0.0
    %1007 = vmatpush1.msra.mxu0 0.0
    %1008 = vmatprep.subr.mxu0 0.0
    %1009 = vmatpush1.msra.mxu0 0.0
    %1010 = vmatprep.subr.mxu0 0.0
    %1011 = vmatpush1.msra.mxu0 0.0
    %1012 = vmatprep.subr.mxu0 0.0
    %1013 = vmatpush1.msra.mxu0 0.0
    %1014 = vmatprep.subr.mxu0 0.0
    %1015 = vmatpush1.msra.mxu0 0.0
    %1016 = vmatprep.subr.mxu0 0.0
    %1017 = vmatpush1.msra.mxu0 0.0
    %1018 = vmatprep.subr.mxu0 0.0
    %1019 = vmatpush1.msra.mxu0 0.0
    %1020 = vmatprep.subr.mxu0 0.0
    %1021 = vmatpush1.msra.mxu0 0.0
    %1022 = vmatprep.subr.mxu0 0.0
    %1023 = vmatpush1.msra.mxu0 0.0
    %1024 = vmatprep.subr.mxu0 0.0
    %1025 = vmatpush1.msra.mxu0 0.0
    %1026 = vmatprep.subr.mxu0 0.0
    %1027 = vmatpush1.msra.mxu0 0.0
    %1028 = vmatprep.subr.mxu0 0.0
    %1029 = vmatpush1.msra.mxu0 0.0
    %1030 = vmatprep.subr.mxu0 0.0
    %1031 = vmatpush1.msra.mxu0 0.0
    %1032 = vmatprep.subr.mxu0 0.0
    %1033 = vmatpush1.msra.mxu0 0.0
    %1034 = vmatprep.subr.mxu0 0.0
    %1035 = vmatpush1.msra.mxu0 0.0
    %1036 = vmatprep.subr.mxu0 0.0
    %1037 = vmatpush1.msra.mxu0 0.0
    %1038 = vmatprep.subr.mxu0 0.0
    %1039 = vmatpush1.msra.mxu0 0.0
    %1040 = vmatprep.subr.mxu0 0.0
    %1041 = vmatpush1.msra.mxu0 0.0
    %1042 = vmatprep.subr.mxu0 0.0
    %1043 = vmatpush1.msra.mxu0 0.0
    %1044 = vmatprep.subr.mxu0 0.0
    %1045 = vmatpush1.msra.mxu0 0.0
    %1046 = vmatprep.subr.mxu0 0.0
    %1047 = vmatpush1.msra.mxu0 0.0
    %1048 = vmatprep.subr.mxu0 0.0
    %1049 = vmatpush1.msra.mxu0 0.0
    %1050 = vmatprep.subr.mxu0 0.0
    %1051 = vmatpush1.msra.mxu0 0.0
    %1052 = vmatprep.subr.mxu0 0.0
    %1053 = vmatpush1.msra.mxu0 0.0
    %1054 = vmatprep.mubr.f32.mxu0 0.0
    %1055 = vmatmul.mubr.f32.gmra.mrb[0].mxu0 %v38
    %v1056 = vpop.f32.mrb[0].mxu0
    %v1057 = vadd.f32 0.0, %v1056
    %v1058 = vpop.f32.mrb[0].mxu0
    %1059 = vdwg.mxu0
    %v1060 = vadd.f32 %v987, %v1057
    %v1061 = vxor.u32 %v1060, 2147483648
    %v1062 = vmul.f32 %v1061, 1.442695
    %v1063 = vpow.pop %v1062
    %v1064 = vadd.f32 %v1063, 1.0
    %v1065 = vrcp.pop %v1064
    %v1066 = vmul.f32 1.0, %v1065
    %v1068 = vlaneseq
    %v1069 = vshrl.u32 %v1068, 7
    %v1070 = vsub.s32 0, %v1069
    %v1071 = vrot.slane %v904, %v1070
    %1072 = vrot.lane.b32.xlu0 %v1071, 64
    %v1073 = vpop.permute.xlu0 %1072
    %v1075 = vadd.f32 %v1057, %v1073
    %1077 = vrot.lane.b32.xlu0 %v1075, 64
    %v1078 = vpop.permute.xlu0 %1077
    %v1080 = vmul.f32 %v1066, %v1078
    %1082 = vrot.lane.b32.xlu0 %v1080, 64
    %v1083 = vpop.permute.xlu0 %1082
    %v1085 = vadd.f32 %v987, %v1083
    %v1086 = vtanh.pop %v1085
    %v1087 = vsub.f32 1.0, %v1066
    %1089 = vrot.lane.b32.xlu0 %v1086, 96
    %v1090 = vpop.permute.xlu0 %1089
    %v1092 = vmul.f32 %v1087, %v1090
    %v1093 = vmul.f32 %v1066, 0.0
    %v1094 = vadd.f32 %v1092, %v1093
    %1096 = vrot.lane.b32.xlu0 %v1094, 96
    %v1097 = vpop.permute.xlu0 %1096
    %1099 = vst.msk [vmem:[#allocation2] sm:$0xff] %vm36, %v1097
    %v1100 = vld [vmem:[%s255] sm:$0xff]
    %v1102 = vsel %vm36, %v1100, 0
    %1104 = vmatprep.subr.mxu0 0.0
    %1105 = vmatpush1.msra.mxu0 %v905
    %1106 = vmatprep.subr.mxu0 0.0
    %1107 = vmatpush1.msra.mxu0 %v906
    %1108 = vmatprep.subr.mxu0 0.0
    %1109 = vmatpush1.msra.mxu0 %v907
    %1110 = vmatprep.subr.mxu0 0.0
    %1111 = vmatpush1.msra.mxu0 %v908
    %1112 = vmatprep.subr.mxu0 0.0
    %1113 = vmatpush1.msra.mxu0 0.0
    %1114 = vmatprep.subr.mxu0 0.0
    %1115 = vmatpush1.msra.mxu0 0.0
    %1116 = vmatprep.subr.mxu0 0.0
    %1117 = vmatpush1.msra.mxu0 0.0
    %1118 = vmatprep.subr.mxu0 0.0
    %1119 = vmatpush1.msra.mxu0 0.0
    %1120 = vmatprep.subr.mxu0 0.0
    %1121 = vmatpush1.msra.mxu0 0.0
    %1122 = vmatprep.subr.mxu0 0.0
    %1123 = vmatpush1.msra.mxu0 0.0
    %1124 = vmatprep.subr.mxu0 0.0
    %1125 = vmatpush1.msra.mxu0 0.0
    %1126 = vmatprep.subr.mxu0 0.0
    %1127 = vmatpush1.msra.mxu0 0.0
    %1128 = vmatprep.subr.mxu0 0.0
    %1129 = vmatpush1.msra.mxu0 0.0
    %1130 = vmatprep.subr.mxu0 0.0
    %1131 = vmatpush1.msra.mxu0 0.0
    %1132 = vmatprep.subr.mxu0 0.0
    %1133 = vmatpush1.msra.mxu0 0.0
    %1134 = vmatprep.subr.mxu0 0.0
    %1135 = vmatpush1.msra.mxu0 0.0
    %1136 = vmatprep.subr.mxu0 0.0
    %1137 = vmatpush1.msra.mxu0 0.0
    %1138 = vmatprep.subr.mxu0 0.0
    %1139 = vmatpush1.msra.mxu0 0.0
    %1140 = vmatprep.subr.mxu0 0.0
    %1141 = vmatpush1.msra.mxu0 0.0
    %1142 = vmatprep.subr.mxu0 0.0
    %1143 = vmatpush1.msra.mxu0 0.0
    %1144 = vmatprep.subr.mxu0 0.0
    %1145 = vmatpush1.msra.mxu0 0.0
    %1146 = vmatprep.subr.mxu0 0.0
    %1147 = vmatpush1.msra.mxu0 0.0
    %1148 = vmatprep.subr.mxu0 0.0
    %1149 = vmatpush1.msra.mxu0 0.0
    %1150 = vmatprep.subr.mxu0 0.0
    %1151 = vmatpush1.msra.mxu0 0.0
    %1152 = vmatprep.subr.mxu0 0.0
    %1153 = vmatpush1.msra.mxu0 0.0
    %1154 = vmatprep.subr.mxu0 0.0
    %1155 = vmatpush1.msra.mxu0 0.0
    %1156 = vmatprep.subr.mxu0 0.0
    %1157 = vmatpush1.msra.mxu0 0.0
    %1158 = vmatprep.subr.mxu0 0.0
    %1159 = vmatpush1.msra.mxu0 0.0
    %1160 = vmatprep.subr.mxu0 0.0
    %1161 = vmatpush1.msra.mxu0 0.0
    %1162 = vmatprep.subr.mxu0 0.0
    %1163 = vmatpush1.msra.mxu0 0.0
    %1164 = vmatprep.subr.mxu0 0.0
    %1165 = vmatpush1.msra.mxu0 0.0
    %1166 = vmatprep.subr.mxu0 0.0
    %1167 = vmatpush1.msra.mxu0 0.0
    %1168 = vmatprep.mubr.f32.mxu0 0.0
    %1169 = vmatmul.mubr.f32.gmra.mrb[0].mxu0 %v1102
    %v1170 = vpop.f32.mrb[0].mxu0
    %v1171 = vadd.f32 %v915, %v1170
    %v1172 = vpop.f32.mrb[0].mxu0
    %1173 = vdwg.mxu0
    %v1174 = vsel %vm36, %v1097, 0
    %1176 = vmatprep.subr.mxu0 0.0
    %1177 = vmatpush1.msra.mxu0 %v900
    %1178 = vmatprep.subr.mxu0 0.0
    %1179 = vmatpush1.msra.mxu0 %v901
    %1180 = vmatprep.subr.mxu0 0.0
    %1181 = vmatpush1.msra.mxu0 %v902
    %1182 = vmatprep.subr.mxu0 0.0
    %1183 = vmatpush1.msra.mxu0 %v903
    %1184 = vmatprep.subr.mxu0 0.0
    %1185 = vmatpush1.msra.mxu0 0.0
    %1186 = vmatprep.subr.mxu0 0.0
    %1187 = vmatpush1.msra.mxu0 0.0
    %1188 = vmatprep.subr.mxu0 0.0
    %1189 = vmatpush1.msra.mxu0 0.0
    %1190 = vmatprep.subr.mxu0 0.0
    %1191 = vmatpush1.msra.mxu0 0.0
    %1192 = vmatprep.subr.mxu0 0.0
    %1193 = vmatpush1.msra.mxu0 0.0
    %1194 = vmatprep.subr.mxu0 0.0
    %1195 = vmatpush1.msra.mxu0 0.0
    %1196 = vmatprep.subr.mxu0 0.0
    %1197 = vmatpush1.msra.mxu0 0.0
    %1198 = vmatprep.subr.mxu0 0.0
    %1199 = vmatpush1.msra.mxu0 0.0
    %1200 = vmatprep.subr.mxu0 0.0
    %1201 = vmatpush1.msra.mxu0 0.0
    %1202 = vmatprep.subr.mxu0 0.0
    %1203 = vmatpush1.msra.mxu0 0.0
    %1204 = vmatprep.subr.mxu0 0.0
    %1205 = vmatpush1.msra.mxu0 0.0
    %1206 = vmatprep.subr.mxu0 0.0
    %1207 = vmatpush1.msra.mxu0 0.0
    %1208 = vmatprep.subr.mxu0 0.0
    %1209 = vmatpush1.msra.mxu0 0.0
    %1210 = vmatprep.subr.mxu0 0.0
    %1211 = vmatpush1.msra.mxu0 0.0
    %1212 = vmatprep.subr.mxu0 0.0
    %1213 = vmatpush1.msra.mxu0 0.0
    %1214 = vmatprep.subr.mxu0 0.0
    %1215 = vmatpush1.msra.mxu0 0.0
    %1216 = vmatprep.subr.mxu0 0.0
    %1217 = vmatpush1.msra.mxu0 0.0
    %1218 = vmatprep.subr.mxu0 0.0
    %1219 = vmatpush1.msra.mxu0 0.0
    %1220 = vmatprep.subr.mxu0 0.0
    %1221 = vmatpush1.msra.mxu0 0.0
    %1222 = vmatprep.subr.mxu0 0.0
    %1223 = vmatpush1.msra.mxu0 0.0
    %1224 = vmatprep.subr.mxu0 0.0
    %1225 = vmatpush1.msra.mxu0 0.0
    %1226 = vmatprep.subr.mxu0 0.0
    %1227 = vmatpush1.msra.mxu0 0.0
    %1228 = vmatprep.subr.mxu0 0.0
    %1229 = vmatpush1.msra.mxu0 0.0
    %1230 = vmatprep.subr.mxu0 0.0
    %1231 = vmatpush1.msra.mxu0 0.0
    %1232 = vmatprep.subr.mxu0 0.0
    %1233 = vmatpush1.msra.mxu0 0.0
    %1234 = vmatprep.subr.mxu0 0.0
    %1235 = vmatpush1.msra.mxu0 0.0
    %1236 = vmatprep.subr.mxu0 0.0
    %1237 = vmatpush1.msra.mxu0 0.0
    %1238 = vmatprep.subr.mxu0 0.0
    %1239 = vmatpush1.msra.mxu0 0.0
    %1240 = vmatprep.mubr.f32.mxu0 0.0
    %1241 = vmatmul.mubr.f32.gmra.mrb[0].mxu0 %v1174
    %v1242 = vpop.f32.mrb[0].mxu0
    %v1243 = vadd.f32 0.0, %v1242
    %v1244 = vpop.f32.mrb[0].mxu0
    %1245 = vdwg.mxu0
    %v1246 = vadd.f32 %v1171, %v1243
    %v1247 = vxor.u32 %v1246, 2147483648
    %v1248 = vmul.f32 %v1247, 1.442695
    %v1249 = vpow.pop %v1248
    %v1250 = vadd.f32 %v1249, 1.0
    %v1251 = vrcp.pop %v1250
    %v1252 = vmul.f32 1.0, %v1251
    %v1253 = vadd.f32 %v1243, %v1073
    %1255 = vrot.lane.b32.xlu0 %v1253, 64
    %v1256 = vpop.permute.xlu0 %1255
    %v1258 = vmul.f32 %v1252, %v1256
    %1260 = vrot.lane.b32.xlu0 %v1258, 64
    %v1261 = vpop.permute.xlu0 %1260
    %v1263 = vadd.f32 %v1171, %v1261
    %v1264 = vtanh.pop %v1263
    %v1265 = vsub.f32 1.0, %v1252
    %1267 = vrot.lane.b32.xlu0 %v1264, 96
    %v1268 = vpop.permute.xlu0 %1267
    %v1270 = vmul.f32 %v1265, %v1268
    %v1271 = vmul.f32 %v1252, %v1094
    %v1272 = vadd.f32 %v1270, %v1271
    %1274 = vrot.lane.b32.xlu0 %v1272, 96
    %v1275 = vpop.permute.xlu0 %1274
    %1277 = vst.msk [vmem:[%s255] sm:$0xff] %vm36, %v1275
    %v1278 = vld [vmem:[%s362] sm:$0xff]
    %v1280 = vsel %vm36, %v1278, 0
    %1282 = vmatprep.subr.mxu0 0.0
    %1283 = vmatpush1.msra.mxu0 %v905
    %1284 = vmatprep.subr.mxu0 0.0
    %1285 = vmatpush1.msra.mxu0 %v906
    %1286 = vmatprep.subr.mxu0 0.0
    %1287 = vmatpush1.msra.mxu0 %v907
    %1288 = vmatprep.subr.mxu0 0.0
    %1289 = vmatpush1.msra.mxu0 %v908
    %1290 = vmatprep.subr.mxu0 0.0
    %1291 = vmatpush1.msra.mxu0 0.0
    %1292 = vmatprep.subr.mxu0 0.0
    %1293 = vmatpush1.msra.mxu0 0.0
    %1294 = vmatprep.subr.mxu0 0.0
    %1295 = vmatpush1.msra.mxu0 0.0
    %1296 = vmatprep.subr.mxu0 0.0
    %1297 = vmatpush1.msra.mxu0 0.0
    %1298 = vmatprep.subr.mxu0 0.0
    %1299 = vmatpush1.msra.mxu0 0.0
    %1300 = vmatprep.subr.mxu0 0.0
    %1301 = vmatpush1.msra.mxu0 0.0
    %1302 = vmatprep.subr.mxu0 0.0
    %1303 = vmatpush1.msra.mxu0 0.0
    %1304 = vmatprep.subr.mxu0 0.0
    %1305 = vmatpush1.msra.mxu0 0.0
    %1306 = vmatprep.subr.mxu0 0.0
    %1307 = vmatpush1.msra.mxu0 0.0
    %1308 = vmatprep.subr.mxu0 0.0
    %1309 = vmatpush1.msra.mxu0 0.0
    %1310 = vmatprep.subr.mxu0 0.0
    %1311 = vmatpush1.msra.mxu0 0.0
    %1312 = vmatprep.subr.mxu0 0.0
    %1313 = vmatpush1.msra.mxu0 0.0
    %1314 = vmatprep.subr.mxu0 0.0
    %1315 = vmatpush1.msra.mxu0 0.0
    %1316 = vmatprep.subr.mxu0 0.0
    %1317 = vmatpush1.msra.mxu0 0.0
    %1318 = vmatprep.subr.mxu0 0.0
    %1319 = vmatpush1.msra.mxu0 0.0
    %1320 = vmatprep.subr.mxu0 0.0
    %1321 = vmatpush1.msra.mxu0 0.0
    %1322 = vmatprep.subr.mxu0 0.0
    %1323 = vmatpush1.msra.mxu0 0.0
    %1324 = vmatprep.subr.mxu0 0.0
    %1325 = vmatpush1.msra.mxu0 0.0
    %1326 = vmatprep.subr.mxu0 0.0
    %1327 = vmatpush1.msra.mxu0 0.0
    %1328 = vmatprep.subr.mxu0 0.0
    %1329 = vmatpush1.msra.mxu0 0.0
    %1330 = vmatprep.subr.mxu0 0.0
    %1331 = vmatpush1.msra.mxu0 0.0
    %1332 = vmatprep.subr.mxu0 0.0
    %1333 = vmatpush1.msra.mxu0 0.0
    %1334 = vmatprep.subr.mxu0 0.0
    %1335 = vmatpush1.msra.mxu0 0.0
    %1336 = vmatprep.subr.mxu0 0.0
    %1337 = vmatpush1.msra.mxu0 0.0
    %1338 = vmatprep.subr.mxu0 0.0
    %1339 = vmatpush1.msra.mxu0 0.0
    %1340 = vmatprep.subr.mxu0 0.0
    %1341 = vmatpush1.msra.mxu0 0.0
    %1342 = vmatprep.subr.mxu0 0.0
    %1343 = vmatpush1.msra.mxu0 0.0
    %1344 = vmatprep.subr.mxu0 0.0
    %1345 = vmatpush1.msra.mxu0 0.0
    %1346 = vmatprep.mubr.f32.mxu0 0.0
    %1347 = vmatmul.mubr.f32.gmra.mrb[0].mxu0 %v1280
    %v1348 = vpop.f32.mrb[0].mxu0
    %v1349 = vadd.f32 %v915, %v1348
    %v1350 = vpop.f32.mrb[0].mxu0
    %1351 = vdwg.mxu0
    %v1352 = vsel %vm36, %v1275, 0
    %1354 = vmatprep.subr.mxu0 0.0
    %1355 = vmatpush1.msra.mxu0 %v900
    %1356 = vmatprep.subr.mxu0 0.0
    %1357 = vmatpush1.msra.mxu0 %v901
    %1358 = vmatprep.subr.mxu0 0.0
    %1359 = vmatpush1.msra.mxu0 %v902
    %1360 = vmatprep.subr.mxu0 0.0
    %1361 = vmatpush1.msra.mxu0 %v903
    %1362 = vmatprep.subr.mxu0 0.0
    %1363 = vmatpush1.msra.mxu0 0.0
    %1364 = vmatprep.subr.mxu0 0.0
    %1365 = vmatpush1.msra.mxu0 0.0
    %1366 = vmatprep.subr.mxu0 0.0
    %1367 = vmatpush1.msra.mxu0 0.0
    %1368 = vmatprep.subr.mxu0 0.0
    %1369 = vmatpush1.msra.mxu0 0.0
    %1370 = vmatprep.subr.mxu0 0.0
    %1371 = vmatpush1.msra.mxu0 0.0
    %1372 = vmatprep.subr.mxu0 0.0
    %1373 = vmatpush1.msra.mxu0 0.0
    %1374 = vmatprep.subr.mxu0 0.0
    %1375 = vmatpush1.msra.mxu0 0.0
    %1376 = vmatprep.subr.mxu0 0.0
    %1377 = vmatpush1.msra.mxu0 0.0
    %1378 = vmatprep.subr.mxu0 0.0
    %1379 = vmatpush1.msra.mxu0 0.0
    %1380 = vmatprep.subr.mxu0 0.0
    %1381 = vmatpush1.msra.mxu0 0.0
    %1382 = vmatprep.subr.mxu0 0.0
    %1383 = vmatpush1.msra.mxu0 0.0
    %1384 = vmatprep.subr.mxu0 0.0
    %1385 = vmatpush1.msra.mxu0 0.0
    %1386 = vmatprep.subr.mxu0 0.0
    %1387 = vmatpush1.msra.mxu0 0.0
    %1388 = vmatprep.subr.mxu0 0.0
    %1389 = vmatpush1.msra.mxu0 0.0
    %1390 = vmatprep.subr.mxu0 0.0
    %1391 = vmatpush1.msra.mxu0 0.0
    %1392 = vmatprep.subr.mxu0 0.0
    %1393 = vmatpush1.msra.mxu0 0.0
    %1394 = vmatprep.subr.mxu0 0.0
    %1395 = vmatpush1.msra.mxu0 0.0
    %1396 = vmatprep.subr.mxu0 0.0
    %1397 = vmatpush1.msra.mxu0 0.0
    %1398 = vmatprep.subr.mxu0 0.0
    %1399 = vmatpush1.msra.mxu0 0.0
    %1400 = vmatprep.subr.mxu0 0.0
    %1401 = vmatpush1.msra.mxu0 0.0
    %1402 = vmatprep.subr.mxu0 0.0
    %1403 = vmatpush1.msra.mxu0 0.0
    %1404 = vmatprep.subr.mxu0 0.0
    %1405 = vmatpush1.msra.mxu0 0.0
    %1406 = vmatprep.subr.mxu0 0.0
    %1407 = vmatpush1.msra.mxu0 0.0
    %1408 = vmatprep.subr.mxu0 0.0
    %1409 = vmatpush1.msra.mxu0 0.0
    %1410 = vmatprep.subr.mxu0 0.0
    %1411 = vmatpush1.msra.mxu0 0.0
    %1412 = vmatprep.subr.mxu0 0.0
    %1413 = vmatpush1.msra.mxu0 0.0
    %1414 = vmatprep.subr.mxu0 0.0
    %1415 = vmatpush1.msra.mxu0 0.0
    %1416 = vmatprep.subr.mxu0 0.0
    %1417 = vmatpush1.msra.mxu0 0.0
    %1418 = vmatprep.mubr.f32.mxu0 0.0
    %1419 = vmatmul.mubr.f32.gmra.mrb[0].mxu0 %v1352
    %v1420 = vpop.f32.mrb[0].mxu0
    %v1421 = vadd.f32 0.0, %v1420
    %v1422 = vpop.f32.mrb[0].mxu0
    %1423 = vdwg.mxu0
    %v1424 = vadd.f32 %v1349, %v1421
    %v1425 = vxor.u32 %v1424, 2147483648
    %v1426 = vmul.f32 %v1425, 1.442695
    %v1427 = vpow.pop %v1426
    %v1428 = vadd.f32 %v1427, 1.0
    %v1429 = vrcp.pop %v1428
    %v1430 = vmul.f32 1.0, %v1429
    %v1431 = vadd.f32 %v1421, %v1073
    %1433 = vrot.lane.b32.xlu0 %v1431, 64
    %v1434 = vpop.permute.xlu0 %1433
    %v1436 = vmul.f32 %v1430, %v1434
    %1438 = vrot.lane.b32.xlu0 %v1436, 64
    %v1439 = vpop.permute.xlu0 %1438
    %v1441 = vadd.f32 %v1349, %v1439
    %v1442 = vtanh.pop %v1441
    %v1443 = vsub.f32 1.0, %v1430
    %1445 = vrot.lane.b32.xlu0 %v1442, 96
    %v1446 = vpop.permute.xlu0 %1445
    %v1448 = vmul.f32 %v1443, %v1446
    %v1449 = vmul.f32 %v1430, %v1272
    %v1450 = vadd.f32 %v1448, %v1449
    %1452 = vrot.lane.b32.xlu0 %v1450, 96
    %v1453 = vpop.permute.xlu0 %1452
    %1455 = vst.msk [vmem:[%s362] sm:$0xff] %vm36, %v1453
    %v1456 = vld [vmem:[%s469] sm:$0xff]
    %v1458 = vsel %vm36, %v1456, 0
    %1460 = vmatprep.subr.mxu0 0.0
    %1461 = vmatpush1.msra.mxu0 %v905
    %1462 = vmatprep.subr.mxu0 0.0
    %1463 = vmatpush1.msra.mxu0 %v906
    %1464 = vmatprep.subr.mxu0 0.0
    %1465 = vmatpush1.msra.mxu0 %v907
    %1466 = vmatprep.subr.mxu0 0.0
    %1467 = vmatpush1.msra.mxu0 %v908
    %1468 = vmatprep.subr.mxu0 0.0
    %1469 = vmatpush1.msra.mxu0 0.0
    %1470 = vmatprep.subr.mxu0 0.0
    %1471 = vmatpush1.msra.mxu0 0.0
    %1472 = vmatprep.subr.mxu0 0.0
    %1473 = vmatpush1.msra.mxu0 0.0
    %1474 = vmatprep.subr.mxu0 0.0
    %1475 = vmatpush1.msra.mxu0 0.0
    %1476 = vmatprep.subr.mxu0 0.0
    %1477 = vmatpush1.msra.mxu0 0.0
    %1478 = vmatprep.subr.mxu0 0.0
    %1479 = vmatpush1.msra.mxu0 0.0
    %1480 = vmatprep.subr.mxu0 0.0
    %1481 = vmatpush1.msra.mxu0 0.0
    %1482 = vmatprep.subr.mxu0 0.0
    %1483 = vmatpush1.msra.mxu0 0.0
    %1484 = vmatprep.subr.mxu0 0.0
    %1485 = vmatpush1.msra.mxu0 0.0
    %1486 = vmatprep.subr.mxu0 0.0
    %1487 = vmatpush1.msra.mxu0 0.0
    %1488 = vmatprep.subr.mxu0 0.0
    %1489 = vmatpush1.msra.mxu0 0.0
    %1490 = vmatprep.subr.mxu0 0.0
    %1491 = vmatpush1.msra.mxu0 0.0
    %1492 = vmatprep.subr.mxu0 0.0
    %1493 = vmatpush1.msra.mxu0 0.0
    %1494 = vmatprep.subr.mxu0 0.0
    %1495 = vmatpush1.msra.mxu0 0.0
    %1496 = vmatprep.subr.mxu0 0.0
    %1497 = vmatpush1.msra.mxu0 0.0
    %1498 = vmatprep.subr.mxu0 0.0
    %1499 = vmatpush1.msra.mxu0 0.0
    %1500 = vmatprep.subr.mxu0 0.0
    %1501 = vmatpush1.msra.mxu0 0.0
    %1502 = vmatprep.subr.mxu0 0.0
    %1503 = vmatpush1.msra.mxu0 0.0
    %1504 = vmatprep.subr.mxu0 0.0
    %1505 = vmatpush1.msra.mxu0 0.0
    %1506 = vmatprep.subr.mxu0 0.0
    %1507 = vmatpush1.msra.mxu0 0.0
    %1508 = vmatprep.subr.mxu0 0.0
    %1509 = vmatpush1.msra.mxu0 0.0
    %1510 = vmatprep.subr.mxu0 0.0
    %1511 = vmatpush1.msra.mxu0 0.0
    %1512 = vmatprep.subr.mxu0 0.0
    %1513 = vmatpush1.msra.mxu0 0.0
    %1514 = vmatprep.subr.mxu0 0.0
    %1515 = vmatpush1.msra.mxu0 0.0
    %1516 = vmatprep.subr.mxu0 0.0
    %1517 = vmatpush1.msra.mxu0 0.0
    %1518 = vmatprep.subr.mxu0 0.0
    %1519 = vmatpush1.msra.mxu0 0.0
    %1520 = vmatprep.subr.mxu0 0.0
    %1521 = vmatpush1.msra.mxu0 0.0
    %1522 = vmatprep.subr.mxu0 0.0
    %1523 = vmatpush1.msra.mxu0 0.0
    %1524 = vmatprep.mubr.f32.mxu0 0.0
    %1525 = vmatmul.mubr.f32.gmra.mrb[0].mxu0 %v1458
    %v1526 = vpop.f32.mrb[0].mxu0
    %v1527 = vadd.f32 %v915, %v1526
    %v1528 = vpop.f32.mrb[0].mxu0
    %1529 = vdwg.mxu0
    %v1530 = vsel %vm36, %v1453, 0
    %1532 = vmatprep.subr.mxu0 0.0
    %1533 = vmatpush1.msra.mxu0 %v900
    %1534 = vmatprep.subr.mxu0 0.0
    %1535 = vmatpush1.msra.mxu0 %v901
    %1536 = vmatprep.subr.mxu0 0.0
    %1537 = vmatpush1.msra.mxu0 %v902
    %1538 = vmatprep.subr.mxu0 0.0
    %1539 = vmatpush1.msra.mxu0 %v903
    %1540 = vmatprep.subr.mxu0 0.0
    %1541 = vmatpush1.msra.mxu0 0.0
    %1542 = vmatprep.subr.mxu0 0.0
    %1543 = vmatpush1.msra.mxu0 0.0
    %1544 = vmatprep.subr.mxu0 0.0
    %1545 = vmatpush1.msra.mxu0 0.0
    %1546 = vmatprep.subr.mxu0 0.0
    %1547 = vmatpush1.msra.mxu0 0.0
    %1548 = vmatprep.subr.mxu0 0.0
    %1549 = vmatpush1.msra.mxu0 0.0
    %1550 = vmatprep.subr.mxu0 0.0
    %1551 = vmatpush1.msra.mxu0 0.0
    %1552 = vmatprep.subr.mxu0 0.0
    %1553 = vmatpush1.msra.mxu0 0.0
    %1554 = vmatprep.subr.mxu0 0.0
    %1555 = vmatpush1.msra.mxu0 0.0
    %1556 = vmatprep.subr.mxu0 0.0
    %1557 = vmatpush1.msra.mxu0 0.0
    %1558 = vmatprep.subr.mxu0 0.0
    %1559 = vmatpush1.msra.mxu0 0.0
    %1560 = vmatprep.subr.mxu0 0.0
    %1561 = vmatpush1.msra.mxu0 0.0
    %1562 = vmatprep.subr.mxu0 0.0
    %1563 = vmatpush1.msra.mxu0 0.0
    %1564 = vmatprep.subr.mxu0 0.0
    %1565 = vmatpush1.msra.mxu0 0.0
    %1566 = vmatprep.subr.mxu0 0.0
    %1567 = vmatpush1.msra.mxu0 0.0
    %1568 = vmatprep.subr.mxu0 0.0
    %1569 = vmatpush1.msra.mxu0 0.0
    %1570 = vmatprep.subr.mxu0 0.0
    %1571 = vmatpush1.msra.mxu0 0.0
    %1572 = vmatprep.subr.mxu0 0.0
    %1573 = vmatpush1.msra.mxu0 0.0
    %1574 = vmatprep.subr.mxu0 0.0
    %1575 = vmatpush1.msra.mxu0 0.0
    %1576 = vmatprep.subr.mxu0 0.0
    %1577 = vmatpush1.msra.mxu0 0.0
    %1578 = vmatprep.subr.mxu0 0.0
    %1579 = vmatpush1.msra.mxu0 0.0
    %1580 = vmatprep.subr.mxu0 0.0
    %1581 = vmatpush1.msra.mxu0 0.0
    %1582 = vmatprep.subr.mxu0 0.0
    %1583 = vmatpush1.msra.mxu0 0.0
    %1584 = vmatprep.subr.mxu0 0.0
    %1585 = vmatpush1.msra.mxu0 0.0
    %1586 = vmatprep.subr.mxu0 0.0
    %1587 = vmatpush1.msra.mxu0 0.0
    %1588 = vmatprep.subr.mxu0 0.0
    %1589 = vmatpush1.msra.mxu0 0.0
    %1590 = vmatprep.subr.mxu0 0.0
    %1591 = vmatpush1.msra.mxu0 0.0
    %1592 = vmatprep.subr.mxu0 0.0
    %1593 = vmatpush1.msra.mxu0 0.0
    %1594 = vmatprep.subr.mxu0 0.0
    %1595 = vmatpush1.msra.mxu0 0.0
    %1596 = vmatprep.mubr.f32.mxu0 0.0
    %1597 = vmatmul.mubr.f32.gmra.mrb[0].mxu0 %v1530
    %v1598 = vpop.f32.mrb[0].mxu0
    %v1599 = vadd.f32 0.0, %v1598
    %v1600 = vpop.f32.mrb[0].mxu0
    %1601 = vdwg.mxu0
    %v1602 = vadd.f32 %v1527, %v1599
    %v1603 = vxor.u32 %v1602, 2147483648
    %v1604 = vmul.f32 %v1603, 1.442695
    %v1605 = vpow.pop %v1604
    %v1606 = vadd.f32 %v1605, 1.0
    %v1607 = vrcp.pop %v1606
    %v1608 = vmul.f32 1.0, %v1607
    %v1609 = vadd.f32 %v1599, %v1073
    %1611 = vrot.lane.b32.xlu0 %v1609, 64
    %v1612 = vpop.permute.xlu0 %1611
    %v1614 = vmul.f32 %v1608, %v1612
    %1616 = vrot.lane.b32.xlu0 %v1614, 64
    %v1617 = vpop.permute.xlu0 %1616
    %v1619 = vadd.f32 %v1527, %v1617
    %v1620 = vtanh.pop %v1619
    %v1621 = vsub.f32 1.0, %v1608
    %1623 = vrot.lane.b32.xlu0 %v1620, 96
    %v1624 = vpop.permute.xlu0 %1623
    %v1626 = vmul.f32 %v1621, %v1624
    %v1627 = vmul.f32 %v1608, %v1450
    %v1628 = vadd.f32 %v1626, %v1627
    %1630 = vrot.lane.b32.xlu0 %v1628, 96
    %v1631 = vpop.permute.xlu0 %1630
    %1633 = vst.msk [vmem:[%s469] sm:$0xff] %vm36, %v1631
    %v1634 = vld [vmem:[%s576] sm:$0xff]
    %v1636 = vsel %vm36, %v1634, 0
    %1638 = vmatprep.subr.mxu0 0.0
    %1639 = vmatpush1.msra.mxu0 %v905
    %1640 = vmatprep.subr.mxu0 0.0
    %1641 = vmatpush1.msra.mxu0 %v906
    %1642 = vmatprep.subr.mxu0 0.0
    %1643 = vmatpush1.msra.mxu0 %v907
    %1644 = vmatprep.subr.mxu0 0.0
    %1645 = vmatpush1.msra.mxu0 %v908
    %1646 = vmatprep.subr.mxu0 0.0
    %1647 = vmatpush1.msra.mxu0 0.0
    %1648 = vmatprep.subr.mxu0 0.0
    %1649 = vmatpush1.msra.mxu0 0.0
    %1650 = vmatprep.subr.mxu0 0.0
    %1651 = vmatpush1.msra.mxu0 0.0
    %1652 = vmatprep.subr.mxu0 0.0
    %1653 = vmatpush1.msra.mxu0 0.0
    %1654 = vmatprep.subr.mxu0 0.0
    %1655 = vmatpush1.msra.mxu0 0.0
    %1656 = vmatprep.subr.mxu0 0.0
    %1657 = vmatpush1.msra.mxu0 0.0
    %1658 = vmatprep.subr.mxu0 0.0
    %1659 = vmatpush1.msra.mxu0 0.0
    %1660 = vmatprep.subr.mxu0 0.0
    %1661 = vmatpush1.msra.mxu0 0.0
    %1662 = vmatprep.subr.mxu0 0.0
    %1663 = vmatpush1.msra.mxu0 0.0
    %1664 = vmatprep.subr.mxu0 0.0
    %1665 = vmatpush1.msra.mxu0 0.0
    %1666 = vmatprep.subr.mxu0 0.0
    %1667 = vmatpush1.msra.mxu0 0.0
    %1668 = vmatprep.subr.mxu0 0.0
    %1669 = vmatpush1.msra.mxu0 0.0
    %1670 = vmatprep.subr.mxu0 0.0
    %1671 = vmatpush1.msra.mxu0 0.0
    %1672 = vmatprep.subr.mxu0 0.0
    %1673 = vmatpush1.msra.mxu0 0.0
    %1674 = vmatprep.subr.mxu0 0.0
    %1675 = vmatpush1.msra.mxu0 0.0
    %1676 = vmatprep.subr.mxu0 0.0
    %1677 = vmatpush1.msra.mxu0 0.0
    %1678 = vmatprep.subr.mxu0 0.0
    %1679 = vmatpush1.msra.mxu0 0.0
    %1680 = vmatprep.subr.mxu0 0.0
    %1681 = vmatpush1.msra.mxu0 0.0
    %1682 = vmatprep.subr.mxu0 0.0
    %1683 = vmatpush1.msra.mxu0 0.0
    %1684 = vmatprep.subr.mxu0 0.0
    %1685 = vmatpush1.msra.mxu0 0.0
    %1686 = vmatprep.subr.mxu0 0.0
    %1687 = vmatpush1.msra.mxu0 0.0
    %1688 = vmatprep.subr.mxu0 0.0
    %1689 = vmatpush1.msra.mxu0 0.0
    %1690 = vmatprep.subr.mxu0 0.0
    %1691 = vmatpush1.msra.mxu0 0.0
    %1692 = vmatprep.subr.mxu0 0.0
    %1693 = vmatpush1.msra.mxu0 0.0
    %1694 = vmatprep.subr.mxu0 0.0
    %1695 = vmatpush1.msra.mxu0 0.0
    %1696 = vmatprep.subr.mxu0 0.0
    %1697 = vmatpush1.msra.mxu0 0.0
    %1698 = vmatprep.subr.mxu0 0.0
    %1699 = vmatpush1.msra.mxu0 0.0
    %1700 = vmatprep.subr.mxu0 0.0
    %1701 = vmatpush1.msra.mxu0 0.0
    %1702 = vmatprep.mubr.f32.mxu0 0.0
    %1703 = vmatmul.mubr.f32.gmra.mrb[0].mxu0 %v1636
    %v1704 = vpop.f32.mrb[0].mxu0
    %v1705 = vadd.f32 %v915, %v1704
    %v1706 = vpop.f32.mrb[0].mxu0
    %1707 = vdwg.mxu0
    %v1708 = vsel %vm36, %v1631, 0
    %1710 = vmatprep.subr.mxu0 0.0
    %1711 = vmatpush1.msra.mxu0 %v900
    %1712 = vmatprep.subr.mxu0 0.0
    %1713 = vmatpush1.msra.mxu0 %v901
    %1714 = vmatprep.subr.mxu0 0.0
    %1715 = vmatpush1.msra.mxu0 %v902
    %1716 = vmatprep.subr.mxu0 0.0
    %1717 = vmatpush1.msra.mxu0 %v903
    %1718 = vmatprep.subr.mxu0 0.0
    %1719 = vmatpush1.msra.mxu0 0.0
    %1720 = vmatprep.subr.mxu0 0.0
    %1721 = vmatpush1.msra.mxu0 0.0
    %1722 = vmatprep.subr.mxu0 0.0
    %1723 = vmatpush1.msra.mxu0 0.0
    %1724 = vmatprep.subr.mxu0 0.0
    %1725 = vmatpush1.msra.mxu0 0.0
    %1726 = vmatprep.subr.mxu0 0.0
    %1727 = vmatpush1.msra.mxu0 0.0
    %1728 = vmatprep.subr.mxu0 0.0
    %1729 = vmatpush1.msra.mxu0 0.0
    %1730 = vmatprep.subr.mxu0 0.0
    %1731 = vmatpush1.msra.mxu0 0.0
    %1732 = vmatprep.subr.mxu0 0.0
    %1733 = vmatpush1.msra.mxu0 0.0
    %1734 = vmatprep.subr.mxu0 0.0
    %1735 = vmatpush1.msra.mxu0 0.0
    %1736 = vmatprep.subr.mxu0 0.0
    %1737 = vmatpush1.msra.mxu0 0.0
    %1738 = vmatprep.subr.mxu0 0.0
    %1739 = vmatpush1.msra.mxu0 0.0
    %1740 = vmatprep.subr.mxu0 0.0
    %1741 = vmatpush1.msra.mxu0 0.0
    %1742 = vmatprep.subr.mxu0 0.0
    %1743 = vmatpush1.msra.mxu0 0.0
    %1744 = vmatprep.subr.mxu0 0.0
    %1745 = vmatpush1.msra.mxu0 0.0
    %1746 = vmatprep.subr.mxu0 0.0
    %1747 = vmatpush1.msra.mxu0 0.0
    %1748 = vmatprep.subr.mxu0 0.0
    %1749 = vmatpush1.msra.mxu0 0.0
    %1750 = vmatprep.subr.mxu0 0.0
    %1751 = vmatpush1.msra.mxu0 0.0
    %1752 = vmatprep.subr.mxu0 0.0
    %1753 = vmatpush1.msra.mxu0 0.0
    %1754 = vmatprep.subr.mxu0 0.0
    %1755 = vmatpush1.msra.mxu0 0.0
    %1756 = vmatprep.subr.mxu0 0.0
    %1757 = vmatpush1.msra.mxu0 0.0
    %1758 = vmatprep.subr.mxu0 0.0
    %1759 = vmatpush1.msra.mxu0 0.0
    %1760 = vmatprep.subr.mxu0 0.0
    %1761 = vmatpush1.msra.mxu0 0.0
    %1762 = vmatprep.subr.mxu0 0.0
    %1763 = vmatpush1.msra.mxu0 0.0
    %1764 = vmatprep.subr.mxu0 0.0
    %1765 = vmatpush1.msra.mxu0 0.0
    %1766 = vmatprep.subr.mxu0 0.0
    %1767 = vmatpush1.msra.mxu0 0.0
    %1768 = vmatprep.subr.mxu0 0.0
    %1769 = vmatpush1.msra.mxu0 0.0
    %1770 = vmatprep.subr.mxu0 0.0
    %1771 = vmatpush1.msra.mxu0 0.0
    %1772 = vmatprep.subr.mxu0 0.0
    %1773 = vmatpush1.msra.mxu0 0.0
    %1774 = vmatprep.mubr.f32.mxu0 0.0
    %1775 = vmatmul.mubr.f32.gmra.mrb[0].mxu0 %v1708
    %v1776 = vpop.f32.mrb[0].mxu0
    %v1777 = vadd.f32 0.0, %v1776
    %v1778 = vpop.f32.mrb[0].mxu0
    %1779 = vdwg.mxu0
    %v1780 = vadd.f32 %v1705, %v1777
    %v1781 = vxor.u32 %v1780, 2147483648
    %v1782 = vmul.f32 %v1781, 1.442695
    %v1783 = vpow.pop %v1782
    %v1784 = vadd.f32 %v1783, 1.0
    %v1785 = vrcp.pop %v1784
    %v1786 = vmul.f32 1.0, %v1785
    %v1787 = vadd.f32 %v1777, %v1073
    %1789 = vrot.lane.b32.xlu0 %v1787, 64
    %v1790 = vpop.permute.xlu0 %1789
    %v1792 = vmul.f32 %v1786, %v1790
    %1794 = vrot.lane.b32.xlu0 %v1792, 64
    %v1795 = vpop.permute.xlu0 %1794
    %v1797 = vadd.f32 %v1705, %v1795
    %v1798 = vtanh.pop %v1797
    %v1799 = vsub.f32 1.0, %v1786
    %1801 = vrot.lane.b32.xlu0 %v1798, 96
    %v1802 = vpop.permute.xlu0 %1801
    %v1804 = vmul.f32 %v1799, %v1802
    %v1805 = vmul.f32 %v1786, %v1628
    %v1806 = vadd.f32 %v1804, %v1805
    %1808 = vrot.lane.b32.xlu0 %v1806, 96
    %v1809 = vpop.permute.xlu0 %1808
    %1811 = vst.msk [vmem:[%s576] sm:$0xff] %vm36, %v1809
    %v1812 = vld [vmem:[%s683] sm:$0xff]
    %v1814 = vsel %vm36, %v1812, 0
    %1816 = vmatprep.subr.mxu0 0.0
    %1817 = vmatpush1.msra.mxu0 %v905
    %1818 = vmatprep.subr.mxu0 0.0
    %1819 = vmatpush1.msra.mxu0 %v906
    %1820 = vmatprep.subr.mxu0 0.0
    %1821 = vmatpush1.msra.mxu0 %v907
    %1822 = vmatprep.subr.mxu0 0.0
    %1823 = vmatpush1.msra.mxu0 %v908
    %1824 = vmatprep.subr.mxu0 0.0
    %1825 = vmatpush1.msra.mxu0 0.0
    %1826 = vmatprep.subr.mxu0 0.0
    %1827 = vmatpush1.msra.mxu0 0.0
    %1828 = vmatprep.subr.mxu0 0.0
    %1829 = vmatpush1.msra.mxu0 0.0
    %1830 = vmatprep.subr.mxu0 0.0
    %1831 = vmatpush1.msra.mxu0 0.0
    %1832 = vmatprep.subr.mxu0 0.0
    %1833 = vmatpush1.msra.mxu0 0.0
    %1834 = vmatprep.subr.mxu0 0.0
    %1835 = vmatpush1.msra.mxu0 0.0
    %1836 = vmatprep.subr.mxu0 0.0
    %1837 = vmatpush1.msra.mxu0 0.0
    %1838 = vmatprep.subr.mxu0 0.0
    %1839 = vmatpush1.msra.mxu0 0.0
    %1840 = vmatprep.subr.mxu0 0.0
    %1841 = vmatpush1.msra.mxu0 0.0
    %1842 = vmatprep.subr.mxu0 0.0
    %1843 = vmatpush1.msra.mxu0 0.0
    %1844 = vmatprep.subr.mxu0 0.0
    %1845 = vmatpush1.msra.mxu0 0.0
    %1846 = vmatprep.subr.mxu0 0.0
    %1847 = vmatpush1.msra.mxu0 0.0
    %1848 = vmatprep.subr.mxu0 0.0
    %1849 = vmatpush1.msra.mxu0 0.0
    %1850 = vmatprep.subr.mxu0 0.0
    %1851 = vmatpush1.msra.mxu0 0.0
    %1852 = vmatprep.subr.mxu0 0.0
    %1853 = vmatpush1.msra.mxu0 0.0
    %1854 = vmatprep.subr.mxu0 0.0
    %1855 = vmatpush1.msra.mxu0 0.0
    %1856 = vmatprep.subr.mxu0 0.0
    %1857 = vmatpush1.msra.mxu0 0.0
    %1858 = vmatprep.subr.mxu0 0.0
    %1859 = vmatpush1.msra.mxu0 0.0
    %1860 = vmatprep.subr.mxu0 0.0
    %1861 = vmatpush1.msra.mxu0 0.0
    %1862 = vmatprep.subr.mxu0 0.0
    %1863 = vmatpush1.msra.mxu0 0.0
    %1864 = vmatprep.subr.mxu0 0.0
    %1865 = vmatpush1.msra.mxu0 0.0
    %1866 = vmatprep.subr.mxu0 0.0
    %1867 = vmatpush1.msra.mxu0 0.0
    %1868 = vmatprep.subr.mxu0 0.0
    %1869 = vmatpush1.msra.mxu0 0.0
    %1870 = vmatprep.subr.mxu0 0.0
    %1871 = vmatpush1.msra.mxu0 0.0
    %1872 = vmatprep.subr.mxu0 0.0
    %1873 = vmatpush1.msra.mxu0 0.0
    %1874 = vmatprep.subr.mxu0 0.0
    %1875 = vmatpush1.msra.mxu0 0.0
    %1876 = vmatprep.subr.mxu0 0.0
    %1877 = vmatpush1.msra.mxu0 0.0
    %1878 = vmatprep.subr.mxu0 0.0
    %1879 = vmatpush1.msra.mxu0 0.0
    %1880 = vmatprep.mubr.f32.mxu0 0.0
    %1881 = vmatmul.mubr.f32.gmra.mrb[0].mxu0 %v1814
    %v1882 = vpop.f32.mrb[0].mxu0
    %v1883 = vadd.f32 %v915, %v1882
    %v1884 = vpop.f32.mrb[0].mxu0
    %1885 = vdwg.mxu0
    %v1886 = vsel %vm36, %v1809, 0
    %1888 = vmatprep.subr.mxu0 0.0
    %1889 = vmatpush1.msra.mxu0 %v900
    %1890 = vmatprep.subr.mxu0 0.0
    %1891 = vmatpush1.msra.mxu0 %v901
    %1892 = vmatprep.subr.mxu0 0.0
    %1893 = vmatpush1.msra.mxu0 %v902
    %1894 = vmatprep.subr.mxu0 0.0
    %1895 = vmatpush1.msra.mxu0 %v903
    %1896 = vmatprep.subr.mxu0 0.0
    %1897 = vmatpush1.msra.mxu0 0.0
    %1898 = vmatprep.subr.mxu0 0.0
    %1899 = vmatpush1.msra.mxu0 0.0
    %1900 = vmatprep.subr.mxu0 0.0
    %1901 = vmatpush1.msra.mxu0 0.0
    %1902 = vmatprep.subr.mxu0 0.0
    %1903 = vmatpush1.msra.mxu0 0.0
    %1904 = vmatprep.subr.mxu0 0.0
    %1905 = vmatpush1.msra.mxu0 0.0
    %1906 = vmatprep.subr.mxu0 0.0
    %1907 = vmatpush1.msra.mxu0 0.0
    %1908 = vmatprep.subr.mxu0 0.0
    %1909 = vmatpush1.msra.mxu0 0.0
    %1910 = vmatprep.subr.mxu0 0.0
    %1911 = vmatpush1.msra.mxu0 0.0
    %1912 = vmatprep.subr.mxu0 0.0
    %1913 = vmatpush1.msra.mxu0 0.0
    %1914 = vmatprep.subr.mxu0 0.0
    %1915 = vmatpush1.msra.mxu0 0.0
    %1916 = vmatprep.subr.mxu0 0.0
    %1917 = vmatpush1.msra.mxu0 0.0
    %1918 = vmatprep.subr.mxu0 0.0
    %1919 = vmatpush1.msra.mxu0 0.0
    %1920 = vmatprep.subr.mxu0 0.0
    %1921 = vmatpush1.msra.mxu0 0.0
    %1922 = vmatprep.subr.mxu0 0.0
    %1923 = vmatpush1.msra.mxu0 0.0
    %1924 = vmatprep.subr.mxu0 0.0
    %1925 = vmatpush1.msra.mxu0 0.0
    %1926 = vmatprep.subr.mxu0 0.0
    %1927 = vmatpush1.msra.mxu0 0.0
    %1928 = vmatprep.subr.mxu0 0.0
    %1929 = vmatpush1.msra.mxu0 0.0
    %1930 = vmatprep.subr.mxu0 0.0
    %1931 = vmatpush1.msra.mxu0 0.0
    %1932 = vmatprep.subr.mxu0 0.0
    %1933 = vmatpush1.msra.mxu0 0.0
    %1934 = vmatprep.subr.mxu0 0.0
    %1935 = vmatpush1.msra.mxu0 0.0
    %1936 = vmatprep.subr.mxu0 0.0
    %1937 = vmatpush1.msra.mxu0 0.0
    %1938 = vmatprep.subr.mxu0 0.0
    %1939 = vmatpush1.msra.mxu0 0.0
    %1940 = vmatprep.subr.mxu0 0.0
    %1941 = vmatpush1.msra.mxu0 0.0
    %1942 = vmatprep.subr.mxu0 0.0
    %1943 = vmatpush1.msra.mxu0 0.0
    %1944 = vmatprep.subr.mxu0 0.0
    %1945 = vmatpush1.msra.mxu0 0.0
    %1946 = vmatprep.subr.mxu0 0.0
    %1947 = vmatpush1.msra.mxu0 0.0
    %1948 = vmatprep.subr.mxu0 0.0
    %1949 = vmatpush1.msra.mxu0 0.0
    %1950 = vmatprep.subr.mxu0 0.0
    %1951 = vmatpush1.msra.mxu0 0.0
    %1952 = vmatprep.mubr.f32.mxu0 0.0
    %1953 = vmatmul.mubr.f32.gmra.mrb[0].mxu0 %v1886
    %v1954 = vpop.f32.mrb[0].mxu0
    %v1955 = vadd.f32 0.0, %v1954
    %v1956 = vpop.f32.mrb[0].mxu0
    %1957 = vdwg.mxu0
    %v1958 = vadd.f32 %v1883, %v1955
    %v1959 = vxor.u32 %v1958, 2147483648
    %v1960 = vmul.f32 %v1959, 1.442695
    %v1961 = vpow.pop %v1960
    %v1962 = vadd.f32 %v1961, 1.0
    %v1963 = vrcp.pop %v1962
    %v1964 = vmul.f32 1.0, %v1963
    %v1965 = vadd.f32 %v1955, %v1073
    %1967 = vrot.lane.b32.xlu0 %v1965, 64
    %v1968 = vpop.permute.xlu0 %1967
    %v1970 = vmul.f32 %v1964, %v1968
    %1972 = vrot.lane.b32.xlu0 %v1970, 64
    %v1973 = vpop.permute.xlu0 %1972
    %v1975 = vadd.f32 %v1883, %v1973
    %v1976 = vtanh.pop %v1975
    %v1977 = vsub.f32 1.0, %v1964
    %1979 = vrot.lane.b32.xlu0 %v1976, 96
    %v1980 = vpop.permute.xlu0 %1979
    %v1982 = vmul.f32 %v1977, %v1980
    %v1983 = vmul.f32 %v1964, %v1806
    %v1984 = vadd.f32 %v1982, %v1983
    %1986 = vrot.lane.b32.xlu0 %v1984, 96
    %v1987 = vpop.permute.xlu0 %1986
    %1989 = vst.msk [vmem:[%s683] sm:$0xff] %vm36, %v1987
    %v1990 = vld [vmem:[%s790] sm:$0xff]
    %v1992 = vsel %vm36, %v1990, 0
    %1994 = vmatprep.subr.mxu0 0.0
    %1995 = vmatpush1.msra.mxu0 %v905
    %1996 = vmatprep.subr.mxu0 0.0
    %1997 = vmatpush1.msra.mxu0 %v906
    %1998 = vmatprep.subr.mxu0 0.0
    %1999 = vmatpush1.msra.mxu0 %v907
    %2000 = vmatprep.subr.mxu0 0.0
    %2001 = vmatpush1.msra.mxu0 %v908
    %2002 = vmatprep.subr.mxu0 0.0
    %2003 = vmatpush1.msra.mxu0 0.0
    %2004 = vmatprep.subr.mxu0 0.0
    %2005 = vmatpush1.msra.mxu0 0.0
    %2006 = vmatprep.subr.mxu0 0.0
    %2007 = vmatpush1.msra.mxu0 0.0
    %2008 = vmatprep.subr.mxu0 0.0
    %2009 = vmatpush1.msra.mxu0 0.0
    %2010 = vmatprep.subr.mxu0 0.0
    %2011 = vmatpush1.msra.mxu0 0.0
    %2012 = vmatprep.subr.mxu0 0.0
    %2013 = vmatpush1.msra.mxu0 0.0
    %2014 = vmatprep.subr.mxu0 0.0
    %2015 = vmatpush1.msra.mxu0 0.0
    %2016 = vmatprep.subr.mxu0 0.0
    %2017 = vmatpush1.msra.mxu0 0.0
    %2018 = vmatprep.subr.mxu0 0.0
    %2019 = vmatpush1.msra.mxu0 0.0
    %2020 = vmatprep.subr.mxu0 0.0
    %2021 = vmatpush1.msra.mxu0 0.0
    %2022 = vmatprep.subr.mxu0 0.0
    %2023 = vmatpush1.msra.mxu0 0.0
    %2024 = vmatprep.subr.mxu0 0.0
    %2025 = vmatpush1.msra.mxu0 0.0
    %2026 = vmatprep.subr.mxu0 0.0
    %2027 = vmatpush1.msra.mxu0 0.0
    %2028 = vmatprep.subr.mxu0 0.0
    %2029 = vmatpush1.msra.mxu0 0.0
    %2030 = vmatprep.subr.mxu0 0.0
    %2031 = vmatpush1.msra.mxu0 0.0
    %2032 = vmatprep.subr.mxu0 0.0
    %2033 = vmatpush1.msra.mxu0 0.0
    %2034 = vmatprep.subr.mxu0 0.0
    %2035 = vmatpush1.msra.mxu0 0.0
    %2036 = vmatprep.subr.mxu0 0.0
    %2037 = vmatpush1.msra.mxu0 0.0
    %2038 = vmatprep.subr.mxu0 0.0
    %2039 = vmatpush1.msra.mxu0 0.0
    %2040 = vmatprep.subr.mxu0 0.0
    %2041 = vmatpush1.msra.mxu0 0.0
    %2042 = vmatprep.subr.mxu0 0.0
    %2043 = vmatpush1.msra.mxu0 0.0
    %2044 = vmatprep.subr.mxu0 0.0
    %2045 = vmatpush1.msra.mxu0 0.0
    %2046 = vmatprep.subr.mxu0 0.0
    %2047 = vmatpush1.msra.mxu0 0.0
    %2048 = vmatprep.subr.mxu0 0.0
    %2049 = vmatpush1.msra.mxu0 0.0
    %2050 = vmatprep.subr.mxu0 0.0
    %2051 = vmatpush1.msra.mxu0 0.0
    %2052 = vmatprep.subr.mxu0 0.0
    %2053 = vmatpush1.msra.mxu0 0.0
    %2054 = vmatprep.subr.mxu0 0.0
    %2055 = vmatpush1.msra.mxu0 0.0
    %2056 = vmatprep.subr.mxu0 0.0
    %2057 = vmatpush1.msra.mxu0 0.0
    %2058 = vmatprep.mubr.f32.mxu0 0.0
    %2059 = vmatmul.mubr.f32.gmra.mrb[0].mxu0 %v1992
    %v2060 = vpop.f32.mrb[0].mxu0
    %v2061 = vadd.f32 %v915, %v2060
    %v2062 = vpop.f32.mrb[0].mxu0
    %2063 = vdwg.mxu0
    %v2064 = vsel %vm36, %v1987, 0
    %2066 = vmatprep.subr.mxu0 0.0
    %2067 = vmatpush1.msra.mxu0 %v900
    %2068 = vmatprep.subr.mxu0 0.0
    %2069 = vmatpush1.msra.mxu0 %v901
    %2070 = vmatprep.subr.mxu0 0.0
    %2071 = vmatpush1.msra.mxu0 %v902
    %2072 = vmatprep.subr.mxu0 0.0
    %2073 = vmatpush1.msra.mxu0 %v903
    %2074 = vmatprep.subr.mxu0 0.0
    %2075 = vmatpush1.msra.mxu0 0.0
    %2076 = vmatprep.subr.mxu0 0.0
    %2077 = vmatpush1.msra.mxu0 0.0
    %2078 = vmatprep.subr.mxu0 0.0
    %2079 = vmatpush1.msra.mxu0 0.0
    %2080 = vmatprep.subr.mxu0 0.0
    %2081 = vmatpush1.msra.mxu0 0.0
    %2082 = vmatprep.subr.mxu0 0.0
    %2083 = vmatpush1.msra.mxu0 0.0
    %2084 = vmatprep.subr.mxu0 0.0
    %2085 = vmatpush1.msra.mxu0 0.0
    %2086 = vmatprep.subr.mxu0 0.0
    %2087 = vmatpush1.msra.mxu0 0.0
    %2088 = vmatprep.subr.mxu0 0.0
    %2089 = vmatpush1.msra.mxu0 0.0
    %2090 = vmatprep.subr.mxu0 0.0
    %2091 = vmatpush1.msra.mxu0 0.0
    %2092 = vmatprep.subr.mxu0 0.0
    %2093 = vmatpush1.msra.mxu0 0.0
    %2094 = vmatprep.subr.mxu0 0.0
    %2095 = vmatpush1.msra.mxu0 0.0
    %2096 = vmatprep.subr.mxu0 0.0
    %2097 = vmatpush1.msra.mxu0 0.0
    %2098 = vmatprep.subr.mxu0 0.0
    %2099 = vmatpush1.msra.mxu0 0.0
    %2100 = vmatprep.subr.mxu0 0.0
    %2101 = vmatpush1.msra.mxu0 0.0
    %2102 = vmatprep.subr.mxu0 0.0
    %2103 = vmatpush1.msra.mxu0 0.0
    %2104 = vmatprep.subr.mxu0 0.0
    %2105 = vmatpush1.msra.mxu0 0.0
    %2106 = vmatprep.subr.mxu0 0.0
    %2107 = vmatpush1.msra.mxu0 0.0
    %2108 = vmatprep.subr.mxu0 0.0
    %2109 = vmatpush1.msra.mxu0 0.0
    %2110 = vmatprep.subr.mxu0 0.0
    %2111 = vmatpush1.msra.mxu0 0.0
    %2112 = vmatprep.subr.mxu0 0.0
    %2113 = vmatpush1.msra.mxu0 0.0
    %2114 = vmatprep.subr.mxu0 0.0
    %2115 = vmatpush1.msra.mxu0 0.0
    %2116 = vmatprep.subr.mxu0 0.0
    %2117 = vmatpush1.msra.mxu0 0.0
    %2118 = vmatprep.subr.mxu0 0.0
    %2119 = vmatpush1.msra.mxu0 0.0
    %2120 = vmatprep.subr.mxu0 0.0
    %2121 = vmatpush1.msra.mxu0 0.0
    %2122 = vmatprep.subr.mxu0 0.0
    %2123 = vmatpush1.msra.mxu0 0.0
    %2124 = vmatprep.subr.mxu0 0.0
    %2125 = vmatpush1.msra.mxu0 0.0
    %2126 = vmatprep.subr.mxu0 0.0
    %2127 = vmatpush1.msra.mxu0 0.0
    %2128 = vmatprep.subr.mxu0 0.0
    %2129 = vmatpush1.msra.mxu0 0.0
    %2130 = vmatprep.mubr.f32.mxu0 0.0
    %2131 = vmatmul.mubr.f32.gmra.mrb[0].mxu0 %v2064
    %v2132 = vpop.f32.mrb[0].mxu0
    %v2133 = vadd.f32 0.0, %v2132
    %v2134 = vpop.f32.mrb[0].mxu0
    %2135 = vdwg.mxu0
    %v2136 = vadd.f32 %v2061, %v2133
    %v2137 = vxor.u32 %v2136, 2147483648
    %v2138 = vmul.f32 %v2137, 1.442695
    %v2139 = vpow.pop %v2138
    %v2140 = vadd.f32 %v2139, 1.0
    %v2141 = vrcp.pop %v2140
    %v2142 = vmul.f32 1.0, %v2141
    %v2143 = vadd.f32 %v2133, %v1073
    %2145 = vrot.lane.b32.xlu0 %v2143, 64
    %v2146 = vpop.permute.xlu0 %2145
    %v2148 = vmul.f32 %v2142, %v2146
    %2150 = vrot.lane.b32.xlu0 %v2148, 64
    %v2151 = vpop.permute.xlu0 %2150
    %v2153 = vadd.f32 %v2061, %v2151
    %v2154 = vtanh.pop %v2153
    %v2155 = vsub.f32 1.0, %v2142
    %2157 = vrot.lane.b32.xlu0 %v2154, 96
    %v2158 = vpop.permute.xlu0 %2157
    %v2160 = vmul.f32 %v2155, %v2158
    %v2161 = vmul.f32 %v2142, %v1984
    %v2162 = vadd.f32 %v2160, %v2161
    %2164 = vrot.lane.b32.xlu0 %v2162, 96
    %v2165 = vpop.permute.xlu0 %2164
    %2167 = vst.msk [vmem:[%s790] sm:$0xff] %vm36, %v2165
    %v2168 = vld [vmem:[%s897] sm:$0xff]
    %v2170 = vsel %vm36, %v2168, 0
    %2172 = vmatprep.subr.mxu0 0.0
    %2173 = vmatpush1.msra.mxu0 %v905
    %2174 = vmatprep.subr.mxu0 0.0
    %2175 = vmatpush1.msra.mxu0 %v906
    %2176 = vmatprep.subr.mxu0 0.0
    %2177 = vmatpush1.msra.mxu0 %v907
    %2178 = vmatprep.subr.mxu0 0.0
    %2179 = vmatpush1.msra.mxu0 %v908
    %2180 = vmatprep.subr.mxu0 0.0
    %2181 = vmatpush1.msra.mxu0 0.0
    %2182 = vmatprep.subr.mxu0 0.0
    %2183 = vmatpush1.msra.mxu0 0.0
    %2184 = vmatprep.subr.mxu0 0.0
    %2185 = vmatpush1.msra.mxu0 0.0
    %2186 = vmatprep.subr.mxu0 0.0
    %2187 = vmatpush1.msra.mxu0 0.0
    %2188 = vmatprep.subr.mxu0 0.0
    %2189 = vmatpush1.msra.mxu0 0.0
    %2190 = vmatprep.subr.mxu0 0.0
    %2191 = vmatpush1.msra.mxu0 0.0
    %2192 = vmatprep.subr.mxu0 0.0
    %2193 = vmatpush1.msra.mxu0 0.0
    %2194 = vmatprep.subr.mxu0 0.0
    %2195 = vmatpush1.msra.mxu0 0.0
    %2196 = vmatprep.subr.mxu0 0.0
    %2197 = vmatpush1.msra.mxu0 0.0
    %2198 = vmatprep.subr.mxu0 0.0
    %2199 = vmatpush1.msra.mxu0 0.0
    %2200 = vmatprep.subr.mxu0 0.0
    %2201 = vmatpush1.msra.mxu0 0.0
    %2202 = vmatprep.subr.mxu0 0.0
    %2203 = vmatpush1.msra.mxu0 0.0
    %2204 = vmatprep.subr.mxu0 0.0
    %2205 = vmatpush1.msra.mxu0 0.0
    %2206 = vmatprep.subr.mxu0 0.0
    %2207 = vmatpush1.msra.mxu0 0.0
    %2208 = vmatprep.subr.mxu0 0.0
    %2209 = vmatpush1.msra.mxu0 0.0
    %2210 = vmatprep.subr.mxu0 0.0
    %2211 = vmatpush1.msra.mxu0 0.0
    %2212 = vmatprep.subr.mxu0 0.0
    %2213 = vmatpush1.msra.mxu0 0.0
    %2214 = vmatprep.subr.mxu0 0.0
    %2215 = vmatpush1.msra.mxu0 0.0
    %2216 = vmatprep.subr.mxu0 0.0
    %2217 = vmatpush1.msra.mxu0 0.0
    %2218 = vmatprep.subr.mxu0 0.0
    %2219 = vmatpush1.msra.mxu0 0.0
    %2220 = vmatprep.subr.mxu0 0.0
    %2221 = vmatpush1.msra.mxu0 0.0
    %2222 = vmatprep.subr.mxu0 0.0
    %2223 = vmatpush1.msra.mxu0 0.0
    %2224 = vmatprep.subr.mxu0 0.0
    %2225 = vmatpush1.msra.mxu0 0.0
    %2226 = vmatprep.subr.mxu0 0.0
    %2227 = vmatpush1.msra.mxu0 0.0
    %2228 = vmatprep.subr.mxu0 0.0
    %2229 = vmatpush1.msra.mxu0 0.0
    %2230 = vmatprep.subr.mxu0 0.0
    %2231 = vmatpush1.msra.mxu0 0.0
    %2232 = vmatprep.subr.mxu0 0.0
    %2233 = vmatpush1.msra.mxu0 0.0
    %2234 = vmatprep.subr.mxu0 0.0
    %2235 = vmatpush1.msra.mxu0 0.0
    %2236 = vmatprep.mubr.f32.mxu0 0.0
    %2237 = vmatmul.mubr.f32.gmra.mrb[0].mxu0 %v2170
    %v2238 = vpop.f32.mrb[0].mxu0
    %v2239 = vadd.f32 %v915, %v2238
    %v2240 = vpop.f32.mrb[0].mxu0
    %2241 = vdwg.mxu0
    %v2242 = vsel %vm36, %v2165, 0
    %2244 = vmatprep.subr.mxu0 0.0
    %2245 = vmatpush1.msra.mxu0 %v900
    %2246 = vmatprep.subr.mxu0 0.0
    %2247 = vmatpush1.msra.mxu0 %v901
    %2248 = vmatprep.subr.mxu0 0.0
    %2249 = vmatpush1.msra.mxu0 %v902
    %2250 = vmatprep.subr.mxu0 0.0
    %2251 = vmatpush1.msra.mxu0 %v903
    %2252 = vmatprep.subr.mxu0 0.0
    %2253 = vmatpush1.msra.mxu0 0.0
    %2254 = vmatprep.subr.mxu0 0.0
    %2255 = vmatpush1.msra.mxu0 0.0
    %2256 = vmatprep.subr.mxu0 0.0
    %2257 = vmatpush1.msra.mxu0 0.0
    %2258 = vmatprep.subr.mxu0 0.0
    %2259 = vmatpush1.msra.mxu0 0.0
    %2260 = vmatprep.subr.mxu0 0.0
    %2261 = vmatpush1.msra.mxu0 0.0
    %2262 = vmatprep.subr.mxu0 0.0
    %2263 = vmatpush1.msra.mxu0 0.0
    %2264 = vmatprep.subr.mxu0 0.0
    %2265 = vmatpush1.msra.mxu0 0.0
    %2266 = vmatprep.subr.mxu0 0.0
    %2267 = vmatpush1.msra.mxu0 0.0
    %2268 = vmatprep.subr.mxu0 0.0
    %2269 = vmatpush1.msra.mxu0 0.0
    %2270 = vmatprep.subr.mxu0 0.0
    %2271 = vmatpush1.msra.mxu0 0.0
    %2272 = vmatprep.subr.mxu0 0.0
    %2273 = vmatpush1.msra.mxu0 0.0
    %2274 = vmatprep.subr.mxu0 0.0
    %2275 = vmatpush1.msra.mxu0 0.0
    %2276 = vmatprep.subr.mxu0 0.0
    %2277 = vmatpush1.msra.mxu0 0.0
    %2278 = vmatprep.subr.mxu0 0.0
    %2279 = vmatpush1.msra.mxu0 0.0
    %2280 = vmatprep.subr.mxu0 0.0
    %2281 = vmatpush1.msra.mxu0 0.0
    %2282 = vmatprep.subr.mxu0 0.0
    %2283 = vmatpush1.msra.mxu0 0.0
    %2284 = vmatprep.subr.mxu0 0.0
    %2285 = vmatpush1.msra.mxu0 0.0
    %2286 = vmatprep.subr.mxu0 0.0
    %2287 = vmatpush1.msra.mxu0 0.0
    %2288 = vmatprep.subr.mxu0 0.0
    %2289 = vmatpush1.msra.mxu0 0.0
    %2290 = vmatprep.subr.mxu0 0.0
    %2291 = vmatpush1.msra.mxu0 0.0
    %2292 = vmatprep.subr.mxu0 0.0
    %2293 = vmatpush1.msra.mxu0 0.0
    %2294 = vmatprep.subr.mxu0 0.0
    %2295 = vmatpush1.msra.mxu0 0.0
    %2296 = vmatprep.subr.mxu0 0.0
    %2297 = vmatpush1.msra.mxu0 0.0
    %2298 = vmatprep.subr.mxu0 0.0
    %2299 = vmatpush1.msra.mxu0 0.0
    %2300 = vmatprep.subr.mxu0 0.0
    %2301 = vmatpush1.msra.mxu0 0.0
    %2302 = vmatprep.subr.mxu0 0.0
    %2303 = vmatpush1.msra.mxu0 0.0
    %2304 = vmatprep.subr.mxu0 0.0
    %2305 = vmatpush1.msra.mxu0 0.0
    %2306 = vmatprep.subr.mxu0 0.0
    %2307 = vmatpush1.msra.mxu0 0.0
    %2308 = vmatprep.mubr.f32.mxu0 0.0
    %2309 = vmatmul.mubr.f32.gmra.mrb[0].mxu0 %v2242
    %v2310 = vpop.f32.mrb[0].mxu0
    %v2311 = vadd.f32 0.0, %v2310
    %v2312 = vpop.f32.mrb[0].mxu0
    %2313 = vdwg.mxu0
    %v2314 = vadd.f32 %v2239, %v2311
    %v2315 = vxor.u32 %v2314, 2147483648
    %v2316 = vmul.f32 %v2315, 1.442695
    %v2317 = vpow.pop %v2316
    %v2318 = vadd.f32 %v2317, 1.0
    %v2319 = vrcp.pop %v2318
    %v2320 = vmul.f32 1.0, %v2319
    %v2321 = vadd.f32 %v2311, %v1073
    %2323 = vrot.lane.b32.xlu0 %v2321, 64
    %v2324 = vpop.permute.xlu0 %2323
    %v2326 = vmul.f32 %v2320, %v2324
    %2328 = vrot.lane.b32.xlu0 %v2326, 64
    %v2329 = vpop.permute.xlu0 %2328
    %v2331 = vadd.f32 %v2239, %v2329
    %v2332 = vtanh.pop %v2331
    %v2333 = vsub.f32 1.0, %v2320
    %2335 = vrot.lane.b32.xlu0 %v2332, 96
    %v2336 = vpop.permute.xlu0 %2335
    %v2338 = vmul.f32 %v2333, %v2336
    %v2339 = vmul.f32 %v2320, %v2162
    %v2340 = vadd.f32 %v2338, %v2339
    %2342 = vrot.lane.b32.xlu0 %v2340, 96
    %v2343 = vpop.permute.xlu0 %2342
    %2345 = vst.msk [vmem:[%s897] sm:$0xff] %vm36, %v2343
    %s2346 = scalar_lea.vmem [#allocation4], 8
    %2347 = vst.msk [vmem:[%s2346] sm:$0xff] %vm36, %v2343
    // Predicated region
    $region30: #{encoder_rnn_forward.1} parent=1 // pred_check
      _
    $region31: #{encoder_rnn_forward.1} parent=1 // pred_check_branch
      %2349 = sbr.rel (0) target = $region33
    $region32: #{encoder_rnn_forward.1} parent=1 // pred_region
      %s2351 = ssub.s32 1024, 1024
      %2352 = vsyncadd [#allocation3], %s2351
      %s2353 = sshll.u32 [#allocation2], 4
      %s2354 = int_to_ptr.vmem [resolvable:$true] %s2353
      %2359 = dma.vmem_to_hbm [thread:$0]  %s2354, 1024, %s7, [#allocation3], 128, 128, 8
    $region33: #{encoder_rnn_forward.1} parent=1 // pred_fallthru
      _
    // Predicated region
    $region34: #{encoder_rnn_forward.1} parent=1 // pred_check
      _
    $region35: #{encoder_rnn_forward.1} parent=1 // pred_check_branch
      %2361 = sbr.rel (0) target = $region37
    $region36: #{encoder_rnn_forward.1} parent=1 // pred_region
      %s2363 = ssub.s32 256, 256
      %2364 = vsyncadd [#allocation5], %s2363
      %s2365 = sshll.u32 [#allocation4], 4
      %s2366 = int_to_ptr.vmem [resolvable:$true] %s2365
      %2371 = dma.vmem_to_hbm [thread:$0]  %s2366, 256, %s8, [#allocation5], 128, 128, 8
    $region37: #{encoder_rnn_forward.1} parent=1 // pred_fallthru
      _
    // Predicated region
    $region38: #{encoder_rnn_forward.1} parent=1 // pred_check
      _
    $region39: #{encoder_rnn_forward.1} parent=1 // pred_check_branch
      %2373 = sbr.rel (0) target = $region41
    $region40: #{encoder_rnn_forward.1} parent=1 // pred_region
      %2374 = dma.done [#allocation3], 1024
    $region41: #{encoder_rnn_forward.1} parent=1 // pred_fallthru
      _
    // Predicated region
    $region42: #{encoder_rnn_forward.1} parent=1 // pred_check
      _
    $region43: #{encoder_rnn_forward.1} parent=1 // pred_check_branch
      %2376 = sbr.rel (0) target = $region45
    $region44: #{encoder_rnn_forward.1} parent=1 // pred_region
      %2377 = dma.done [#allocation5], 256
    $region45: #{encoder_rnn_forward.1} parent=1 // pred_fallthru
      _
    %2378 = vsyncpa [#allocation3], 1
    %2379 = vsyncpa [#allocation5], 1

</llo_original>
